<compile_context>
chip_gen: v6e
topology: v6e:2x2x1
jax: 0.10.0
libtpu: 0.0.40
codegen_flags: <defaults>
</compile_context>

<pallas_src>
import math

import jax
import jax.numpy as jnp
from jax.experimental import pallas as pl
from jax.experimental.pallas import tpu as pltpu

# ---- small config consistent with the module structure ----
B = 2        # batch
S = 8        # seq_length
F = 16       # feature_num
D = 32       # d_model
H = 4        # nhead
DH = D // H  # head dim
DFF = 64     # dim_feedforward
C = 2        # class_num
L = 2        # num_layers
EPS_LN = 1e-5
EPS_MM = 1e-8

# packed per-layer slab layout (L, 64, 512); every sub-block starts at a
# 128-aligned lane offset so in-kernel slices need no lane rotates.
WROWS, WCOLS = 64, 512
VROW, VCOL = 32, 256       # bias / LN vector rows live under w1's column block
# constants slab (32, 384)
CROWS, CCOLS = 32, 384


def _positional_encoding(max_len, d_model):
    position = jnp.arange(max_len, dtype=jnp.float32)[:, None]
    div_term = jnp.exp(
        jnp.arange(0, d_model, 2, dtype=jnp.float32) * (-math.log(10000.0) / d_model)
    )
    pe = jnp.zeros((max_len, d_model), dtype=jnp.float32)
    pe = pe.at[:, 0::2].set(jnp.sin(position * div_term))
    pe = pe.at[:, 1::2].set(jnp.cos(position * div_term))
    return pe


# ---------------- fused forward kernel ----------------
def fused_forward_kernel(x_ref, wl_ref, cst_ref, o_ref):
    # x_ref   : (B, S, F)
    # wl_ref  : (L, 64, 512) per-layer weights + vectors (see init_params layout)
    # cst_ref : (32, 384)    constants: 2*W_in^T, pe_bias, W_out^T, b_out
    # o_ref   : (B, C)

    # ---- per-feature min-max normalization ----
    # TODO(synk): PerFeatureNormalization class body not provided; implementing
    # min-max normalization per feature over the sequence axis of each sample.
    x = x_ref[...]                                        # (B, S, F)
    x_min = jnp.min(x, axis=1, keepdims=True)
    x_max = jnp.max(x, axis=1, keepdims=True)
    xn = (x - x_min) * pl.reciprocal(x_max - x_min + EPS_MM, approx=True)

    # ---- input projection + positional add (2.0 and b_in folded at init) ----
    xf = xn.reshape(B * S, F)                             # batch fused into rows
    w_in2 = cst_ref[0:F, 0:D]                             # = 2 * W_in^T
    pe_bias = cst_ref[F:F + B * S, 0:D]                   # = tile(pe, B) + 2*b_in
    h = jnp.dot(xf, w_in2, preferred_element_type=jnp.float32) + pe_bias  # (B*S, D)

    # ---- L post-LN transformer encoder layers (statically unrolled) ----
    for l in range(L):
        # lane-aligned weight sub-blocks (pre-transposed at init)
        wq = wl_ref[l, 0:D, 0:D]                          # includes 1/sqrt(DH)
        wk = wl_ref[l, D:2 * D, 0:D]
        wv = wl_ref[l, 0:D, 128:128 + D]
        wo = wl_ref[l, D:2 * D, 128:128 + D]
        w1 = wl_ref[l, 0:D, 256:256 + DFF]
        w2 = wl_ref[l, 0:DFF, 384:384 + D]
        vec = wl_ref[l, VROW:VROW + 16, VCOL:VCOL + 128]  # (16, 128) packed vectors
        bq = vec[0:1, 0:D]                                # includes 1/sqrt(DH)
        bk = vec[1:2, 0:D]
        bv = vec[2:3, 0:D]
        bo = vec[3:4, 0:D]
        b1 = vec[4:5, 0:DFF]
        b2 = vec[5:6, 0:D]
        g1 = vec[6:7, 0:D]
        be1 = vec[7:8, 0:D]
        g2 = vec[8:9, 0:D]
        be2 = vec[9:10, 0:D]

        # --- multi-head self-attention, heads batched into the leading axis ---
        q = jnp.dot(h, wq, preferred_element_type=jnp.float32) + bq   # (B*S, D)
        k = jnp.dot(h, wk, preferred_element_type=jnp.float32) + bk
        v = jnp.dot(h, wv, preferred_element_type=jnp.float32) + bv
        q3 = q.reshape(B, S, D)
        k3 = k.reshape(B, S, D)
        v3 = v.reshape(B, S, D)

        # stack heads along the batch axis: (H*B, S, DH)
        qn = jnp.concatenate([q3[:, :, hh * DH:(hh + 1) * DH] for hh in range(H)], axis=0)
        kn = jnp.concatenate([k3[:, :, hh * DH:(hh + 1) * DH] for hh in range(H)], axis=0)
        vn = jnp.concatenate([v3[:, :, hh * DH:(hh + 1) * DH] for hh in range(H)], axis=0)

        s = jnp.einsum('nqd,nkd->nqk', qn, kn,
                       preferred_element_type=jnp.float32)            # (H*B, S, S)
        s = s - jnp.max(s, axis=-1, keepdims=True)
        p = jnp.exp(s)
        p = p * pl.reciprocal(jnp.sum(p, axis=-1, keepdims=True), approx=True)
        ctx = jnp.einsum('nqk,nkd->nqd', p, vn,
                         preferred_element_type=jnp.float32)          # (H*B, S, DH)

        # heads back to lanes and single output projection
        ctx_bsd = jnp.concatenate(
            [ctx[hh * B:(hh + 1) * B] for hh in range(H)], axis=2)    # (B, S, D)
        attn = jnp.dot(ctx_bsd.reshape(B * S, D), wo,
                       preferred_element_type=jnp.float32) + bo

        # --- add & norm 1 (post-LN) ---
        x1 = h + attn
        mu = jnp.mean(x1, axis=-1, keepdims=True)
        var = jnp.mean((x1 - mu) ** 2, axis=-1, keepdims=True)
        x1 = (x1 - mu) * jax.lax.rsqrt(var + EPS_LN) * g1 + be1

        # --- feed-forward (relu) ---
        ff = jnp.dot(x1, w1, preferred_element_type=jnp.float32) + b1
        ff = jnp.maximum(ff, 0.0)
        ff = jnp.dot(ff, w2, preferred_element_type=jnp.float32) + b2

        # --- add & norm 2 ---
        x2 = x1 + ff
        mu = jnp.mean(x2, axis=-1, keepdims=True)
        var = jnp.mean((x2 - mu) ** 2, axis=-1, keepdims=True)
        h = (x2 - mu) * jax.lax.rsqrt(var + EPS_LN) * g2 + be2

    # ---- output_proj on token 0 of each sample ----
    x0 = h.reshape(B, S, D)[:, 0, :]                      # (B, D)
    w_out = cst_ref[0:D, 128:128 + C]
    b_out = cst_ref[0:1, 256:256 + C]
    o_ref[...] = (jnp.dot(x0, w_out, preferred_element_type=jnp.float32) + b_out)


# ---------------- Pallas wrapper ----------------
@jax.jit
def forward(x, img, params):
    # img is accepted but unused, exactly as in the PyTorch forward.
    del img
    x = jnp.squeeze(x, axis=1).astype(jnp.float32)        # (B, S, F) glue
    return pl.pallas_call(
        fused_forward_kernel,
        out_shape=jax.ShapeDtypeStruct((B, C), jnp.float32),
        grid=(1,),
        in_specs=[
            pl.BlockSpec((B, S, F), lambda i: (0, 0, 0)),          # x
            pl.BlockSpec((L, WROWS, WCOLS), lambda i: (0, 0, 0)),  # per-layer slab
            pl.BlockSpec((CROWS, CCOLS), lambda i: (0, 0)),        # constants slab
        ],
        out_specs=pl.BlockSpec((B, C), lambda i: (0, 0)),
        compiler_params=pltpu.CompilerParams(dimension_semantics=("arbitrary",)),
    )(x, params["layers"], params["const"])


# ---------------- deterministic parameter init (packed, pre-transposed) ----------------
def init_params(key):
    ks = iter(jax.random.split(key, 32))

    def nrm(shape, scale=0.05):
        return (scale * jax.random.normal(next(ks), shape)).astype(jnp.float32)

    # global constants
    w_in = nrm((F, D))                     # stored transposed: x @ w_in
    b_in = nrm((D,))
    pe = _positional_encoding(S, D)        # (S, D)
    w_out = nrm((D, C))                    # stored transposed
    b_out = nrm((C,))

    cst = jnp.zeros((CROWS, CCOLS), jnp.float32)
    cst = cst.at[0:F, 0:D].set(2.0 * w_in)                        # fold x + (x+pe)
    pe_bias = jnp.tile(pe, (B, 1)) + 2.0 * b_in[None, :]          # (B*S, D)
    cst = cst.at[F:F + B * S, 0:D].set(pe_bias)
    cst = cst.at[0:D, 128:128 + C].set(w_out)
    cst = cst.at[0:1, 256:256 + C].set(b_out[None, :])

    # per-layer slab
    scale_q = 1.0 / math.sqrt(DH)
    layers = []
    for _ in range(L):
        wq, wk, wv, wo = nrm((D, D)), nrm((D, D)), nrm((D, D)), nrm((D, D))
        w1, w2 = nrm((D, DFF)), nrm((DFF, D))
        bq, bk, bv, bo = nrm((D,)), nrm((D,)), nrm((D,)), nrm((D,))
        b1, b2 = nrm((DFF,)), nrm((D,))

        blk = jnp.zeros((WROWS, WCOLS), jnp.float32)
        blk = blk.at[0:D, 0:D].set(scale_q * wq)                  # fold 1/sqrt(DH)
        blk = blk.at[D:2 * D, 0:D].set(wk)
        blk = blk.at[0:D, 128:128 + D].set(wv)
        blk = blk.at[D:2 * D, 128:128 + D].set(wo)
        blk = blk.at[0:D, 256:256 + DFF].set(w1)
        blk = blk.at[0:DFF, 384:384 + D].set(w2)
        blk = blk.at[VROW + 0, VCOL:VCOL + D].set(scale_q * bq)
        blk = blk.at[VROW + 1, VCOL:VCOL + D].set(bk)
        blk = blk.at[VROW + 2, VCOL:VCOL + D].set(bv)
        blk = blk.at[VROW + 3, VCOL:VCOL + D].set(bo)
        blk = blk.at[VROW + 4, VCOL:VCOL + DFF].set(b1)
        blk = blk.at[VROW + 5, VCOL:VCOL + D].set(b2)
        blk = blk.at[VROW + 6, VCOL:VCOL + D].set(jnp.ones((D,), jnp.float32))  # gamma1
        # beta1 (row VROW+7) stays zero
        blk = blk.at[VROW + 8, VCOL:VCOL + D].set(jnp.ones((D,), jnp.float32))  # gamma2
        # beta2 (row VROW+9) stays zero
        layers.append(blk)

    return {"layers": jnp.stack(layers), "const": cst}


if __name__ == "__main__":
    key = jax.random.PRNGKey(0)
    k_x, k_img, k_p = jax.random.split(key, 3)
    x = jax.random.normal(k_x, (B, 1, S, F), dtype=jnp.float32)
    img = jax.random.normal(k_img, (B, 3, 8, 8), dtype=jnp.float32)  # unused, as in forward
    params = init_params(k_p)

    out = forward(x, img, params)
    jax.block_until_ready(out)
    assert out.shape == (B, C) and out.dtype == jnp.float32
    print("KERNEL_OK")
</pallas_src>

<mosaic_0001>
module attributes {stable_mosaic.version = 11 : i64} {
  func.func @fused_forward_kernel(%arg0: i32, %arg1: memref<2x8x16xf32, #tpu.memory_space<vmem>>, %arg2: memref<2x64x512xf32, #tpu.memory_space<vmem>>, %arg3: memref<32x384xf32, #tpu.memory_space<vmem>>, %arg4: memref<2x2xf32, #tpu.memory_space<vmem>>) attributes {dimension_semantics = [#tpu.dimension_semantics<arbitrary>], iteration_bounds = array<i64: 1>, scalar_prefetch = 0 : i64, scratch_operands = 0 : i64, tpu.core_type = #tpu.core_type<tc>, window_params = [{pipeline_mode = #tpu.pipeline_mode<synchronous>, transform_indices = @transform_0, window_bounds = array<i64: 2, 8, 16>}, {pipeline_mode = #tpu.pipeline_mode<synchronous>, transform_indices = @transform_1, window_bounds = array<i64: 2, 64, 512>}, {pipeline_mode = #tpu.pipeline_mode<synchronous>, transform_indices = @transform_2, window_bounds = array<i64: 32, 384>}, {pipeline_mode = #tpu.pipeline_mode<synchronous>, transform_indices = @transform_3, window_bounds = array<i64: 2, 2>}]} {
    %c0 = arith.constant 0 : index
    %c0_0 = arith.constant 0 : index
    %c0_1 = arith.constant 0 : index
    %0 = vector.load %arg1[%c0, %c0_0, %c0_1] : memref<2x8x16xf32, #tpu.memory_space<vmem>>, vector<2x8x16xf32>
    %cst = arith.constant dense<0x7F800000> : vector<2x16xf32>
    %1 = vector.multi_reduction <minimumf>, %0, %cst [1] : vector<2x8x16xf32> to vector<2x16xf32>
    %2 = vector.shape_cast %1 : vector<2x16xf32> to vector<2x1x16xf32>
    %cst_2 = arith.constant dense<0xFF800000> : vector<2x16xf32>
    %3 = vector.multi_reduction <maximumf>, %0, %cst_2 [1] : vector<2x8x16xf32> to vector<2x16xf32>
    %4 = vector.shape_cast %3 : vector<2x16xf32> to vector<2x1x16xf32>
    %5 = vector.broadcast %2 : vector<2x1x16xf32> to vector<2x8x16xf32>
    %6 = arith.subf %0, %5 : vector<2x8x16xf32>
    %7 = arith.subf %4, %2 : vector<2x1x16xf32>
    %cst_3 = arith.constant 9.99999993E-9 : f32
    %8 = vector.broadcast %cst_3 : f32 to vector<2x1x16xf32>
    %9 = arith.addf %7, %8 : vector<2x1x16xf32>
    %10 = tpu.reciprocal %9 {approx = true} : vector<2x1x16xf32> -> vector<2x1x16xf32>
    %11 = vector.broadcast %10 : vector<2x1x16xf32> to vector<2x8x16xf32>
    %12 = arith.mulf %6, %11 : vector<2x8x16xf32>
    %13 = vector.shape_cast %12 : vector<2x8x16xf32> to vector<16x16xf32>
    %c0_4 = arith.constant 0 : index
    %c0_5 = arith.constant 0 : index
    %14 = vector.load %arg3[%c0_4, %c0_5] : memref<32x384xf32, #tpu.memory_space<vmem>>, vector<16x32xf32>
    %c16 = arith.constant 16 : index
    %c0_6 = arith.constant 0 : index
    %15 = vector.load %arg3[%c16, %c0_6] : memref<32x384xf32, #tpu.memory_space<vmem>>, vector<16x32xf32>
    %cst_7 = arith.constant dense<0.000000e+00> : vector<16x32xf32>
    %16 = tpu.matmul %13, %14, %cst_7 {dimension_numbers = #tpu.dot_dimension_numbers<[1], [0], [0], [1], [0, 0, 1, 1], [], []>} : vector<16x16xf32>, vector<16x32xf32>, vector<16x32xf32> -> vector<16x32xf32>
    %17 = arith.addf %16, %15 : vector<16x32xf32>
    %c0_8 = arith.constant 0 : index
    %c0_9 = arith.constant 0 : index
    %c0_10 = arith.constant 0 : index
    %18 = vector.load %arg2[%c0_8, %c0_9, %c0_10] : memref<2x64x512xf32, #tpu.memory_space<vmem>>, vector<1x32x32xf32>
    %19 = vector.shape_cast %18 : vector<1x32x32xf32> to vector<32x32xf32>
    %c0_11 = arith.constant 0 : index
    %c32 = arith.constant 32 : index
    %c0_12 = arith.constant 0 : index
    %20 = vector.load %arg2[%c0_11, %c32, %c0_12] : memref<2x64x512xf32, #tpu.memory_space<vmem>>, vector<1x32x32xf32>
    %21 = vector.shape_cast %20 : vector<1x32x32xf32> to vector<32x32xf32>
    %c0_13 = arith.constant 0 : index
    %c0_14 = arith.constant 0 : index
    %c128 = arith.constant 128 : index
    %22 = vector.load %arg2[%c0_13, %c0_14, %c128] : memref<2x64x512xf32, #tpu.memory_space<vmem>>, vector<1x32x32xf32>
    %23 = vector.shape_cast %22 : vector<1x32x32xf32> to vector<32x32xf32>
    %c0_15 = arith.constant 0 : index
    %c32_16 = arith.constant 32 : index
    %c128_17 = arith.constant 128 : index
    %24 = vector.load %arg2[%c0_15, %c32_16, %c128_17] : memref<2x64x512xf32, #tpu.memory_space<vmem>>, vector<1x32x32xf32>
    %25 = vector.shape_cast %24 : vector<1x32x32xf32> to vector<32x32xf32>
    %c0_18 = arith.constant 0 : index
    %c0_19 = arith.constant 0 : index
    %c256 = arith.constant 256 : index
    %26 = vector.load %arg2[%c0_18, %c0_19, %c256] : memref<2x64x512xf32, #tpu.memory_space<vmem>>, vector<1x32x64xf32>
    %27 = vector.shape_cast %26 : vector<1x32x64xf32> to vector<32x64xf32>
    %c0_20 = arith.constant 0 : index
    %c0_21 = arith.constant 0 : index
    %c384 = arith.constant 384 : index
    %28 = vector.load %arg2[%c0_20, %c0_21, %c384] : memref<2x64x512xf32, #tpu.memory_space<vmem>>, vector<1x64x32xf32>
    %29 = vector.shape_cast %28 : vector<1x64x32xf32> to vector<64x32xf32>
    %c0_22 = arith.constant 0 : index
    %c32_23 = arith.constant 32 : index
    %c256_24 = arith.constant 256 : index
    %30 = vector.load %arg2[%c0_22, %c32_23, %c256_24] : memref<2x64x512xf32, #tpu.memory_space<vmem>>, vector<1x16x128xf32>
    %31 = vector.shape_cast %30 : vector<1x16x128xf32> to vector<16x128xf32>
    %32 = vector.extract_strided_slice %31 {offsets = [0, 0], sizes = [1, 32], strides = [1, 1]} : vector<16x128xf32> to vector<1x32xf32>
    %33 = vector.extract_strided_slice %31 {offsets = [1, 0], sizes = [1, 32], strides = [1, 1]} : vector<16x128xf32> to vector<1x32xf32>
    %34 = vector.extract_strided_slice %31 {offsets = [2, 0], sizes = [1, 32], strides = [1, 1]} : vector<16x128xf32> to vector<1x32xf32>
    %35 = vector.extract_strided_slice %31 {offsets = [3, 0], sizes = [1, 32], strides = [1, 1]} : vector<16x128xf32> to vector<1x32xf32>
    %36 = vector.extract_strided_slice %31 {offsets = [4, 0], sizes = [1, 64], strides = [1, 1]} : vector<16x128xf32> to vector<1x64xf32>
    %37 = vector.extract_strided_slice %31 {offsets = [5, 0], sizes = [1, 32], strides = [1, 1]} : vector<16x128xf32> to vector<1x32xf32>
    %38 = vector.extract_strided_slice %31 {offsets = [6, 0], sizes = [1, 32], strides = [1, 1]} : vector<16x128xf32> to vector<1x32xf32>
    %39 = vector.extract_strided_slice %31 {offsets = [7, 0], sizes = [1, 32], strides = [1, 1]} : vector<16x128xf32> to vector<1x32xf32>
    %40 = vector.extract_strided_slice %31 {offsets = [8, 0], sizes = [1, 32], strides = [1, 1]} : vector<16x128xf32> to vector<1x32xf32>
    %41 = vector.extract_strided_slice %31 {offsets = [9, 0], sizes = [1, 32], strides = [1, 1]} : vector<16x128xf32> to vector<1x32xf32>
    %cst_25 = arith.constant dense<0.000000e+00> : vector<16x32xf32>
    %42 = tpu.matmul %17, %19, %cst_25 {dimension_numbers = #tpu.dot_dimension_numbers<[1], [0], [0], [1], [0, 0, 1, 1], [], []>} : vector<16x32xf32>, vector<32x32xf32>, vector<16x32xf32> -> vector<16x32xf32>
    %43 = vector.broadcast %32 : vector<1x32xf32> to vector<16x32xf32>
    %44 = arith.addf %42, %43 : vector<16x32xf32>
    %cst_26 = arith.constant dense<0.000000e+00> : vector<16x32xf32>
    %45 = tpu.matmul %17, %21, %cst_26 {dimension_numbers = #tpu.dot_dimension_numbers<[1], [0], [0], [1], [0, 0, 1, 1], [], []>} : vector<16x32xf32>, vector<32x32xf32>, vector<16x32xf32> -> vector<16x32xf32>
    %46 = vector.broadcast %33 : vector<1x32xf32> to vector<16x32xf32>
    %47 = arith.addf %45, %46 : vector<16x32xf32>
    %cst_27 = arith.constant dense<0.000000e+00> : vector<16x32xf32>
    %48 = tpu.matmul %17, %23, %cst_27 {dimension_numbers = #tpu.dot_dimension_numbers<[1], [0], [0], [1], [0, 0, 1, 1], [], []>} : vector<16x32xf32>, vector<32x32xf32>, vector<16x32xf32> -> vector<16x32xf32>
    %49 = vector.broadcast %34 : vector<1x32xf32> to vector<16x32xf32>
    %50 = arith.addf %48, %49 : vector<16x32xf32>
    %51 = vector.shape_cast %44 : vector<16x32xf32> to vector<2x8x32xf32>
    %52 = vector.shape_cast %47 : vector<16x32xf32> to vector<2x8x32xf32>
    %53 = vector.shape_cast %50 : vector<16x32xf32> to vector<2x8x32xf32>
    %54 = vector.extract_strided_slice %51 {offsets = [0, 0, 0], sizes = [2, 8, 8], strides = [1, 1, 1]} : vector<2x8x32xf32> to vector<2x8x8xf32>
    %55 = vector.extract_strided_slice %51 {offsets = [0, 0, 8], sizes = [2, 8, 8], strides = [1, 1, 1]} : vector<2x8x32xf32> to vector<2x8x8xf32>
    %56 = vector.extract_strided_slice %51 {offsets = [0, 0, 16], sizes = [2, 8, 8], strides = [1, 1, 1]} : vector<2x8x32xf32> to vector<2x8x8xf32>
    %57 = vector.extract_strided_slice %51 {offsets = [0, 0, 24], sizes = [2, 8, 8], strides = [1, 1, 1]} : vector<2x8x32xf32> to vector<2x8x8xf32>
    %58 = tpu.concatenate %54, %55, %56, %57 in 0 : vector<2x8x8xf32>, vector<2x8x8xf32>, vector<2x8x8xf32>, vector<2x8x8xf32> -> vector<8x8x8xf32>
    %59 = vector.extract_strided_slice %52 {offsets = [0, 0, 0], sizes = [2, 8, 8], strides = [1, 1, 1]} : vector<2x8x32xf32> to vector<2x8x8xf32>
    %60 = vector.extract_strided_slice %52 {offsets = [0, 0, 8], sizes = [2, 8, 8], strides = [1, 1, 1]} : vector<2x8x32xf32> to vector<2x8x8xf32>
    %61 = vector.extract_strided_slice %52 {offsets = [0, 0, 16], sizes = [2, 8, 8], strides = [1, 1, 1]} : vector<2x8x32xf32> to vector<2x8x8xf32>
    %62 = vector.extract_strided_slice %52 {offsets = [0, 0, 24], sizes = [2, 8, 8], strides = [1, 1, 1]} : vector<2x8x32xf32> to vector<2x8x8xf32>
    %63 = tpu.concatenate %59, %60, %61, %62 in 0 : vector<2x8x8xf32>, vector<2x8x8xf32>, vector<2x8x8xf32>, vector<2x8x8xf32> -> vector<8x8x8xf32>
    %64 = vector.extract_strided_slice %53 {offsets = [0, 0, 0], sizes = [2, 8, 8], strides = [1, 1, 1]} : vector<2x8x32xf32> to vector<2x8x8xf32>
    %65 = vector.extract_strided_slice %53 {offsets = [0, 0, 8], sizes = [2, 8, 8], strides = [1, 1, 1]} : vector<2x8x32xf32> to vector<2x8x8xf32>
    %66 = vector.extract_strided_slice %53 {offsets = [0, 0, 16], sizes = [2, 8, 8], strides = [1, 1, 1]} : vector<2x8x32xf32> to vector<2x8x8xf32>
    %67 = vector.extract_strided_slice %53 {offsets = [0, 0, 24], sizes = [2, 8, 8], strides = [1, 1, 1]} : vector<2x8x32xf32> to vector<2x8x8xf32>
    %68 = tpu.concatenate %64, %65, %66, %67 in 0 : vector<2x8x8xf32>, vector<2x8x8xf32>, vector<2x8x8xf32>, vector<2x8x8xf32> -> vector<8x8x8xf32>
    "tpu.trace_start"() <{level = 10 : i32, message = "nqd,nkd->nqk"}> : () -> ()
    %cst_28 = arith.constant dense<0.000000e+00> : vector<8x8x8xf32>
    %69 = tpu.matmul %58, %63, %cst_28 {dimension_numbers = #tpu.dot_dimension_numbers<[2], [2], [1], [1], [0, 0, 0, 1, 1, 1], [0], [0]>} : vector<8x8x8xf32>, vector<8x8x8xf32>, vector<8x8x8xf32> -> vector<8x8x8xf32>
    "tpu.trace_stop"() : () -> ()
    %cst_29 = arith.constant dense<0xFF800000> : vector<8x8xf32>
    %70 = vector.multi_reduction <maximumf>, %69, %cst_29 [2] : vector<8x8x8xf32> to vector<8x8xf32>
    %71 = vector.shape_cast %70 : vector<8x8xf32> to vector<8x8x1xf32>
    %72 = vector.broadcast %71 : vector<8x8x1xf32> to vector<8x8x8xf32>
    %73 = arith.subf %69, %72 : vector<8x8x8xf32>
    %74 = math.exp %73 : vector<8x8x8xf32>
    %cst_30 = arith.constant dense<0.000000e+00> : vector<8x8xf32>
    %75 = vector.multi_reduction <add>, %74, %cst_30 [2] : vector<8x8x8xf32> to vector<8x8xf32>
    %76 = vector.shape_cast %75 : vector<8x8xf32> to vector<8x8x1xf32>
    %77 = tpu.reciprocal %76 {approx = true} : vector<8x8x1xf32> -> vector<8x8x1xf32>
    %78 = vector.broadcast %77 : vector<8x8x1xf32> to vector<8x8x8xf32>
    %79 = arith.mulf %74, %78 : vector<8x8x8xf32>
    "tpu.trace_start"() <{level = 10 : i32, message = "nqk,nkd->nqd"}> : () -> ()
    %cst_31 = arith.constant dense<0.000000e+00> : vector<8x8x8xf32>
    %80 = tpu.matmul %79, %68, %cst_31 {dimension_numbers = #tpu.dot_dimension_numbers<[2], [1], [1], [2], [0, 0, 0, 1, 1, 2], [0], [0]>} : vector<8x8x8xf32>, vector<8x8x8xf32>, vector<8x8x8xf32> -> vector<8x8x8xf32>
    "tpu.trace_stop"() : () -> ()
    %81 = vector.extract_strided_slice %80 {offsets = [0, 0, 0], sizes = [2, 8, 8], strides = [1, 1, 1]} : vector<8x8x8xf32> to vector<2x8x8xf32>
    %82 = vector.extract_strided_slice %80 {offsets = [2, 0, 0], sizes = [2, 8, 8], strides = [1, 1, 1]} : vector<8x8x8xf32> to vector<2x8x8xf32>
    %83 = vector.extract_strided_slice %80 {offsets = [4, 0, 0], sizes = [2, 8, 8], strides = [1, 1, 1]} : vector<8x8x8xf32> to vector<2x8x8xf32>
    %84 = vector.extract_strided_slice %80 {offsets = [6, 0, 0], sizes = [2, 8, 8], strides = [1, 1, 1]} : vector<8x8x8xf32> to vector<2x8x8xf32>
    %85 = tpu.concatenate %81, %82, %83, %84 in 2 : vector<2x8x8xf32>, vector<2x8x8xf32>, vector<2x8x8xf32>, vector<2x8x8xf32> -> vector<2x8x32xf32>
    %86 = vector.shape_cast %85 : vector<2x8x32xf32> to vector<16x32xf32>
    %cst_32 = arith.constant dense<0.000000e+00> : vector<16x32xf32>
    %87 = tpu.matmul %86, %25, %cst_32 {dimension_numbers = #tpu.dot_dimension_numbers<[1], [0], [0], [1], [0, 0, 1, 1], [], []>} : vector<16x32xf32>, vector<32x32xf32>, vector<16x32xf32> -> vector<16x32xf32>
    %88 = vector.broadcast %35 : vector<1x32xf32> to vector<16x32xf32>
    %89 = arith.addf %87, %88 : vector<16x32xf32>
    %90 = arith.addf %17, %89 : vector<16x32xf32>
    %cst_33 = arith.constant dense<0.000000e+00> : vector<16xf32>
    %91 = vector.multi_reduction <add>, %90, %cst_33 [1] : vector<16x32xf32> to vector<16xf32>
    %92 = vector.shape_cast %91 : vector<16xf32> to vector<16x1xf32>
    %cst_34 = arith.constant 3.200000e+01 : f32
    %93 = vector.broadcast %cst_34 : f32 to vector<16x1xf32>
    %94 = arith.divf %92, %93 : vector<16x1xf32>
    %95 = vector.broadcast %94 : vector<16x1xf32> to vector<16x32xf32>
    %96 = arith.subf %90, %95 : vector<16x32xf32>
    %97 = arith.mulf %96, %96 : vector<16x32xf32>
    %cst_35 = arith.constant dense<0.000000e+00> : vector<16xf32>
    %98 = vector.multi_reduction <add>, %97, %cst_35 [1] : vector<16x32xf32> to vector<16xf32>
    %99 = vector.shape_cast %98 : vector<16xf32> to vector<16x1xf32>
    %cst_36 = arith.constant 3.200000e+01 : f32
    %100 = vector.broadcast %cst_36 : f32 to vector<16x1xf32>
    %101 = arith.divf %99, %100 : vector<16x1xf32>
    %102 = vector.broadcast %94 : vector<16x1xf32> to vector<16x32xf32>
    %103 = arith.subf %90, %102 : vector<16x32xf32>
    %cst_37 = arith.constant 9.99999974E-6 : f32
    %104 = vector.broadcast %cst_37 : f32 to vector<16x1xf32>
    %105 = arith.addf %101, %104 : vector<16x1xf32>
    %106 = math.rsqrt %105 : vector<16x1xf32>
    %107 = vector.broadcast %106 : vector<16x1xf32> to vector<16x32xf32>
    %108 = arith.mulf %103, %107 : vector<16x32xf32>
    %109 = vector.broadcast %38 : vector<1x32xf32> to vector<16x32xf32>
    %110 = arith.mulf %108, %109 : vector<16x32xf32>
    %111 = vector.broadcast %39 : vector<1x32xf32> to vector<16x32xf32>
    %112 = arith.addf %110, %111 : vector<16x32xf32>
    %cst_38 = arith.constant dense<0.000000e+00> : vector<16x64xf32>
    %113 = tpu.matmul %112, %27, %cst_38 {dimension_numbers = #tpu.dot_dimension_numbers<[1], [0], [0], [1], [0, 0, 1, 1], [], []>} : vector<16x32xf32>, vector<32x64xf32>, vector<16x64xf32> -> vector<16x64xf32>
    %114 = vector.broadcast %36 : vector<1x64xf32> to vector<16x64xf32>
    %115 = arith.addf %113, %114 : vector<16x64xf32>
    %cst_39 = arith.constant 0.000000e+00 : f32
    %116 = vector.broadcast %cst_39 : f32 to vector<16x64xf32>
    %117 = arith.maximumf %115, %116 : vector<16x64xf32>
    %cst_40 = arith.constant dense<0.000000e+00> : vector<16x32xf32>
    %118 = tpu.matmul %117, %29, %cst_40 {dimension_numbers = #tpu.dot_dimension_numbers<[1], [0], [0], [1], [0, 0, 1, 1], [], []>} : vector<16x64xf32>, vector<64x32xf32>, vector<16x32xf32> -> vector<16x32xf32>
    %119 = vector.broadcast %37 : vector<1x32xf32> to vector<16x32xf32>
    %120 = arith.addf %118, %119 : vector<16x32xf32>
    %121 = arith.addf %112, %120 : vector<16x32xf32>
    %cst_41 = arith.constant dense<0.000000e+00> : vector<16xf32>
    %122 = vector.multi_reduction <add>, %121, %cst_41 [1] : vector<16x32xf32> to vector<16xf32>
    %123 = vector.shape_cast %122 : vector<16xf32> to vector<16x1xf32>
    %cst_42 = arith.constant 3.200000e+01 : f32
    %124 = vector.broadcast %cst_42 : f32 to vector<16x1xf32>
    %125 = arith.divf %123, %124 : vector<16x1xf32>
    %126 = vector.broadcast %125 : vector<16x1xf32> to vector<16x32xf32>
    %127 = arith.subf %121, %126 : vector<16x32xf32>
    %128 = arith.mulf %127, %127 : vector<16x32xf32>
    %cst_43 = arith.constant dense<0.000000e+00> : vector<16xf32>
    %129 = vector.multi_reduction <add>, %128, %cst_43 [1] : vector<16x32xf32> to vector<16xf32>
    %130 = vector.shape_cast %129 : vector<16xf32> to vector<16x1xf32>
    %cst_44 = arith.constant 3.200000e+01 : f32
    %131 = vector.broadcast %cst_44 : f32 to vector<16x1xf32>
    %132 = arith.divf %130, %131 : vector<16x1xf32>
    %133 = vector.broadcast %125 : vector<16x1xf32> to vector<16x32xf32>
    %134 = arith.subf %121, %133 : vector<16x32xf32>
    %cst_45 = arith.constant 9.99999974E-6 : f32
    %135 = vector.broadcast %cst_45 : f32 to vector<16x1xf32>
    %136 = arith.addf %132, %135 : vector<16x1xf32>
    %137 = math.rsqrt %136 : vector<16x1xf32>
    %138 = vector.broadcast %137 : vector<16x1xf32> to vector<16x32xf32>
    %139 = arith.mulf %134, %138 : vector<16x32xf32>
    %140 = vector.broadcast %40 : vector<1x32xf32> to vector<16x32xf32>
    %141 = arith.mulf %139, %140 : vector<16x32xf32>
    %142 = vector.broadcast %41 : vector<1x32xf32> to vector<16x32xf32>
    %143 = arith.addf %141, %142 : vector<16x32xf32>
    %c1 = arith.constant 1 : index
    %c0_46 = arith.constant 0 : index
    %c0_47 = arith.constant 0 : index
    %144 = vector.load %arg2[%c1, %c0_46, %c0_47] : memref<2x64x512xf32, #tpu.memory_space<vmem>>, vector<1x32x32xf32>
    %145 = vector.shape_cast %144 : vector<1x32x32xf32> to vector<32x32xf32>
    %c1_48 = arith.constant 1 : index
    %c32_49 = arith.constant 32 : index
    %c0_50 = arith.constant 0 : index
    %146 = vector.load %arg2[%c1_48, %c32_49, %c0_50] : memref<2x64x512xf32, #tpu.memory_space<vmem>>, vector<1x32x32xf32>
    %147 = vector.shape_cast %146 : vector<1x32x32xf32> to vector<32x32xf32>
    %c1_51 = arith.constant 1 : index
    %c0_52 = arith.constant 0 : index
    %c128_53 = arith.constant 128 : index
    %148 = vector.load %arg2[%c1_51, %c0_52, %c128_53] : memref<2x64x512xf32, #tpu.memory_space<vmem>>, vector<1x32x32xf32>
    %149 = vector.shape_cast %148 : vector<1x32x32xf32> to vector<32x32xf32>
    %c1_54 = arith.constant 1 : index
    %c32_55 = arith.constant 32 : index
    %c128_56 = arith.constant 128 : index
    %150 = vector.load %arg2[%c1_54, %c32_55, %c128_56] : memref<2x64x512xf32, #tpu.memory_space<vmem>>, vector<1x32x32xf32>
    %151 = vector.shape_cast %150 : vector<1x32x32xf32> to vector<32x32xf32>
    %c1_57 = arith.constant 1 : index
    %c0_58 = arith.constant 0 : index
    %c256_59 = arith.constant 256 : index
    %152 = vector.load %arg2[%c1_57, %c0_58, %c256_59] : memref<2x64x512xf32, #tpu.memory_space<vmem>>, vector<1x32x64xf32>
    %153 = vector.shape_cast %152 : vector<1x32x64xf32> to vector<32x64xf32>
    %c1_60 = arith.constant 1 : index
    %c0_61 = arith.constant 0 : index
    %c384_62 = arith.constant 384 : index
    %154 = vector.load %arg2[%c1_60, %c0_61, %c384_62] : memref<2x64x512xf32, #tpu.memory_space<vmem>>, vector<1x64x32xf32>
    %155 = vector.shape_cast %154 : vector<1x64x32xf32> to vector<64x32xf32>
    %c1_63 = arith.constant 1 : index
    %c32_64 = arith.constant 32 : index
    %c256_65 = arith.constant 256 : index
    %156 = vector.load %arg2[%c1_63, %c32_64, %c256_65] : memref<2x64x512xf32, #tpu.memory_space<vmem>>, vector<1x16x128xf32>
    %157 = vector.shape_cast %156 : vector<1x16x128xf32> to vector<16x128xf32>
    %158 = vector.extract_strided_slice %157 {offsets = [0, 0], sizes = [1, 32], strides = [1, 1]} : vector<16x128xf32> to vector<1x32xf32>
    %159 = vector.extract_strided_slice %157 {offsets = [1, 0], sizes = [1, 32], strides = [1, 1]} : vector<16x128xf32> to vector<1x32xf32>
    %160 = vector.extract_strided_slice %157 {offsets = [2, 0], sizes = [1, 32], strides = [1, 1]} : vector<16x128xf32> to vector<1x32xf32>
    %161 = vector.extract_strided_slice %157 {offsets = [3, 0], sizes = [1, 32], strides = [1, 1]} : vector<16x128xf32> to vector<1x32xf32>
    %162 = vector.extract_strided_slice %157 {offsets = [4, 0], sizes = [1, 64], strides = [1, 1]} : vector<16x128xf32> to vector<1x64xf32>
    %163 = vector.extract_strided_slice %157 {offsets = [5, 0], sizes = [1, 32], strides = [1, 1]} : vector<16x128xf32> to vector<1x32xf32>
    %164 = vector.extract_strided_slice %157 {offsets = [6, 0], sizes = [1, 32], strides = [1, 1]} : vector<16x128xf32> to vector<1x32xf32>
    %165 = vector.extract_strided_slice %157 {offsets = [7, 0], sizes = [1, 32], strides = [1, 1]} : vector<16x128xf32> to vector<1x32xf32>
    %166 = vector.extract_strided_slice %157 {offsets = [8, 0], sizes = [1, 32], strides = [1, 1]} : vector<16x128xf32> to vector<1x32xf32>
    %167 = vector.extract_strided_slice %157 {offsets = [9, 0], sizes = [1, 32], strides = [1, 1]} : vector<16x128xf32> to vector<1x32xf32>
    %cst_66 = arith.constant dense<0.000000e+00> : vector<16x32xf32>
    %168 = tpu.matmul %143, %145, %cst_66 {dimension_numbers = #tpu.dot_dimension_numbers<[1], [0], [0], [1], [0, 0, 1, 1], [], []>} : vector<16x32xf32>, vector<32x32xf32>, vector<16x32xf32> -> vector<16x32xf32>
    %169 = vector.broadcast %158 : vector<1x32xf32> to vector<16x32xf32>
    %170 = arith.addf %168, %169 : vector<16x32xf32>
    %cst_67 = arith.constant dense<0.000000e+00> : vector<16x32xf32>
    %171 = tpu.matmul %143, %147, %cst_67 {dimension_numbers = #tpu.dot_dimension_numbers<[1], [0], [0], [1], [0, 0, 1, 1], [], []>} : vector<16x32xf32>, vector<32x32xf32>, vector<16x32xf32> -> vector<16x32xf32>
    %172 = vector.broadcast %159 : vector<1x32xf32> to vector<16x32xf32>
    %173 = arith.addf %171, %172 : vector<16x32xf32>
    %cst_68 = arith.constant dense<0.000000e+00> : vector<16x32xf32>
    %174 = tpu.matmul %143, %149, %cst_68 {dimension_numbers = #tpu.dot_dimension_numbers<[1], [0], [0], [1], [0, 0, 1, 1], [], []>} : vector<16x32xf32>, vector<32x32xf32>, vector<16x32xf32> -> vector<16x32xf32>
    %175 = vector.broadcast %160 : vector<1x32xf32> to vector<16x32xf32>
    %176 = arith.addf %174, %175 : vector<16x32xf32>
    %177 = vector.shape_cast %170 : vector<16x32xf32> to vector<2x8x32xf32>
    %178 = vector.shape_cast %173 : vector<16x32xf32> to vector<2x8x32xf32>
    %179 = vector.shape_cast %176 : vector<16x32xf32> to vector<2x8x32xf32>
    %180 = vector.extract_strided_slice %177 {offsets = [0, 0, 0], sizes = [2, 8, 8], strides = [1, 1, 1]} : vector<2x8x32xf32> to vector<2x8x8xf32>
    %181 = vector.extract_strided_slice %177 {offsets = [0, 0, 8], sizes = [2, 8, 8], strides = [1, 1, 1]} : vector<2x8x32xf32> to vector<2x8x8xf32>
    %182 = vector.extract_strided_slice %177 {offsets = [0, 0, 16], sizes = [2, 8, 8], strides = [1, 1, 1]} : vector<2x8x32xf32> to vector<2x8x8xf32>
    %183 = vector.extract_strided_slice %177 {offsets = [0, 0, 24], sizes = [2, 8, 8], strides = [1, 1, 1]} : vector<2x8x32xf32> to vector<2x8x8xf32>
    %184 = tpu.concatenate %180, %181, %182, %183 in 0 : vector<2x8x8xf32>, vector<2x8x8xf32>, vector<2x8x8xf32>, vector<2x8x8xf32> -> vector<8x8x8xf32>
    %185 = vector.extract_strided_slice %178 {offsets = [0, 0, 0], sizes = [2, 8, 8], strides = [1, 1, 1]} : vector<2x8x32xf32> to vector<2x8x8xf32>
    %186 = vector.extract_strided_slice %178 {offsets = [0, 0, 8], sizes = [2, 8, 8], strides = [1, 1, 1]} : vector<2x8x32xf32> to vector<2x8x8xf32>
    %187 = vector.extract_strided_slice %178 {offsets = [0, 0, 16], sizes = [2, 8, 8], strides = [1, 1, 1]} : vector<2x8x32xf32> to vector<2x8x8xf32>
    %188 = vector.extract_strided_slice %178 {offsets = [0, 0, 24], sizes = [2, 8, 8], strides = [1, 1, 1]} : vector<2x8x32xf32> to vector<2x8x8xf32>
    %189 = tpu.concatenate %185, %186, %187, %188 in 0 : vector<2x8x8xf32>, vector<2x8x8xf32>, vector<2x8x8xf32>, vector<2x8x8xf32> -> vector<8x8x8xf32>
    %190 = vector.extract_strided_slice %179 {offsets = [0, 0, 0], sizes = [2, 8, 8], strides = [1, 1, 1]} : vector<2x8x32xf32> to vector<2x8x8xf32>
    %191 = vector.extract_strided_slice %179 {offsets = [0, 0, 8], sizes = [2, 8, 8], strides = [1, 1, 1]} : vector<2x8x32xf32> to vector<2x8x8xf32>
    %192 = vector.extract_strided_slice %179 {offsets = [0, 0, 16], sizes = [2, 8, 8], strides = [1, 1, 1]} : vector<2x8x32xf32> to vector<2x8x8xf32>
    %193 = vector.extract_strided_slice %179 {offsets = [0, 0, 24], sizes = [2, 8, 8], strides = [1, 1, 1]} : vector<2x8x32xf32> to vector<2x8x8xf32>
    %194 = tpu.concatenate %190, %191, %192, %193 in 0 : vector<2x8x8xf32>, vector<2x8x8xf32>, vector<2x8x8xf32>, vector<2x8x8xf32> -> vector<8x8x8xf32>
    "tpu.trace_start"() <{level = 10 : i32, message = "nqd,nkd->nqk"}> : () -> ()
    %cst_69 = arith.constant dense<0.000000e+00> : vector<8x8x8xf32>
    %195 = tpu.matmul %184, %189, %cst_69 {dimension_numbers = #tpu.dot_dimension_numbers<[2], [2], [1], [1], [0, 0, 0, 1, 1, 1], [0], [0]>} : vector<8x8x8xf32>, vector<8x8x8xf32>, vector<8x8x8xf32> -> vector<8x8x8xf32>
    "tpu.trace_stop"() : () -> ()
    %cst_70 = arith.constant dense<0xFF800000> : vector<8x8xf32>
    %196 = vector.multi_reduction <maximumf>, %195, %cst_70 [2] : vector<8x8x8xf32> to vector<8x8xf32>
    %197 = vector.shape_cast %196 : vector<8x8xf32> to vector<8x8x1xf32>
    %198 = vector.broadcast %197 : vector<8x8x1xf32> to vector<8x8x8xf32>
    %199 = arith.subf %195, %198 : vector<8x8x8xf32>
    %200 = math.exp %199 : vector<8x8x8xf32>
    %cst_71 = arith.constant dense<0.000000e+00> : vector<8x8xf32>
    %201 = vector.multi_reduction <add>, %200, %cst_71 [2] : vector<8x8x8xf32> to vector<8x8xf32>
    %202 = vector.shape_cast %201 : vector<8x8xf32> to vector<8x8x1xf32>
    %203 = tpu.reciprocal %202 {approx = true} : vector<8x8x1xf32> -> vector<8x8x1xf32>
    %204 = vector.broadcast %203 : vector<8x8x1xf32> to vector<8x8x8xf32>
    %205 = arith.mulf %200, %204 : vector<8x8x8xf32>
    "tpu.trace_start"() <{level = 10 : i32, message = "nqk,nkd->nqd"}> : () -> ()
    %cst_72 = arith.constant dense<0.000000e+00> : vector<8x8x8xf32>
    %206 = tpu.matmul %205, %194, %cst_72 {dimension_numbers = #tpu.dot_dimension_numbers<[2], [1], [1], [2], [0, 0, 0, 1, 1, 2], [0], [0]>} : vector<8x8x8xf32>, vector<8x8x8xf32>, vector<8x8x8xf32> -> vector<8x8x8xf32>
    "tpu.trace_stop"() : () -> ()
    %207 = vector.extract_strided_slice %206 {offsets = [0, 0, 0], sizes = [2, 8, 8], strides = [1, 1, 1]} : vector<8x8x8xf32> to vector<2x8x8xf32>
    %208 = vector.extract_strided_slice %206 {offsets = [2, 0, 0], sizes = [2, 8, 8], strides = [1, 1, 1]} : vector<8x8x8xf32> to vector<2x8x8xf32>
    %209 = vector.extract_strided_slice %206 {offsets = [4, 0, 0], sizes = [2, 8, 8], strides = [1, 1, 1]} : vector<8x8x8xf32> to vector<2x8x8xf32>
    %210 = vector.extract_strided_slice %206 {offsets = [6, 0, 0], sizes = [2, 8, 8], strides = [1, 1, 1]} : vector<8x8x8xf32> to vector<2x8x8xf32>
    %211 = tpu.concatenate %207, %208, %209, %210 in 2 : vector<2x8x8xf32>, vector<2x8x8xf32>, vector<2x8x8xf32>, vector<2x8x8xf32> -> vector<2x8x32xf32>
    %212 = vector.shape_cast %211 : vector<2x8x32xf32> to vector<16x32xf32>
    %cst_73 = arith.constant dense<0.000000e+00> : vector<16x32xf32>
    %213 = tpu.matmul %212, %151, %cst_73 {dimension_numbers = #tpu.dot_dimension_numbers<[1], [0], [0], [1], [0, 0, 1, 1], [], []>} : vector<16x32xf32>, vector<32x32xf32>, vector<16x32xf32> -> vector<16x32xf32>
    %214 = vector.broadcast %161 : vector<1x32xf32> to vector<16x32xf32>
    %215 = arith.addf %213, %214 : vector<16x32xf32>
    %216 = arith.addf %143, %215 : vector<16x32xf32>
    %cst_74 = arith.constant dense<0.000000e+00> : vector<16xf32>
    %217 = vector.multi_reduction <add>, %216, %cst_74 [1] : vector<16x32xf32> to vector<16xf32>
    %218 = vector.shape_cast %217 : vector<16xf32> to vector<16x1xf32>
    %cst_75 = arith.constant 3.200000e+01 : f32
    %219 = vector.broadcast %cst_75 : f32 to vector<16x1xf32>
    %220 = arith.divf %218, %219 : vector<16x1xf32>
    %221 = vector.broadcast %220 : vector<16x1xf32> to vector<16x32xf32>
    %222 = arith.subf %216, %221 : vector<16x32xf32>
    %223 = arith.mulf %222, %222 : vector<16x32xf32>
    %cst_76 = arith.constant dense<0.000000e+00> : vector<16xf32>
    %224 = vector.multi_reduction <add>, %223, %cst_76 [1] : vector<16x32xf32> to vector<16xf32>
    %225 = vector.shape_cast %224 : vector<16xf32> to vector<16x1xf32>
    %cst_77 = arith.constant 3.200000e+01 : f32
    %226 = vector.broadcast %cst_77 : f32 to vector<16x1xf32>
    %227 = arith.divf %225, %226 : vector<16x1xf32>
    %228 = vector.broadcast %220 : vector<16x1xf32> to vector<16x32xf32>
    %229 = arith.subf %216, %228 : vector<16x32xf32>
    %cst_78 = arith.constant 9.99999974E-6 : f32
    %230 = vector.broadcast %cst_78 : f32 to vector<16x1xf32>
    %231 = arith.addf %227, %230 : vector<16x1xf32>
    %232 = math.rsqrt %231 : vector<16x1xf32>
    %233 = vector.broadcast %232 : vector<16x1xf32> to vector<16x32xf32>
    %234 = arith.mulf %229, %233 : vector<16x32xf32>
    %235 = vector.broadcast %164 : vector<1x32xf32> to vector<16x32xf32>
    %236 = arith.mulf %234, %235 : vector<16x32xf32>
    %237 = vector.broadcast %165 : vector<1x32xf32> to vector<16x32xf32>
    %238 = arith.addf %236, %237 : vector<16x32xf32>
    %cst_79 = arith.constant dense<0.000000e+00> : vector<16x64xf32>
    %239 = tpu.matmul %238, %153, %cst_79 {dimension_numbers = #tpu.dot_dimension_numbers<[1], [0], [0], [1], [0, 0, 1, 1], [], []>} : vector<16x32xf32>, vector<32x64xf32>, vector<16x64xf32> -> vector<16x64xf32>
    %240 = vector.broadcast %162 : vector<1x64xf32> to vector<16x64xf32>
    %241 = arith.addf %239, %240 : vector<16x64xf32>
    %cst_80 = arith.constant 0.000000e+00 : f32
    %242 = vector.broadcast %cst_80 : f32 to vector<16x64xf32>
    %243 = arith.maximumf %241, %242 : vector<16x64xf32>
    %cst_81 = arith.constant dense<0.000000e+00> : vector<16x32xf32>
    %244 = tpu.matmul %243, %155, %cst_81 {dimension_numbers = #tpu.dot_dimension_numbers<[1], [0], [0], [1], [0, 0, 1, 1], [], []>} : vector<16x64xf32>, vector<64x32xf32>, vector<16x32xf32> -> vector<16x32xf32>
    %245 = vector.broadcast %163 : vector<1x32xf32> to vector<16x32xf32>
    %246 = arith.addf %244, %245 : vector<16x32xf32>
    %247 = arith.addf %238, %246 : vector<16x32xf32>
    %cst_82 = arith.constant dense<0.000000e+00> : vector<16xf32>
    %248 = vector.multi_reduction <add>, %247, %cst_82 [1] : vector<16x32xf32> to vector<16xf32>
    %249 = vector.shape_cast %248 : vector<16xf32> to vector<16x1xf32>
    %cst_83 = arith.constant 3.200000e+01 : f32
    %250 = vector.broadcast %cst_83 : f32 to vector<16x1xf32>
    %251 = arith.divf %249, %250 : vector<16x1xf32>
    %252 = vector.broadcast %251 : vector<16x1xf32> to vector<16x32xf32>
    %253 = arith.subf %247, %252 : vector<16x32xf32>
    %254 = arith.mulf %253, %253 : vector<16x32xf32>
    %cst_84 = arith.constant dense<0.000000e+00> : vector<16xf32>
    %255 = vector.multi_reduction <add>, %254, %cst_84 [1] : vector<16x32xf32> to vector<16xf32>
    %256 = vector.shape_cast %255 : vector<16xf32> to vector<16x1xf32>
    %cst_85 = arith.constant 3.200000e+01 : f32
    %257 = vector.broadcast %cst_85 : f32 to vector<16x1xf32>
    %258 = arith.divf %256, %257 : vector<16x1xf32>
    %259 = vector.broadcast %251 : vector<16x1xf32> to vector<16x32xf32>
    %260 = arith.subf %247, %259 : vector<16x32xf32>
    %cst_86 = arith.constant 9.99999974E-6 : f32
    %261 = vector.broadcast %cst_86 : f32 to vector<16x1xf32>
    %262 = arith.addf %258, %261 : vector<16x1xf32>
    %263 = math.rsqrt %262 : vector<16x1xf32>
    %264 = vector.broadcast %263 : vector<16x1xf32> to vector<16x32xf32>
    %265 = arith.mulf %260, %264 : vector<16x32xf32>
    %266 = vector.broadcast %166 : vector<1x32xf32> to vector<16x32xf32>
    %267 = arith.mulf %265, %266 : vector<16x32xf32>
    %268 = vector.broadcast %167 : vector<1x32xf32> to vector<16x32xf32>
    %269 = arith.addf %267, %268 : vector<16x32xf32>
    %270 = vector.shape_cast %269 : vector<16x32xf32> to vector<2x8x32xf32>
    %271 = vector.extract_strided_slice %270 {offsets = [0, 0, 0], sizes = [2, 1, 32], strides = [1, 1, 1]} : vector<2x8x32xf32> to vector<2x1x32xf32>
    %272 = vector.shape_cast %271 : vector<2x1x32xf32> to vector<2x32xf32>
    %c0_87 = arith.constant 0 : index
    %c128_88 = arith.constant 128 : index
    %273 = vector.load %arg3[%c0_87, %c128_88] : memref<32x384xf32, #tpu.memory_space<vmem>>, vector<32x2xf32>
    %c0_89 = arith.constant 0 : index
    %c256_90 = arith.constant 256 : index
    %274 = vector.load %arg3[%c0_89, %c256_90] : memref<32x384xf32, #tpu.memory_space<vmem>>, vector<1x2xf32>
    %cst_91 = arith.constant dense<0.000000e+00> : vector<2x2xf32>
    %275 = tpu.matmul %272, %273, %cst_91 {dimension_numbers = #tpu.dot_dimension_numbers<[1], [0], [0], [1], [0, 0, 1, 1], [], []>} : vector<2x32xf32>, vector<32x2xf32>, vector<2x2xf32> -> vector<2x2xf32>
    %276 = vector.broadcast %274 : vector<1x2xf32> to vector<2x2xf32>
    %277 = arith.addf %275, %276 : vector<2x2xf32>
    %c0_92 = arith.constant 0 : index
    %c0_93 = arith.constant 0 : index
    %278 = vector.load %arg4[%c0_92, %c0_93] : memref<2x2xf32, #tpu.memory_space<vmem>>, vector<2x2xf32>
    tpu.vector_store %arg4[%c0_92, %c0_93], %277 {strides = array<i32>} : memref<2x2xf32, #tpu.memory_space<vmem>>, vector<2x2xf32>,
    return
  }
  func.func @transform_0(%arg0: i32) -> (i32, i32, i32) {
    %c0_i32 = arith.constant 0 : i32
    %c0_i32_0 = arith.constant 0 : i32
    %c0_i32_1 = arith.constant 0 : i32
    %c0_i32_2 = arith.constant 0 : i32
    return %c0_i32, %c0_i32_0, %c0_i32_1 : i32, i32, i32
  }
  func.func @transform_1(%arg0: i32) -> (i32, i32, i32) {
    %c0_i32 = arith.constant 0 : i32
    %c0_i32_0 = arith.constant 0 : i32
    %c0_i32_1 = arith.constant 0 : i32
    %c0_i32_2 = arith.constant 0 : i32
    return %c0_i32, %c0_i32_0, %c0_i32_1 : i32, i32, i32
  }
  func.func @transform_2(%arg0: i32) -> (i32, i32) {
    %c0_i32 = arith.constant 0 : i32
    %c0_i32_0 = arith.constant 0 : i32
    %c0_i32_1 = arith.constant 0 : i32
    return %c0_i32, %c0_i32_0 : i32, i32
  }
  func.func @transform_3(%arg0: i32) -> (i32, i32) {
    %c0_i32 = arith.constant 0 : i32
    %c0_i32_0 = arith.constant 0 : i32
    %c0_i32_1 = arith.constant 0 : i32
    return %c0_i32, %c0_i32_0 : i32, i32
  }
}

</mosaic_0001>

<llo_original>
// kernel: forward.1
$region0: #{forward.1}
  #allocation0 [shape = 'u32[]', space=smem, size = 0x4, offset = 0x4, fixed_abs, tag = 'smem constant byte address 0x4 - core index']
  #allocation1 [shape = 'u32[144,128]{1,0:T(1,128)}', space=vmem, size = 0x12000, scoped, tag = 'internal scratch']
  %s0 = inlined_call_operand.hbm [shape: f32[2,8,16], index: 0, kind: input, shape index: {}]
  %s1 = inlined_call_operand.hbm [shape: f32[2,64,512], index: 1, kind: input, shape index: {}]
  %s2 = inlined_call_operand.hbm [shape: f32[32,384], index: 2, kind: input, shape index: {}]
  %s3 = inlined_call_operand.hbm [shape: f32[2,2], index: 3, kind: output, shape index: {}]
  %s4 = sld [smem:[#allocation0]]
  $region34: #{forward.1} parent=0
    _
  %s6 = ssub.s32 1, %s4
  %s7 = scalar_select 0, %s6, %s4
  $region1: #{forward.1} parent=0
    #allocation2 [shape = 'u8[8192]{0}', space=vmem, size = 0x2000, scoped, tag = 'input window, operand 0, single buffered']
    #allocation3 [shape = 's32[1]{0}', space=sflag, size = 0x4, scoped, tag = 'scoped memory for forward.1']
    #allocation4 [shape = 's32[1]{0}', space=sflag, size = 0x4, scoped, tag = 'scoped memory for forward.1']
    #allocation5 [shape = 'u8[262144]{0}', space=vmem, size = 0x40000, scoped, tag = 'input window, operand 1, single buffered']
    #allocation6 [shape = 's32[1]{0}', space=sflag, size = 0x4, scoped, tag = 'scoped memory for forward.1']
    #allocation7 [shape = 'u8[49152]{0}', space=vmem, size = 0xc000, scoped, tag = 'input window, operand 2, single buffered']
    #allocation8 [shape = 'u8[1024]{0}', space=vmem, size = 0x400, scoped, tag = 'output window, operand 0, single buffered']
    %8 = vsyncpa [#allocation3], 0
    %9 = vsyncpa [#allocation6], 0
    %10 = vsyncpa [#allocation4], 0
    // Predicated region
    $region2: #{forward.1} parent=1 // pred_check
      _
    $region3: #{forward.1} parent=1 // pred_check_branch
      %12 = sbr.rel (0) target = $region5
    $region4: #{forward.1} parent=1 // pred_region
      %s14 = ssub.s32 256, 256
      %15 = vsyncadd [#allocation3], %s14
      %s16 = sshll.u32 [#allocation2], 4
      %s17 = int_to_ptr.vmem [resolvable:$true] %s16
      %22 = dma.hbm_to_vmem [thread:$0]  %s0, 256, %s17, [#allocation3], 128, 128, 8
    $region5: #{forward.1} parent=1 // pred_fallthru
      _
    // Predicated region
    $region6: #{forward.1} parent=1 // pred_check
      _
    $region7: #{forward.1} parent=1 // pred_check_branch
      %24 = sbr.rel (0) target = $region9
    $region8: #{forward.1} parent=1 // pred_region
      %s26 = ssub.s32 8192, 8192
      %27 = vsyncadd [#allocation6], %s26
      %s28 = sshll.u32 [#allocation5], 4
      %s29 = int_to_ptr.vmem [resolvable:$true] %s28
      %34 = dma.hbm_to_vmem [thread:$0]  %s1, 8192, %s29, [#allocation6], 512, 512, 32
    $region9: #{forward.1} parent=1 // pred_fallthru
      _
    // Predicated region
    $region10: #{forward.1} parent=1 // pred_check
      _
    $region11: #{forward.1} parent=1 // pred_check_branch
      %36 = sbr.rel (0) target = $region13
    $region12: #{forward.1} parent=1 // pred_region
      %s38 = ssub.s32 1536, 1536
      %39 = vsyncadd [#allocation6], %s38
      %s40 = sshll.u32 [#allocation7], 4
      %s41 = int_to_ptr.vmem [resolvable:$true] %s40
      %46 = dma.hbm_to_vmem [thread:$0]  %s2, 1536, %s41, [#allocation6], 384, 384, 24
    $region13: #{forward.1} parent=1 // pred_fallthru
      _
    // Predicated region
    $region14: #{forward.1} parent=1 // pred_check
      _
    $region15: #{forward.1} parent=1 // pred_check_branch
      %48 = sbr.rel (0) target = $region17
    $region16: #{forward.1} parent=1 // pred_region
      %49 = dma.done [#allocation3], 256
    $region17: #{forward.1} parent=1 // pred_fallthru
      _
    // Predicated region
    $region18: #{forward.1} parent=1 // pred_check
      _
    $region19: #{forward.1} parent=1 // pred_check_branch
      %51 = sbr.rel (0) target = $region21
    $region20: #{forward.1} parent=1 // pred_region
      %52 = dma.done [#allocation6], 8192
    $region21: #{forward.1} parent=1 // pred_fallthru
      _
    // Predicated region
    $region22: #{forward.1} parent=1 // pred_check
      _
    $region23: #{forward.1} parent=1 // pred_check_branch
      %54 = sbr.rel (0) target = $region25
    $region24: #{forward.1} parent=1 // pred_region
      %55 = dma.done [#allocation6], 1536
    $region25: #{forward.1} parent=1 // pred_fallthru
      _
    %v56 = vld [vmem:[#allocation2] sm:$0xff]
    %v57 = vld [vmem:[#allocation2 + $0x8] sm:$0xff]
    %vm58 = vcmask 130048
    %v59 = vsel %vm58, %v56, inf
    %v60 = vrot.slane %v59, 4
    %v61 = vmin.f32 %v59, %v60
    %v62 = vrot.slane %v61, 2
    %v63 = vmin.f32 %v61, %v62
    %v64 = vrot.slane %v63, 1
    %v65 = vmin.f32 %v63, %v64
    %v66 = vsel %vm58, %v57, inf
    %v67 = vrot.slane %v66, 4
    %v68 = vmin.f32 %v66, %v67
    %v69 = vrot.slane %v68, 2
    %v70 = vmin.f32 %v68, %v69
    %v71 = vrot.slane %v70, 1
    %v72 = vmin.f32 %v70, %v71
    %v73 = vsel %vm58, %v56, -inf
    %v74 = vrot.slane %v73, 4
    %v75 = vmax.f32 %v73, %v74
    %v76 = vrot.slane %v75, 2
    %v77 = vmax.f32 %v75, %v76
    %v78 = vrot.slane %v77, 1
    %v79 = vmax.f32 %v77, %v78
    %v80 = vsel %vm58, %v57, -inf
    %v81 = vrot.slane %v80, 4
    %v82 = vmax.f32 %v80, %v81
    %v83 = vrot.slane %v82, 2
    %v84 = vmax.f32 %v82, %v83
    %v85 = vrot.slane %v84, 1
    %v86 = vmax.f32 %v84, %v85
    %v87 = vsub.f32 %v56, %v65
    %v88 = vsub.f32 %v57, %v72
    %v89 = vsub.f32 %v79, %v65
    %v90 = vsub.f32 %v86, %v72
    %v91 = vadd.f32 %v89, 1e-08
    %v92 = vadd.f32 %v90, 1e-08
    %v93 = vrcp.pop %v91
    %v94 = vrcp.pop %v92
    %v95 = vmul.f32 %v87, %v93
    %v96 = vmul.f32 %v88, %v94
    %v97 = vld [vmem:[#allocation7] sm:$0xff]
    %v98 = vld [vmem:[#allocation7 + $0x18] sm:$0xff]
    %v99 = vld [vmem:[#allocation7 + $0x30] sm:$0xff]
    %v100 = vld [vmem:[#allocation7 + $0x48] sm:$0xff]
    %v102 = vsel %vm58, %v95, 0
    %v105 = vsel %vm58, %v96, 0
    %107 = vmatprep.subr.mxu0 0.0
    %108 = vmatpush1.msra.mxu0 0.0
    %109 = vmatprep.subr.mxu0 0.0
    %110 = vmatpush1.msra.mxu0 0.0
    %111 = vmatprep.subr.mxu0 0.0
    %112 = vmatpush1.msra.mxu0 0.0
    %113 = vmatprep.subr.mxu0 0.0
    %114 = vmatpush1.msra.mxu0 0.0
    %115 = vmatprep.subr.mxu0 0.0
    %116 = vmatpush1.msra.mxu0 0.0
    %117 = vmatprep.subr.mxu0 0.0
    %118 = vmatpush1.msra.mxu0 0.0
    %119 = vmatprep.subr.mxu0 0.0
    %120 = vmatpush1.msra.mxu0 0.0
    %121 = vmatprep.subr.mxu0 0.0
    %122 = vmatpush1.msra.mxu0 0.0
    %123 = vmatprep.subr.mxu0 0.0
    %124 = vmatpush1.msra.mxu0 0.0
    %125 = vmatprep.subr.mxu0 0.0
    %126 = vmatpush1.msra.mxu0 0.0
    %127 = vmatprep.subr.mxu0 0.0
    %128 = vmatpush1.msra.mxu0 0.0
    %129 = vmatprep.subr.mxu0 0.0
    %130 = vmatpush1.msra.mxu0 0.0
    %131 = vmatprep.subr.mxu0 0.0
    %132 = vmatpush1.msra.mxu0 0.0
    %133 = vmatprep.subr.mxu0 0.0
    %134 = vmatpush1.msra.mxu0 0.0
    %135 = vmatprep.subr.mxu0 0.0
    %136 = vmatpush1.msra.mxu0 %v98
    %137 = vmatprep.subr.mxu0 0.0
    %138 = vmatpush1.msra.mxu0 %v97
    %139 = vmatprep.subr.mxu0 0.0
    %140 = vmatpush2.msra.mxu0 0.0
    %141 = vmatprep.subr.mxu0 0.0
    %142 = vmatpush2.msra.mxu0 0.0
    %143 = vmatprep.subr.mxu0 0.0
    %144 = vmatpush2.msra.mxu0 0.0
    %145 = vmatprep.subr.mxu0 0.0
    %146 = vmatpush2.msra.mxu0 0.0
    %147 = vmatprep.subr.mxu0 0.0
    %148 = vmatpush2.msra.mxu0 0.0
    %149 = vmatprep.subr.mxu0 0.0
    %150 = vmatpush2.msra.mxu0 0.0
    %151 = vmatprep.subr.mxu0 0.0
    %152 = vmatpush2.msra.mxu0 0.0
    %153 = vmatprep.subr.mxu0 0.0
    %154 = vmatpush2.msra.mxu0 0.0
    %155 = vmatprep.subr.mxu0 0.0
    %156 = vmatpush2.msra.mxu0 0.0
    %157 = vmatprep.subr.mxu0 0.0
    %158 = vmatpush2.msra.mxu0 0.0
    %159 = vmatprep.subr.mxu0 0.0
    %160 = vmatpush2.msra.mxu0 0.0
    %161 = vmatprep.subr.mxu0 0.0
    %162 = vmatpush2.msra.mxu0 0.0
    %163 = vmatprep.subr.mxu0 0.0
    %164 = vmatpush2.msra.mxu0 0.0
    %165 = vmatprep.subr.mxu0 0.0
    %166 = vmatpush2.msra.mxu0 0.0
    %167 = vmatprep.subr.mxu0 0.0
    %168 = vmatpush2.msra.mxu0 0.0
    %169 = vmatprep.subr.mxu0 0.0
    %170 = vmatpush2.msra.mxu0 0.0
    %171 = vmatprep.mubr.f32.mxu0 0.0
    %172 = vmatmul.mubr.f32.gmra.mxu0 %v102
    %v173 = vpop.f32.mrf.mxu0
    %v174 = vadd.f32 %v99, %v173
    %v175 = vpop.f32.mrf.mxu0
    %176 = vmatprep.mubr.f32.mxu0 0.0
    %177 = vmatmul.mubr.f32.gmra.mxu0 %v105
    %v178 = vpop.f32.mrf.mxu0
    %v179 = vadd.f32 %v100, %v178
    %v180 = vpop.f32.mrf.mxu0
    %181 = vdwg.mxu0
    %v182 = vld [vmem:[#allocation5] sm:$0xff]
    %v183 = vld [vmem:[#allocation5 + $0x20] sm:$0xff]
    %v184 = vld [vmem:[#allocation5 + $0x40] sm:$0xff]
    %v185 = vld [vmem:[#allocation5 + $0x60] sm:$0xff]
    %v186 = vld [vmem:[#allocation5 + $0x80] sm:$0xff]
    %v187 = vld [vmem:[#allocation5 + $0xa0] sm:$0xff]
    %v188 = vld [vmem:[#allocation5 + $0xc0] sm:$0xff]
    %v189 = vld [vmem:[#allocation5 + $0xe0] sm:$0xff]
    %v190 = vld [vmem:[#allocation5 + $0x8] sm:$0xff]
    %v191 = vld [vmem:[#allocation5 + $0x28] sm:$0xff]
    %v192 = vld [vmem:[#allocation5 + $0x48] sm:$0xff]
    %v193 = vld [vmem:[#allocation5 + $0x68] sm:$0xff]
    %v194 = vld [vmem:[#allocation5 + $0x88] sm:$0xff]
    %v195 = vld [vmem:[#allocation5 + $0xa8] sm:$0xff]
    %v196 = vld [vmem:[#allocation5 + $0xc8] sm:$0xff]
    %v197 = vld [vmem:[#allocation5 + $0xe8] sm:$0xff]
    %v198 = vld [vmem:[#allocation5 + $0x10] sm:$0xff]
    %v199 = vld [vmem:[#allocation5 + $0x30] sm:$0xff]
    %v200 = vld [vmem:[#allocation5 + $0x50] sm:$0xff]
    %v201 = vld [vmem:[#allocation5 + $0x70] sm:$0xff]
    %v202 = vld [vmem:[#allocation5 + $0x18] sm:$0xff]
    %v203 = vld [vmem:[#allocation5 + $0x38] sm:$0xff]
    %v204 = vld [vmem:[#allocation5 + $0x58] sm:$0xff]
    %v205 = vld [vmem:[#allocation5 + $0x78] sm:$0xff]
    %v206 = vld [vmem:[#allocation5 + $0x98] sm:$0xff]
    %v207 = vld [vmem:[#allocation5 + $0xb8] sm:$0xff]
    %v208 = vld [vmem:[#allocation5 + $0xd8] sm:$0xff]
    %v209 = vld [vmem:[#allocation5 + $0xf8] sm:$0xff]
    %v210 = vld [vmem:[#allocation5 + $0x90] sm:$0xff]
    %v211 = vld [vmem:[#allocation5 + $0xb0] sm:$0xff]
    %v212 = vlaneseq
    %v213 = vshrl.u32 %v212, 7
    %v214 = vsub.s32 0, %v213
    %v215 = vrot.slane %v210, %v214
    %vm216 = vcmask 261120
    %v218 = vsel %vm216, %v174, 0
    %v221 = vsel %vm216, %v179, 0
    %223 = vmatprep.subr.mxu0 0.0
    %224 = vmatpush1.msra.mxu0 0.0
    %225 = vmatprep.subr.mxu0 0.0
    %226 = vmatpush1.msra.mxu0 0.0
    %227 = vmatprep.subr.mxu0 0.0
    %228 = vmatpush1.msra.mxu0 0.0
    %229 = vmatprep.subr.mxu0 0.0
    %230 = vmatpush1.msra.mxu0 0.0
    %231 = vmatprep.subr.mxu0 0.0
    %232 = vmatpush1.msra.mxu0 0.0
    %233 = vmatprep.subr.mxu0 0.0
    %234 = vmatpush1.msra.mxu0 0.0
    %235 = vmatprep.subr.mxu0 0.0
    %236 = vmatpush1.msra.mxu0 0.0
    %237 = vmatprep.subr.mxu0 0.0
    %238 = vmatpush1.msra.mxu0 0.0
    %239 = vmatprep.subr.mxu0 0.0
    %240 = vmatpush1.msra.mxu0 0.0
    %241 = vmatprep.subr.mxu0 0.0
    %242 = vmatpush1.msra.mxu0 0.0
    %243 = vmatprep.subr.mxu0 0.0
    %244 = vmatpush1.msra.mxu0 0.0
    %245 = vmatprep.subr.mxu0 0.0
    %246 = vmatpush1.msra.mxu0 0.0
    %247 = vmatprep.subr.mxu0 0.0
    %248 = vmatpush1.msra.mxu0 %v185
    %249 = vmatprep.subr.mxu0 0.0
    %250 = vmatpush1.msra.mxu0 %v184
    %251 = vmatprep.subr.mxu0 0.0
    %252 = vmatpush1.msra.mxu0 %v183
    %253 = vmatprep.subr.mxu0 0.0
    %254 = vmatpush1.msra.mxu0 %v182
    %255 = vmatprep.subr.mxu0 0.0
    %256 = vmatpush2.msra.mxu0 0.0
    %257 = vmatprep.subr.mxu0 0.0
    %258 = vmatpush2.msra.mxu0 0.0
    %259 = vmatprep.subr.mxu0 0.0
    %260 = vmatpush2.msra.mxu0 0.0
    %261 = vmatprep.subr.mxu0 0.0
    %262 = vmatpush2.msra.mxu0 0.0
    %263 = vmatprep.subr.mxu0 0.0
    %264 = vmatpush2.msra.mxu0 0.0
    %265 = vmatprep.subr.mxu0 0.0
    %266 = vmatpush2.msra.mxu0 0.0
    %267 = vmatprep.subr.mxu0 0.0
    %268 = vmatpush2.msra.mxu0 0.0
    %269 = vmatprep.subr.mxu0 0.0
    %270 = vmatpush2.msra.mxu0 0.0
    %271 = vmatprep.subr.mxu0 0.0
    %272 = vmatpush2.msra.mxu0 0.0
    %273 = vmatprep.subr.mxu0 0.0
    %274 = vmatpush2.msra.mxu0 0.0
    %275 = vmatprep.subr.mxu0 0.0
    %276 = vmatpush2.msra.mxu0 0.0
    %277 = vmatprep.subr.mxu0 0.0
    %278 = vmatpush2.msra.mxu0 0.0
    %279 = vmatprep.subr.mxu0 0.0
    %280 = vmatpush2.msra.mxu0 0.0
    %281 = vmatprep.subr.mxu0 0.0
    %282 = vmatpush2.msra.mxu0 0.0
    %283 = vmatprep.subr.mxu0 0.0
    %284 = vmatpush2.msra.mxu0 0.0
    %285 = vmatprep.subr.mxu0 0.0
    %286 = vmatpush2.msra.mxu0 0.0
    %287 = vmatprep.mubr.f32.mxu0 0.0
    %288 = vmatmul.mubr.f32.gmra.mxu0 %v218
    %v289 = vpop.f32.mrf.mxu0
    %v290 = vadd.f32 %v215, %v289
    %v291 = vpop.f32.mrf.mxu0
    %292 = vmatprep.mubr.f32.mxu0 0.0
    %293 = vmatmul.mubr.f32.gmra.mxu0 %v221
    %v294 = vpop.f32.mrf.mxu0
    %v295 = vadd.f32 %v215, %v294
    %v296 = vpop.f32.mrf.mxu0
    %297 = vdwg.mxu0
    %v298 = vlaneseq
    %v299 = vshrl.u32 %v298, 7
    %v300 = vsub.s32 1, %v299
    %v301 = vrot.slane %v210, %v300
    %302 = vmatprep.subr.mxu0 0.0
    %303 = vmatpush1.msra.mxu0 0.0
    %304 = vmatprep.subr.mxu0 0.0
    %305 = vmatpush1.msra.mxu0 0.0
    %306 = vmatprep.subr.mxu0 0.0
    %307 = vmatpush1.msra.mxu0 0.0
    %308 = vmatprep.subr.mxu0 0.0
    %309 = vmatpush1.msra.mxu0 0.0
    %310 = vmatprep.subr.mxu0 0.0
    %311 = vmatpush1.msra.mxu0 0.0
    %312 = vmatprep.subr.mxu0 0.0
    %313 = vmatpush1.msra.mxu0 0.0
    %314 = vmatprep.subr.mxu0 0.0
    %315 = vmatpush1.msra.mxu0 0.0
    %316 = vmatprep.subr.mxu0 0.0
    %317 = vmatpush1.msra.mxu0 0.0
    %318 = vmatprep.subr.mxu0 0.0
    %319 = vmatpush1.msra.mxu0 0.0
    %320 = vmatprep.subr.mxu0 0.0
    %321 = vmatpush1.msra.mxu0 0.0
    %322 = vmatprep.subr.mxu0 0.0
    %323 = vmatpush1.msra.mxu0 0.0
    %324 = vmatprep.subr.mxu0 0.0
    %325 = vmatpush1.msra.mxu0 0.0
    %326 = vmatprep.subr.mxu0 0.0
    %327 = vmatpush1.msra.mxu0 %v189
    %328 = vmatprep.subr.mxu0 0.0
    %329 = vmatpush1.msra.mxu0 %v188
    %330 = vmatprep.subr.mxu0 0.0
    %331 = vmatpush1.msra.mxu0 %v187
    %332 = vmatprep.subr.mxu0 0.0
    %333 = vmatpush1.msra.mxu0 %v186
    %334 = vmatprep.subr.mxu0 0.0
    %335 = vmatpush2.msra.mxu0 0.0
    %336 = vmatprep.subr.mxu0 0.0
    %337 = vmatpush2.msra.mxu0 0.0
    %338 = vmatprep.subr.mxu0 0.0
    %339 = vmatpush2.msra.mxu0 0.0
    %340 = vmatprep.subr.mxu0 0.0
    %341 = vmatpush2.msra.mxu0 0.0
    %342 = vmatprep.subr.mxu0 0.0
    %343 = vmatpush2.msra.mxu0 0.0
    %344 = vmatprep.subr.mxu0 0.0
    %345 = vmatpush2.msra.mxu0 0.0
    %346 = vmatprep.subr.mxu0 0.0
    %347 = vmatpush2.msra.mxu0 0.0
    %348 = vmatprep.subr.mxu0 0.0
    %349 = vmatpush2.msra.mxu0 0.0
    %350 = vmatprep.subr.mxu0 0.0
    %351 = vmatpush2.msra.mxu0 0.0
    %352 = vmatprep.subr.mxu0 0.0
    %353 = vmatpush2.msra.mxu0 0.0
    %354 = vmatprep.subr.mxu0 0.0
    %355 = vmatpush2.msra.mxu0 0.0
    %356 = vmatprep.subr.mxu0 0.0
    %357 = vmatpush2.msra.mxu0 0.0
    %358 = vmatprep.subr.mxu0 0.0
    %359 = vmatpush2.msra.mxu0 0.0
    %360 = vmatprep.subr.mxu0 0.0
    %361 = vmatpush2.msra.mxu0 0.0
    %362 = vmatprep.subr.mxu0 0.0
    %363 = vmatpush2.msra.mxu0 0.0
    %364 = vmatprep.subr.mxu0 0.0
    %365 = vmatpush2.msra.mxu0 0.0
    %366 = vmatprep.mubr.f32.mxu0 0.0
    %367 = vmatmul.mubr.f32.gmra.mxu0 %v218
    %v368 = vpop.f32.mrf.mxu0
    %v369 = vadd.f32 %v301, %v368
    %v370 = vpop.f32.mrf.mxu0
    %371 = vmatprep.mubr.f32.mxu0 0.0
    %372 = vmatmul.mubr.f32.gmra.mxu0 %v221
    %v373 = vpop.f32.mrf.mxu0
    %v374 = vadd.f32 %v301, %v373
    %v375 = vpop.f32.mrf.mxu0
    %376 = vdwg.mxu0
    %v377 = vlaneseq
    %v378 = vshrl.u32 %v377, 7
    %v379 = vsub.s32 2, %v378
    %v380 = vrot.slane %v210, %v379
    %381 = vmatprep.subr.mxu0 0.0
    %382 = vmatpush1.msra.mxu0 0.0
    %383 = vmatprep.subr.mxu0 0.0
    %384 = vmatpush1.msra.mxu0 0.0
    %385 = vmatprep.subr.mxu0 0.0
    %386 = vmatpush1.msra.mxu0 0.0
    %387 = vmatprep.subr.mxu0 0.0
    %388 = vmatpush1.msra.mxu0 0.0
    %389 = vmatprep.subr.mxu0 0.0
    %390 = vmatpush1.msra.mxu0 0.0
    %391 = vmatprep.subr.mxu0 0.0
    %392 = vmatpush1.msra.mxu0 0.0
    %393 = vmatprep.subr.mxu0 0.0
    %394 = vmatpush1.msra.mxu0 0.0
    %395 = vmatprep.subr.mxu0 0.0
    %396 = vmatpush1.msra.mxu0 0.0
    %397 = vmatprep.subr.mxu0 0.0
    %398 = vmatpush1.msra.mxu0 0.0
    %399 = vmatprep.subr.mxu0 0.0
    %400 = vmatpush1.msra.mxu0 0.0
    %401 = vmatprep.subr.mxu0 0.0
    %402 = vmatpush1.msra.mxu0 0.0
    %403 = vmatprep.subr.mxu0 0.0
    %404 = vmatpush1.msra.mxu0 0.0
    %405 = vmatprep.subr.mxu0 0.0
    %406 = vmatpush1.msra.mxu0 %v193
    %407 = vmatprep.subr.mxu0 0.0
    %408 = vmatpush1.msra.mxu0 %v192
    %409 = vmatprep.subr.mxu0 0.0
    %410 = vmatpush1.msra.mxu0 %v191
    %411 = vmatprep.subr.mxu0 0.0
    %412 = vmatpush1.msra.mxu0 %v190
    %413 = vmatprep.subr.mxu0 0.0
    %414 = vmatpush2.msra.mxu0 0.0
    %415 = vmatprep.subr.mxu0 0.0
    %416 = vmatpush2.msra.mxu0 0.0
    %417 = vmatprep.subr.mxu0 0.0
    %418 = vmatpush2.msra.mxu0 0.0
    %419 = vmatprep.subr.mxu0 0.0
    %420 = vmatpush2.msra.mxu0 0.0
    %421 = vmatprep.subr.mxu0 0.0
    %422 = vmatpush2.msra.mxu0 0.0
    %423 = vmatprep.subr.mxu0 0.0
    %424 = vmatpush2.msra.mxu0 0.0
    %425 = vmatprep.subr.mxu0 0.0
    %426 = vmatpush2.msra.mxu0 0.0
    %427 = vmatprep.subr.mxu0 0.0
    %428 = vmatpush2.msra.mxu0 0.0
    %429 = vmatprep.subr.mxu0 0.0
    %430 = vmatpush2.msra.mxu0 0.0
    %431 = vmatprep.subr.mxu0 0.0
    %432 = vmatpush2.msra.mxu0 0.0
    %433 = vmatprep.subr.mxu0 0.0
    %434 = vmatpush2.msra.mxu0 0.0
    %435 = vmatprep.subr.mxu0 0.0
    %436 = vmatpush2.msra.mxu0 0.0
    %437 = vmatprep.subr.mxu0 0.0
    %438 = vmatpush2.msra.mxu0 0.0
    %439 = vmatprep.subr.mxu0 0.0
    %440 = vmatpush2.msra.mxu0 0.0
    %441 = vmatprep.subr.mxu0 0.0
    %442 = vmatpush2.msra.mxu0 0.0
    %443 = vmatprep.subr.mxu0 0.0
    %444 = vmatpush2.msra.mxu0 0.0
    %445 = vmatprep.mubr.f32.mxu0 0.0
    %446 = vmatmul.mubr.f32.gmra.mxu0 %v218
    %v447 = vpop.f32.mrf.mxu0
    %v448 = vadd.f32 %v380, %v447
    %v449 = vpop.f32.mrf.mxu0
    %450 = vmatprep.mubr.f32.mxu0 0.0
    %451 = vmatmul.mubr.f32.gmra.mxu0 %v221
    %v452 = vpop.f32.mrf.mxu0
    %v453 = vadd.f32 %v380, %v452
    %v454 = vpop.f32.mrf.mxu0
    %455 = vdwg.mxu0
    %458 = vrot.lane.b32.xlu0 %v290, 120
    %v459 = vpop.permute.xlu0 %458
    %460 = vrot.lane.b32.xlu0 %v295, 120
    %v461 = vpop.permute.xlu0 %460
    %462 = vrot.lane.b32.xlu0 %v290, 112
    %v463 = vpop.permute.xlu0 %462
    %464 = vrot.lane.b32.xlu0 %v295, 112
    %v465 = vpop.permute.xlu0 %464
    %466 = vrot.lane.b32.xlu0 %v290, 104
    %v467 = vpop.permute.xlu0 %466
    %468 = vrot.lane.b32.xlu0 %v295, 104
    %v469 = vpop.permute.xlu0 %468
    %472 = vrot.lane.b32.xlu0 %v369, 120
    %v473 = vpop.permute.xlu0 %472
    %474 = vrot.lane.b32.xlu0 %v374, 120
    %v475 = vpop.permute.xlu0 %474
    %476 = vrot.lane.b32.xlu0 %v369, 112
    %v477 = vpop.permute.xlu0 %476
    %478 = vrot.lane.b32.xlu0 %v374, 112
    %v479 = vpop.permute.xlu0 %478
    %480 = vrot.lane.b32.xlu0 %v369, 104
    %v481 = vpop.permute.xlu0 %480
    %482 = vrot.lane.b32.xlu0 %v374, 104
    %v483 = vpop.permute.xlu0 %482
    %486 = vrot.lane.b32.xlu0 %v448, 120
    %v487 = vpop.permute.xlu0 %486
    %488 = vrot.lane.b32.xlu0 %v453, 120
    %v489 = vpop.permute.xlu0 %488
    %492 = vrot.lane.b32.xlu0 %v448, 112
    %v493 = vpop.permute.xlu0 %492
    %494 = vrot.lane.b32.xlu0 %v453, 112
    %v495 = vpop.permute.xlu0 %494
    %498 = vrot.lane.b32.xlu0 %v448, 104
    %v499 = vpop.permute.xlu0 %498
    %500 = vrot.lane.b32.xlu0 %v453, 104
    %v501 = vpop.permute.xlu0 %500
    %vm504 = vcmask 64512
    %v505 = vsel %vm504, %v290, 0
    %v507 = vsel %vm504, %v369, 0
    %509 = vmatprep.subr.mxu0 0.0
    %510 = vmatpush1.xpose.msra.mxu0 0.0
    %511 = vmatprep.subr.mxu0 0.0
    %512 = vmatpush1.xpose.msra.mxu0 0.0
    %513 = vmatprep.subr.mxu0 0.0
    %514 = vmatpush1.xpose.msra.mxu0 0.0
    %515 = vmatprep.subr.mxu0 0.0
    %516 = vmatpush1.xpose.msra.mxu0 0.0
    %517 = vmatprep.subr.mxu0 0.0
    %518 = vmatpush1.xpose.msra.mxu0 0.0
    %519 = vmatprep.subr.mxu0 0.0
    %520 = vmatpush1.xpose.msra.mxu0 0.0
    %521 = vmatprep.subr.mxu0 0.0
    %522 = vmatpush1.xpose.msra.mxu0 0.0
    %523 = vmatprep.subr.mxu0 0.0
    %524 = vmatpush1.xpose.msra.mxu0 0.0
    %525 = vmatprep.subr.mxu0 0.0
    %526 = vmatpush1.xpose.msra.mxu0 0.0
    %527 = vmatprep.subr.mxu0 0.0
    %528 = vmatpush1.xpose.msra.mxu0 0.0
    %529 = vmatprep.subr.mxu0 0.0
    %530 = vmatpush1.xpose.msra.mxu0 0.0
    %531 = vmatprep.subr.mxu0 0.0
    %532 = vmatpush1.xpose.msra.mxu0 0.0
    %533 = vmatprep.subr.mxu0 0.0
    %534 = vmatpush1.xpose.msra.mxu0 0.0
    %535 = vmatprep.subr.mxu0 0.0
    %536 = vmatpush1.xpose.msra.mxu0 0.0
    %537 = vmatprep.subr.mxu0 0.0
    %538 = vmatpush1.xpose.msra.mxu0 0.0
    %539 = vmatprep.subr.mxu0 0.0
    %540 = vmatpush1.xpose.msra.mxu0 %v507
    %541 = vmatprep.subr.mxu0 0.0
    %542 = vmatpush2.xpose.msra.mxu0 0.0
    %543 = vmatprep.subr.mxu0 0.0
    %544 = vmatpush2.xpose.msra.mxu0 0.0
    %545 = vmatprep.subr.mxu0 0.0
    %546 = vmatpush2.xpose.msra.mxu0 0.0
    %547 = vmatprep.subr.mxu0 0.0
    %548 = vmatpush2.xpose.msra.mxu0 0.0
    %549 = vmatprep.subr.mxu0 0.0
    %550 = vmatpush2.xpose.msra.mxu0 0.0
    %551 = vmatprep.subr.mxu0 0.0
    %552 = vmatpush2.xpose.msra.mxu0 0.0
    %553 = vmatprep.subr.mxu0 0.0
    %554 = vmatpush2.xpose.msra.mxu0 0.0
    %555 = vmatprep.subr.mxu0 0.0
    %556 = vmatpush2.xpose.msra.mxu0 0.0
    %557 = vmatprep.subr.mxu0 0.0
    %558 = vmatpush2.xpose.msra.mxu0 0.0
    %559 = vmatprep.subr.mxu0 0.0
    %560 = vmatpush2.xpose.msra.mxu0 0.0
    %561 = vmatprep.subr.mxu0 0.0
    %562 = vmatpush2.xpose.msra.mxu0 0.0
    %563 = vmatprep.subr.mxu0 0.0
    %564 = vmatpush2.xpose.msra.mxu0 0.0
    %565 = vmatprep.subr.mxu0 0.0
    %566 = vmatpush2.xpose.msra.mxu0 0.0
    %567 = vmatprep.subr.mxu0 0.0
    %568 = vmatpush2.xpose.msra.mxu0 0.0
    %569 = vmatprep.subr.mxu0 0.0
    %570 = vmatpush2.xpose.msra.mxu0 0.0
    %571 = vmatprep.subr.mxu0 0.0
    %572 = vmatpush2.xpose.msra.mxu0 0.0
    %573 = vmatprep.mubr.f32.mxu0 0.0
    %574 = vmatmul.mubr.f32.gmra.mxu0 %v505
    %v575 = vpop.f32.mrf.mxu0
    %v576 = vadd.f32 0.0, %v575
    %v577 = vpop.f32.mrf.mxu0
    %578 = vdwg.mxu0
    %v579 = vsel %vm504, %v295, 0
    %v581 = vsel %vm504, %v374, 0
    %583 = vmatprep.subr.mxu0 0.0
    %584 = vmatpush1.xpose.msra.mxu0 0.0
    %585 = vmatprep.subr.mxu0 0.0
    %586 = vmatpush1.xpose.msra.mxu0 0.0
    %587 = vmatprep.subr.mxu0 0.0
    %588 = vmatpush1.xpose.msra.mxu0 0.0
    %589 = vmatprep.subr.mxu0 0.0
    %590 = vmatpush1.xpose.msra.mxu0 0.0
    %591 = vmatprep.subr.mxu0 0.0
    %592 = vmatpush1.xpose.msra.mxu0 0.0
    %593 = vmatprep.subr.mxu0 0.0
    %594 = vmatpush1.xpose.msra.mxu0 0.0
    %595 = vmatprep.subr.mxu0 0.0
    %596 = vmatpush1.xpose.msra.mxu0 0.0
    %597 = vmatprep.subr.mxu0 0.0
    %598 = vmatpush1.xpose.msra.mxu0 0.0
    %599 = vmatprep.subr.mxu0 0.0
    %600 = vmatpush1.xpose.msra.mxu0 0.0
    %601 = vmatprep.subr.mxu0 0.0
    %602 = vmatpush1.xpose.msra.mxu0 0.0
    %603 = vmatprep.subr.mxu0 0.0
    %604 = vmatpush1.xpose.msra.mxu0 0.0
    %605 = vmatprep.subr.mxu0 0.0
    %606 = vmatpush1.xpose.msra.mxu0 0.0
    %607 = vmatprep.subr.mxu0 0.0
    %608 = vmatpush1.xpose.msra.mxu0 0.0
    %609 = vmatprep.subr.mxu0 0.0
    %610 = vmatpush1.xpose.msra.mxu0 0.0
    %611 = vmatprep.subr.mxu0 0.0
    %612 = vmatpush1.xpose.msra.mxu0 0.0
    %613 = vmatprep.subr.mxu0 0.0
    %614 = vmatpush1.xpose.msra.mxu0 %v581
    %615 = vmatprep.subr.mxu0 0.0
    %616 = vmatpush2.xpose.msra.mxu0 0.0
    %617 = vmatprep.subr.mxu0 0.0
    %618 = vmatpush2.xpose.msra.mxu0 0.0
    %619 = vmatprep.subr.mxu0 0.0
    %620 = vmatpush2.xpose.msra.mxu0 0.0
    %621 = vmatprep.subr.mxu0 0.0
    %622 = vmatpush2.xpose.msra.mxu0 0.0
    %623 = vmatprep.subr.mxu0 0.0
    %624 = vmatpush2.xpose.msra.mxu0 0.0
    %625 = vmatprep.subr.mxu0 0.0
    %626 = vmatpush2.xpose.msra.mxu0 0.0
    %627 = vmatprep.subr.mxu0 0.0
    %628 = vmatpush2.xpose.msra.mxu0 0.0
    %629 = vmatprep.subr.mxu0 0.0
    %630 = vmatpush2.xpose.msra.mxu0 0.0
    %631 = vmatprep.subr.mxu0 0.0
    %632 = vmatpush2.xpose.msra.mxu0 0.0
    %633 = vmatprep.subr.mxu0 0.0
    %634 = vmatpush2.xpose.msra.mxu0 0.0
    %635 = vmatprep.subr.mxu0 0.0
    %636 = vmatpush2.xpose.msra.mxu0 0.0
    %637 = vmatprep.subr.mxu0 0.0
    %638 = vmatpush2.xpose.msra.mxu0 0.0
    %639 = vmatprep.subr.mxu0 0.0
    %640 = vmatpush2.xpose.msra.mxu0 0.0
    %641 = vmatprep.subr.mxu0 0.0
    %642 = vmatpush2.xpose.msra.mxu0 0.0
    %643 = vmatprep.subr.mxu0 0.0
    %644 = vmatpush2.xpose.msra.mxu0 0.0
    %645 = vmatprep.subr.mxu0 0.0
    %646 = vmatpush2.xpose.msra.mxu0 0.0
    %647 = vmatprep.mubr.f32.mxu0 0.0
    %648 = vmatmul.mubr.f32.gmra.mxu0 %v579
    %v649 = vpop.f32.mrf.mxu0
    %v650 = vadd.f32 0.0, %v649
    %v651 = vpop.f32.mrf.mxu0
    %652 = vdwg.mxu0
    %v653 = vsel %vm504, %v459, 0
    %v655 = vsel %vm504, %v473, 0
    %657 = vmatprep.subr.mxu0 0.0
    %658 = vmatpush1.xpose.msra.mxu0 0.0
    %659 = vmatprep.subr.mxu0 0.0
    %660 = vmatpush1.xpose.msra.mxu0 0.0
    %661 = vmatprep.subr.mxu0 0.0
    %662 = vmatpush1.xpose.msra.mxu0 0.0
    %663 = vmatprep.subr.mxu0 0.0
    %664 = vmatpush1.xpose.msra.mxu0 0.0
    %665 = vmatprep.subr.mxu0 0.0
    %666 = vmatpush1.xpose.msra.mxu0 0.0
    %667 = vmatprep.subr.mxu0 0.0
    %668 = vmatpush1.xpose.msra.mxu0 0.0
    %669 = vmatprep.subr.mxu0 0.0
    %670 = vmatpush1.xpose.msra.mxu0 0.0
    %671 = vmatprep.subr.mxu0 0.0
    %672 = vmatpush1.xpose.msra.mxu0 0.0
    %673 = vmatprep.subr.mxu0 0.0
    %674 = vmatpush1.xpose.msra.mxu0 0.0
    %675 = vmatprep.subr.mxu0 0.0
    %676 = vmatpush1.xpose.msra.mxu0 0.0
    %677 = vmatprep.subr.mxu0 0.0
    %678 = vmatpush1.xpose.msra.mxu0 0.0
    %679 = vmatprep.subr.mxu0 0.0
    %680 = vmatpush1.xpose.msra.mxu0 0.0
    %681 = vmatprep.subr.mxu0 0.0
    %682 = vmatpush1.xpose.msra.mxu0 0.0
    %683 = vmatprep.subr.mxu0 0.0
    %684 = vmatpush1.xpose.msra.mxu0 0.0
    %685 = vmatprep.subr.mxu0 0.0
    %686 = vmatpush1.xpose.msra.mxu0 0.0
    %687 = vmatprep.subr.mxu0 0.0
    %688 = vmatpush1.xpose.msra.mxu0 %v655
    %689 = vmatprep.subr.mxu0 0.0
    %690 = vmatpush2.xpose.msra.mxu0 0.0
    %691 = vmatprep.subr.mxu0 0.0
    %692 = vmatpush2.xpose.msra.mxu0 0.0
    %693 = vmatprep.subr.mxu0 0.0
    %694 = vmatpush2.xpose.msra.mxu0 0.0
    %695 = vmatprep.subr.mxu0 0.0
    %696 = vmatpush2.xpose.msra.mxu0 0.0
    %697 = vmatprep.subr.mxu0 0.0
    %698 = vmatpush2.xpose.msra.mxu0 0.0
    %699 = vmatprep.subr.mxu0 0.0
    %700 = vmatpush2.xpose.msra.mxu0 0.0
    %701 = vmatprep.subr.mxu0 0.0
    %702 = vmatpush2.xpose.msra.mxu0 0.0
    %703 = vmatprep.subr.mxu0 0.0
    %704 = vmatpush2.xpose.msra.mxu0 0.0
    %705 = vmatprep.subr.mxu0 0.0
    %706 = vmatpush2.xpose.msra.mxu0 0.0
    %707 = vmatprep.subr.mxu0 0.0
    %708 = vmatpush2.xpose.msra.mxu0 0.0
    %709 = vmatprep.subr.mxu0 0.0
    %710 = vmatpush2.xpose.msra.mxu0 0.0
    %711 = vmatprep.subr.mxu0 0.0
    %712 = vmatpush2.xpose.msra.mxu0 0.0
    %713 = vmatprep.subr.mxu0 0.0
    %714 = vmatpush2.xpose.msra.mxu0 0.0
    %715 = vmatprep.subr.mxu0 0.0
    %716 = vmatpush2.xpose.msra.mxu0 0.0
    %717 = vmatprep.subr.mxu0 0.0
    %718 = vmatpush2.xpose.msra.mxu0 0.0
    %719 = vmatprep.subr.mxu0 0.0
    %720 = vmatpush2.xpose.msra.mxu0 0.0
    %721 = vmatprep.mubr.f32.mxu0 0.0
    %722 = vmatmul.mubr.f32.gmra.mxu0 %v653
    %v723 = vpop.f32.mrf.mxu0
    %v724 = vadd.f32 0.0, %v723
    %v725 = vpop.f32.mrf.mxu0
    %726 = vdwg.mxu0
    %v727 = vsel %vm504, %v461, 0
    %v729 = vsel %vm504, %v475, 0
    %731 = vmatprep.subr.mxu0 0.0
    %732 = vmatpush1.xpose.msra.mxu0 0.0
    %733 = vmatprep.subr.mxu0 0.0
    %734 = vmatpush1.xpose.msra.mxu0 0.0
    %735 = vmatprep.subr.mxu0 0.0
    %736 = vmatpush1.xpose.msra.mxu0 0.0
    %737 = vmatprep.subr.mxu0 0.0
    %738 = vmatpush1.xpose.msra.mxu0 0.0
    %739 = vmatprep.subr.mxu0 0.0
    %740 = vmatpush1.xpose.msra.mxu0 0.0
    %741 = vmatprep.subr.mxu0 0.0
    %742 = vmatpush1.xpose.msra.mxu0 0.0
    %743 = vmatprep.subr.mxu0 0.0
    %744 = vmatpush1.xpose.msra.mxu0 0.0
    %745 = vmatprep.subr.mxu0 0.0
    %746 = vmatpush1.xpose.msra.mxu0 0.0
    %747 = vmatprep.subr.mxu0 0.0
    %748 = vmatpush1.xpose.msra.mxu0 0.0
    %749 = vmatprep.subr.mxu0 0.0
    %750 = vmatpush1.xpose.msra.mxu0 0.0
    %751 = vmatprep.subr.mxu0 0.0
    %752 = vmatpush1.xpose.msra.mxu0 0.0
    %753 = vmatprep.subr.mxu0 0.0
    %754 = vmatpush1.xpose.msra.mxu0 0.0
    %755 = vmatprep.subr.mxu0 0.0
    %756 = vmatpush1.xpose.msra.mxu0 0.0
    %757 = vmatprep.subr.mxu0 0.0
    %758 = vmatpush1.xpose.msra.mxu0 0.0
    %759 = vmatprep.subr.mxu0 0.0
    %760 = vmatpush1.xpose.msra.mxu0 0.0
    %761 = vmatprep.subr.mxu0 0.0
    %762 = vmatpush1.xpose.msra.mxu0 %v729
    %763 = vmatprep.subr.mxu0 0.0
    %764 = vmatpush2.xpose.msra.mxu0 0.0
    %765 = vmatprep.subr.mxu0 0.0
    %766 = vmatpush2.xpose.msra.mxu0 0.0
    %767 = vmatprep.subr.mxu0 0.0
    %768 = vmatpush2.xpose.msra.mxu0 0.0
    %769 = vmatprep.subr.mxu0 0.0
    %770 = vmatpush2.xpose.msra.mxu0 0.0
    %771 = vmatprep.subr.mxu0 0.0
    %772 = vmatpush2.xpose.msra.mxu0 0.0
    %773 = vmatprep.subr.mxu0 0.0
    %774 = vmatpush2.xpose.msra.mxu0 0.0
    %775 = vmatprep.subr.mxu0 0.0
    %776 = vmatpush2.xpose.msra.mxu0 0.0
    %777 = vmatprep.subr.mxu0 0.0
    %778 = vmatpush2.xpose.msra.mxu0 0.0
    %779 = vmatprep.subr.mxu0 0.0
    %780 = vmatpush2.xpose.msra.mxu0 0.0
    %781 = vmatprep.subr.mxu0 0.0
    %782 = vmatpush2.xpose.msra.mxu0 0.0
    %783 = vmatprep.subr.mxu0 0.0
    %784 = vmatpush2.xpose.msra.mxu0 0.0
    %785 = vmatprep.subr.mxu0 0.0
    %786 = vmatpush2.xpose.msra.mxu0 0.0
    %787 = vmatprep.subr.mxu0 0.0
    %788 = vmatpush2.xpose.msra.mxu0 0.0
    %789 = vmatprep.subr.mxu0 0.0
    %790 = vmatpush2.xpose.msra.mxu0 0.0
    %791 = vmatprep.subr.mxu0 0.0
    %792 = vmatpush2.xpose.msra.mxu0 0.0
    %793 = vmatprep.subr.mxu0 0.0
    %794 = vmatpush2.xpose.msra.mxu0 0.0
    %795 = vmatprep.mubr.f32.mxu0 0.0
    %796 = vmatmul.mubr.f32.gmra.mxu0 %v727
    %v797 = vpop.f32.mrf.mxu0
    %v798 = vadd.f32 0.0, %v797
    %v799 = vpop.f32.mrf.mxu0
    %800 = vdwg.mxu0
    %v801 = vsel %vm504, %v463, 0
    %v803 = vsel %vm504, %v477, 0
    %805 = vmatprep.subr.mxu0 0.0
    %806 = vmatpush1.xpose.msra.mxu0 0.0
    %807 = vmatprep.subr.mxu0 0.0
    %808 = vmatpush1.xpose.msra.mxu0 0.0
    %809 = vmatprep.subr.mxu0 0.0
    %810 = vmatpush1.xpose.msra.mxu0 0.0
    %811 = vmatprep.subr.mxu0 0.0
    %812 = vmatpush1.xpose.msra.mxu0 0.0
    %813 = vmatprep.subr.mxu0 0.0
    %814 = vmatpush1.xpose.msra.mxu0 0.0
    %815 = vmatprep.subr.mxu0 0.0
    %816 = vmatpush1.xpose.msra.mxu0 0.0
    %817 = vmatprep.subr.mxu0 0.0
    %818 = vmatpush1.xpose.msra.mxu0 0.0
    %819 = vmatprep.subr.mxu0 0.0
    %820 = vmatpush1.xpose.msra.mxu0 0.0
    %821 = vmatprep.subr.mxu0 0.0
    %822 = vmatpush1.xpose.msra.mxu0 0.0
    %823 = vmatprep.subr.mxu0 0.0
    %824 = vmatpush1.xpose.msra.mxu0 0.0
    %825 = vmatprep.subr.mxu0 0.0
    %826 = vmatpush1.xpose.msra.mxu0 0.0
    %827 = vmatprep.subr.mxu0 0.0
    %828 = vmatpush1.xpose.msra.mxu0 0.0
    %829 = vmatprep.subr.mxu0 0.0
    %830 = vmatpush1.xpose.msra.mxu0 0.0
    %831 = vmatprep.subr.mxu0 0.0
    %832 = vmatpush1.xpose.msra.mxu0 0.0
    %833 = vmatprep.subr.mxu0 0.0
    %834 = vmatpush1.xpose.msra.mxu0 0.0
    %835 = vmatprep.subr.mxu0 0.0
    %836 = vmatpush1.xpose.msra.mxu0 %v803
    %837 = vmatprep.subr.mxu0 0.0
    %838 = vmatpush2.xpose.msra.mxu0 0.0
    %839 = vmatprep.subr.mxu0 0.0
    %840 = vmatpush2.xpose.msra.mxu0 0.0
    %841 = vmatprep.subr.mxu0 0.0
    %842 = vmatpush2.xpose.msra.mxu0 0.0
    %843 = vmatprep.subr.mxu0 0.0
    %844 = vmatpush2.xpose.msra.mxu0 0.0
    %845 = vmatprep.subr.mxu0 0.0
    %846 = vmatpush2.xpose.msra.mxu0 0.0
    %847 = vmatprep.subr.mxu0 0.0
    %848 = vmatpush2.xpose.msra.mxu0 0.0
    %849 = vmatprep.subr.mxu0 0.0
    %850 = vmatpush2.xpose.msra.mxu0 0.0
    %851 = vmatprep.subr.mxu0 0.0
    %852 = vmatpush2.xpose.msra.mxu0 0.0
    %853 = vmatprep.subr.mxu0 0.0
    %854 = vmatpush2.xpose.msra.mxu0 0.0
    %855 = vmatprep.subr.mxu0 0.0
    %856 = vmatpush2.xpose.msra.mxu0 0.0
    %857 = vmatprep.subr.mxu0 0.0
    %858 = vmatpush2.xpose.msra.mxu0 0.0
    %859 = vmatprep.subr.mxu0 0.0
    %860 = vmatpush2.xpose.msra.mxu0 0.0
    %861 = vmatprep.subr.mxu0 0.0
    %862 = vmatpush2.xpose.msra.mxu0 0.0
    %863 = vmatprep.subr.mxu0 0.0
    %864 = vmatpush2.xpose.msra.mxu0 0.0
    %865 = vmatprep.subr.mxu0 0.0
    %866 = vmatpush2.xpose.msra.mxu0 0.0
    %867 = vmatprep.subr.mxu0 0.0
    %868 = vmatpush2.xpose.msra.mxu0 0.0
    %869 = vmatprep.mubr.f32.mxu0 0.0
    %870 = vmatmul.mubr.f32.gmra.mxu0 %v801
    %v871 = vpop.f32.mrf.mxu0
    %v872 = vadd.f32 0.0, %v871
    %v873 = vpop.f32.mrf.mxu0
    %874 = vdwg.mxu0
    %v875 = vsel %vm504, %v465, 0
    %v877 = vsel %vm504, %v479, 0
    %879 = vmatprep.subr.mxu0 0.0
    %880 = vmatpush1.xpose.msra.mxu0 0.0
    %881 = vmatprep.subr.mxu0 0.0
    %882 = vmatpush1.xpose.msra.mxu0 0.0
    %883 = vmatprep.subr.mxu0 0.0
    %884 = vmatpush1.xpose.msra.mxu0 0.0
    %885 = vmatprep.subr.mxu0 0.0
    %886 = vmatpush1.xpose.msra.mxu0 0.0
    %887 = vmatprep.subr.mxu0 0.0
    %888 = vmatpush1.xpose.msra.mxu0 0.0
    %889 = vmatprep.subr.mxu0 0.0
    %890 = vmatpush1.xpose.msra.mxu0 0.0
    %891 = vmatprep.subr.mxu0 0.0
    %892 = vmatpush1.xpose.msra.mxu0 0.0
    %893 = vmatprep.subr.mxu0 0.0
    %894 = vmatpush1.xpose.msra.mxu0 0.0
    %895 = vmatprep.subr.mxu0 0.0
    %896 = vmatpush1.xpose.msra.mxu0 0.0
    %897 = vmatprep.subr.mxu0 0.0
    %898 = vmatpush1.xpose.msra.mxu0 0.0
    %899 = vmatprep.subr.mxu0 0.0
    %900 = vmatpush1.xpose.msra.mxu0 0.0
    %901 = vmatprep.subr.mxu0 0.0
    %902 = vmatpush1.xpose.msra.mxu0 0.0
    %903 = vmatprep.subr.mxu0 0.0
    %904 = vmatpush1.xpose.msra.mxu0 0.0
    %905 = vmatprep.subr.mxu0 0.0
    %906 = vmatpush1.xpose.msra.mxu0 0.0
    %907 = vmatprep.subr.mxu0 0.0
    %908 = vmatpush1.xpose.msra.mxu0 0.0
    %909 = vmatprep.subr.mxu0 0.0
    %910 = vmatpush1.xpose.msra.mxu0 %v877
    %911 = vmatprep.subr.mxu0 0.0
    %912 = vmatpush2.xpose.msra.mxu0 0.0
    %913 = vmatprep.subr.mxu0 0.0
    %914 = vmatpush2.xpose.msra.mxu0 0.0
    %915 = vmatprep.subr.mxu0 0.0
    %916 = vmatpush2.xpose.msra.mxu0 0.0
    %917 = vmatprep.subr.mxu0 0.0
    %918 = vmatpush2.xpose.msra.mxu0 0.0
    %919 = vmatprep.subr.mxu0 0.0
    %920 = vmatpush2.xpose.msra.mxu0 0.0
    %921 = vmatprep.subr.mxu0 0.0
    %922 = vmatpush2.xpose.msra.mxu0 0.0
    %923 = vmatprep.subr.mxu0 0.0
    %924 = vmatpush2.xpose.msra.mxu0 0.0
    %925 = vmatprep.subr.mxu0 0.0
    %926 = vmatpush2.xpose.msra.mxu0 0.0
    %927 = vmatprep.subr.mxu0 0.0
    %928 = vmatpush2.xpose.msra.mxu0 0.0
    %929 = vmatprep.subr.mxu0 0.0
    %930 = vmatpush2.xpose.msra.mxu0 0.0
    %931 = vmatprep.subr.mxu0 0.0
    %932 = vmatpush2.xpose.msra.mxu0 0.0
    %933 = vmatprep.subr.mxu0 0.0
    %934 = vmatpush2.xpose.msra.mxu0 0.0
    %935 = vmatprep.subr.mxu0 0.0
    %936 = vmatpush2.xpose.msra.mxu0 0.0
    %937 = vmatprep.subr.mxu0 0.0
    %938 = vmatpush2.xpose.msra.mxu0 0.0
    %939 = vmatprep.subr.mxu0 0.0
    %940 = vmatpush2.xpose.msra.mxu0 0.0
    %941 = vmatprep.subr.mxu0 0.0
    %942 = vmatpush2.xpose.msra.mxu0 0.0
    %943 = vmatprep.mubr.f32.mxu0 0.0
    %944 = vmatmul.mubr.f32.gmra.mxu0 %v875
    %v945 = vpop.f32.mrf.mxu0
    %v946 = vadd.f32 0.0, %v945
    %v947 = vpop.f32.mrf.mxu0
    %948 = vdwg.mxu0
    %v949 = vsel %vm504, %v467, 0
    %v951 = vsel %vm504, %v481, 0
    %953 = vmatprep.subr.mxu0 0.0
    %954 = vmatpush1.xpose.msra.mxu0 0.0
    %955 = vmatprep.subr.mxu0 0.0
    %956 = vmatpush1.xpose.msra.mxu0 0.0
    %957 = vmatprep.subr.mxu0 0.0
    %958 = vmatpush1.xpose.msra.mxu0 0.0
    %959 = vmatprep.subr.mxu0 0.0
    %960 = vmatpush1.xpose.msra.mxu0 0.0
    %961 = vmatprep.subr.mxu0 0.0
    %962 = vmatpush1.xpose.msra.mxu0 0.0
    %963 = vmatprep.subr.mxu0 0.0
    %964 = vmatpush1.xpose.msra.mxu0 0.0
    %965 = vmatprep.subr.mxu0 0.0
    %966 = vmatpush1.xpose.msra.mxu0 0.0
    %967 = vmatprep.subr.mxu0 0.0
    %968 = vmatpush1.xpose.msra.mxu0 0.0
    %969 = vmatprep.subr.mxu0 0.0
    %970 = vmatpush1.xpose.msra.mxu0 0.0
    %971 = vmatprep.subr.mxu0 0.0
    %972 = vmatpush1.xpose.msra.mxu0 0.0
    %973 = vmatprep.subr.mxu0 0.0
    %974 = vmatpush1.xpose.msra.mxu0 0.0
    %975 = vmatprep.subr.mxu0 0.0
    %976 = vmatpush1.xpose.msra.mxu0 0.0
    %977 = vmatprep.subr.mxu0 0.0
    %978 = vmatpush1.xpose.msra.mxu0 0.0
    %979 = vmatprep.subr.mxu0 0.0
    %980 = vmatpush1.xpose.msra.mxu0 0.0
    %981 = vmatprep.subr.mxu0 0.0
    %982 = vmatpush1.xpose.msra.mxu0 0.0
    %983 = vmatprep.subr.mxu0 0.0
    %984 = vmatpush1.xpose.msra.mxu0 %v951
    %985 = vmatprep.subr.mxu0 0.0
    %986 = vmatpush2.xpose.msra.mxu0 0.0
    %987 = vmatprep.subr.mxu0 0.0
    %988 = vmatpush2.xpose.msra.mxu0 0.0
    %989 = vmatprep.subr.mxu0 0.0
    %990 = vmatpush2.xpose.msra.mxu0 0.0
    %991 = vmatprep.subr.mxu0 0.0
    %992 = vmatpush2.xpose.msra.mxu0 0.0
    %993 = vmatprep.subr.mxu0 0.0
    %994 = vmatpush2.xpose.msra.mxu0 0.0
    %995 = vmatprep.subr.mxu0 0.0
    %996 = vmatpush2.xpose.msra.mxu0 0.0
    %997 = vmatprep.subr.mxu0 0.0
    %998 = vmatpush2.xpose.msra.mxu0 0.0
    %999 = vmatprep.subr.mxu0 0.0
    %1000 = vmatpush2.xpose.msra.mxu0 0.0
    %1001 = vmatprep.subr.mxu0 0.0
    %1002 = vmatpush2.xpose.msra.mxu0 0.0
    %1003 = vmatprep.subr.mxu0 0.0
    %1004 = vmatpush2.xpose.msra.mxu0 0.0
    %1005 = vmatprep.subr.mxu0 0.0
    %1006 = vmatpush2.xpose.msra.mxu0 0.0
    %1007 = vmatprep.subr.mxu0 0.0
    %1008 = vmatpush2.xpose.msra.mxu0 0.0
    %1009 = vmatprep.subr.mxu0 0.0
    %1010 = vmatpush2.xpose.msra.mxu0 0.0
    %1011 = vmatprep.subr.mxu0 0.0
    %1012 = vmatpush2.xpose.msra.mxu0 0.0
    %1013 = vmatprep.subr.mxu0 0.0
    %1014 = vmatpush2.xpose.msra.mxu0 0.0
    %1015 = vmatprep.subr.mxu0 0.0
    %1016 = vmatpush2.xpose.msra.mxu0 0.0
    %1017 = vmatprep.mubr.f32.mxu0 0.0
    %1018 = vmatmul.mubr.f32.gmra.mxu0 %v949
    %v1019 = vpop.f32.mrf.mxu0
    %v1020 = vadd.f32 0.0, %v1019
    %v1021 = vpop.f32.mrf.mxu0
    %1022 = vdwg.mxu0
    %v1023 = vsel %vm504, %v469, 0
    %v1025 = vsel %vm504, %v483, 0
    %1027 = vmatprep.subr.mxu0 0.0
    %1028 = vmatpush1.xpose.msra.mxu0 0.0
    %1029 = vmatprep.subr.mxu0 0.0
    %1030 = vmatpush1.xpose.msra.mxu0 0.0
    %1031 = vmatprep.subr.mxu0 0.0
    %1032 = vmatpush1.xpose.msra.mxu0 0.0
    %1033 = vmatprep.subr.mxu0 0.0
    %1034 = vmatpush1.xpose.msra.mxu0 0.0
    %1035 = vmatprep.subr.mxu0 0.0
    %1036 = vmatpush1.xpose.msra.mxu0 0.0
    %1037 = vmatprep.subr.mxu0 0.0
    %1038 = vmatpush1.xpose.msra.mxu0 0.0
    %1039 = vmatprep.subr.mxu0 0.0
    %1040 = vmatpush1.xpose.msra.mxu0 0.0
    %1041 = vmatprep.subr.mxu0 0.0
    %1042 = vmatpush1.xpose.msra.mxu0 0.0
    %1043 = vmatprep.subr.mxu0 0.0
    %1044 = vmatpush1.xpose.msra.mxu0 0.0
    %1045 = vmatprep.subr.mxu0 0.0
    %1046 = vmatpush1.xpose.msra.mxu0 0.0
    %1047 = vmatprep.subr.mxu0 0.0
    %1048 = vmatpush1.xpose.msra.mxu0 0.0
    %1049 = vmatprep.subr.mxu0 0.0
    %1050 = vmatpush1.xpose.msra.mxu0 0.0
    %1051 = vmatprep.subr.mxu0 0.0
    %1052 = vmatpush1.xpose.msra.mxu0 0.0
    %1053 = vmatprep.subr.mxu0 0.0
    %1054 = vmatpush1.xpose.msra.mxu0 0.0
    %1055 = vmatprep.subr.mxu0 0.0
    %1056 = vmatpush1.xpose.msra.mxu0 0.0
    %1057 = vmatprep.subr.mxu0 0.0
    %1058 = vmatpush1.xpose.msra.mxu0 %v1025
    %1059 = vmatprep.subr.mxu0 0.0
    %1060 = vmatpush2.xpose.msra.mxu0 0.0
    %1061 = vmatprep.subr.mxu0 0.0
    %1062 = vmatpush2.xpose.msra.mxu0 0.0
    %1063 = vmatprep.subr.mxu0 0.0
    %1064 = vmatpush2.xpose.msra.mxu0 0.0
    %1065 = vmatprep.subr.mxu0 0.0
    %1066 = vmatpush2.xpose.msra.mxu0 0.0
    %1067 = vmatprep.subr.mxu0 0.0
    %1068 = vmatpush2.xpose.msra.mxu0 0.0
    %1069 = vmatprep.subr.mxu0 0.0
    %1070 = vmatpush2.xpose.msra.mxu0 0.0
    %1071 = vmatprep.subr.mxu0 0.0
    %1072 = vmatpush2.xpose.msra.mxu0 0.0
    %1073 = vmatprep.subr.mxu0 0.0
    %1074 = vmatpush2.xpose.msra.mxu0 0.0
    %1075 = vmatprep.subr.mxu0 0.0
    %1076 = vmatpush2.xpose.msra.mxu0 0.0
    %1077 = vmatprep.subr.mxu0 0.0
    %1078 = vmatpush2.xpose.msra.mxu0 0.0
    %1079 = vmatprep.subr.mxu0 0.0
    %1080 = vmatpush2.xpose.msra.mxu0 0.0
    %1081 = vmatprep.subr.mxu0 0.0
    %1082 = vmatpush2.xpose.msra.mxu0 0.0
    %1083 = vmatprep.subr.mxu0 0.0
    %1084 = vmatpush2.xpose.msra.mxu0 0.0
    %1085 = vmatprep.subr.mxu0 0.0
    %1086 = vmatpush2.xpose.msra.mxu0 0.0
    %1087 = vmatprep.subr.mxu0 0.0
    %1088 = vmatpush2.xpose.msra.mxu0 0.0
    %1089 = vmatprep.subr.mxu0 0.0
    %1090 = vmatpush2.xpose.msra.mxu0 0.0
    %1091 = vmatprep.mubr.f32.mxu0 0.0
    %1092 = vmatmul.mubr.f32.gmra.mxu0 %v1023
    %v1093 = vpop.f32.mrf.mxu0
    %v1094 = vadd.f32 0.0, %v1093
    %v1095 = vpop.f32.mrf.mxu0
    %1096 = vdwg.mxu0
    %v1097 = vsel %vm504, %v576, -inf
    %1098 = vmax.xlane.f32.xlu0 %v1097
    %v1099 = vpop.xlane.xlu0 %1098
    %v1100 = vsel %vm504, %v650, -inf
    %1101 = vmax.xlane.f32.xlu0 %v1100
    %v1102 = vpop.xlane.xlu0 %1101
    %v1103 = vsel %vm504, %v724, -inf
    %1104 = vmax.xlane.f32.xlu0 %v1103
    %v1105 = vpop.xlane.xlu0 %1104
    %v1106 = vsel %vm504, %v798, -inf
    %1107 = vmax.xlane.f32.xlu0 %v1106
    %v1108 = vpop.xlane.xlu0 %1107
    %v1109 = vsel %vm504, %v872, -inf
    %1110 = vmax.xlane.f32.xlu0 %v1109
    %v1111 = vpop.xlane.xlu0 %1110
    %v1112 = vsel %vm504, %v946, -inf
    %1113 = vmax.xlane.f32.xlu0 %v1112
    %v1114 = vpop.xlane.xlu0 %1113
    %v1115 = vsel %vm504, %v1020, -inf
    %1116 = vmax.xlane.f32.xlu0 %v1115
    %v1117 = vpop.xlane.xlu0 %1116
    %v1118 = vsel %vm504, %v1094, -inf
    %1119 = vmax.xlane.f32.xlu0 %v1118
    %v1120 = vpop.xlane.xlu0 %1119
    %v1121 = vsub.f32 %v576, %v1099
    %v1122 = vsub.f32 %v650, %v1102
    %v1123 = vsub.f32 %v724, %v1105
    %v1124 = vsub.f32 %v798, %v1108
    %v1125 = vsub.f32 %v872, %v1111
    %v1126 = vsub.f32 %v946, %v1114
    %v1127 = vsub.f32 %v1020, %v1117
    %v1128 = vsub.f32 %v1094, %v1120
    %v1129 = vmul.f32 %v1121, 1.442695
    %v1130 = vpow.pop %v1129
    %v1131 = vmul.f32 %v1122, 1.442695
    %v1132 = vpow.pop %v1131
    %v1133 = vmul.f32 %v1123, 1.442695
    %v1134 = vpow.pop %v1133
    %v1135 = vmul.f32 %v1124, 1.442695
    %v1136 = vpow.pop %v1135
    %v1137 = vmul.f32 %v1125, 1.442695
    %v1138 = vpow.pop %v1137
    %v1139 = vmul.f32 %v1126, 1.442695
    %v1140 = vpow.pop %v1139
    %v1141 = vmul.f32 %v1127, 1.442695
    %v1142 = vpow.pop %v1141
    %v1143 = vmul.f32 %v1128, 1.442695
    %v1144 = vpow.pop %v1143
    %v1145 = vsel %vm504, %v1130, 0.0
    %1146 = vadd.xlane.f32.xlu0 %v1145
    %v1147 = vpop.xlane.xlu0 %1146
    %v1148 = vsel %vm504, %v1132, 0.0
    %1149 = vadd.xlane.f32.xlu0 %v1148
    %v1150 = vpop.xlane.xlu0 %1149
    %v1151 = vsel %vm504, %v1134, 0.0
    %1152 = vadd.xlane.f32.xlu0 %v1151
    %v1153 = vpop.xlane.xlu0 %1152
    %v1154 = vsel %vm504, %v1136, 0.0
    %1155 = vadd.xlane.f32.xlu0 %v1154
    %v1156 = vpop.xlane.xlu0 %1155
    %v1157 = vsel %vm504, %v1138, 0.0
    %1158 = vadd.xlane.f32.xlu0 %v1157
    %v1159 = vpop.xlane.xlu0 %1158
    %v1160 = vsel %vm504, %v1140, 0.0
    %1161 = vadd.xlane.f32.xlu0 %v1160
    %v1162 = vpop.xlane.xlu0 %1161
    %v1163 = vsel %vm504, %v1142, 0.0
    %1164 = vadd.xlane.f32.xlu0 %v1163
    %v1165 = vpop.xlane.xlu0 %1164
    %v1166 = vsel %vm504, %v1144, 0.0
    %1167 = vadd.xlane.f32.xlu0 %v1166
    %v1168 = vpop.xlane.xlu0 %1167
    %v1169 = vrcp.pop %v1147
    %v1170 = vrcp.pop %v1150
    %v1171 = vrcp.pop %v1153
    %v1172 = vrcp.pop %v1156
    %v1173 = vrcp.pop %v1159
    %v1174 = vrcp.pop %v1162
    %v1175 = vrcp.pop %v1165
    %v1176 = vrcp.pop %v1168
    %v1177 = vmul.f32 %v1130, %v1169
    %v1178 = vmul.f32 %v1132, %v1170
    %v1179 = vmul.f32 %v1134, %v1171
    %v1180 = vmul.f32 %v1136, %v1172
    %v1181 = vmul.f32 %v1138, %v1173
    %v1182 = vmul.f32 %v1140, %v1174
    %v1183 = vmul.f32 %v1142, %v1175
    %v1184 = vmul.f32 %v1144, %v1176
    %v1186 = vsel %vm504, %v1177, 0
    %1188 = vmatprep.subr.mxu0 0.0
    %1189 = vmatpush1.msra.mxu0 0.0
    %1190 = vmatprep.subr.mxu0 0.0
    %1191 = vmatpush1.msra.mxu0 0.0
    %1192 = vmatprep.subr.mxu0 0.0
    %1193 = vmatpush1.msra.mxu0 0.0
    %1194 = vmatprep.subr.mxu0 0.0
    %1195 = vmatpush1.msra.mxu0 0.0
    %1196 = vmatprep.subr.mxu0 0.0
    %1197 = vmatpush1.msra.mxu0 0.0
    %1198 = vmatprep.subr.mxu0 0.0
    %1199 = vmatpush1.msra.mxu0 0.0
    %1200 = vmatprep.subr.mxu0 0.0
    %1201 = vmatpush1.msra.mxu0 0.0
    %1202 = vmatprep.subr.mxu0 0.0
    %1203 = vmatpush1.msra.mxu0 0.0
    %1204 = vmatprep.subr.mxu0 0.0
    %1205 = vmatpush1.msra.mxu0 0.0
    %1206 = vmatprep.subr.mxu0 0.0
    %1207 = vmatpush1.msra.mxu0 0.0
    %1208 = vmatprep.subr.mxu0 0.0
    %1209 = vmatpush1.msra.mxu0 0.0
    %1210 = vmatprep.subr.mxu0 0.0
    %1211 = vmatpush1.msra.mxu0 0.0
    %1212 = vmatprep.subr.mxu0 0.0
    %1213 = vmatpush1.msra.mxu0 0.0
    %1214 = vmatprep.subr.mxu0 0.0
    %1215 = vmatpush1.msra.mxu0 0.0
    %1216 = vmatprep.subr.mxu0 0.0
    %1217 = vmatpush1.msra.mxu0 0.0
    %1218 = vmatprep.subr.mxu0 0.0
    %1219 = vmatpush1.msra.mxu0 %v448
    %1220 = vmatprep.subr.mxu0 0.0
    %1221 = vmatpush2.msra.mxu0 0.0
    %1222 = vmatprep.subr.mxu0 0.0
    %1223 = vmatpush2.msra.mxu0 0.0
    %1224 = vmatprep.subr.mxu0 0.0
    %1225 = vmatpush2.msra.mxu0 0.0
    %1226 = vmatprep.subr.mxu0 0.0
    %1227 = vmatpush2.msra.mxu0 0.0
    %1228 = vmatprep.subr.mxu0 0.0
    %1229 = vmatpush2.msra.mxu0 0.0
    %1230 = vmatprep.subr.mxu0 0.0
    %1231 = vmatpush2.msra.mxu0 0.0
    %1232 = vmatprep.subr.mxu0 0.0
    %1233 = vmatpush2.msra.mxu0 0.0
    %1234 = vmatprep.subr.mxu0 0.0
    %1235 = vmatpush2.msra.mxu0 0.0
    %1236 = vmatprep.subr.mxu0 0.0
    %1237 = vmatpush2.msra.mxu0 0.0
    %1238 = vmatprep.subr.mxu0 0.0
    %1239 = vmatpush2.msra.mxu0 0.0
    %1240 = vmatprep.subr.mxu0 0.0
    %1241 = vmatpush2.msra.mxu0 0.0
    %1242 = vmatprep.subr.mxu0 0.0
    %1243 = vmatpush2.msra.mxu0 0.0
    %1244 = vmatprep.subr.mxu0 0.0
    %1245 = vmatpush2.msra.mxu0 0.0
    %1246 = vmatprep.subr.mxu0 0.0
    %1247 = vmatpush2.msra.mxu0 0.0
    %1248 = vmatprep.subr.mxu0 0.0
    %1249 = vmatpush2.msra.mxu0 0.0
    %1250 = vmatprep.subr.mxu0 0.0
    %1251 = vmatpush2.msra.mxu0 0.0
    %1252 = vmatprep.mubr.f32.mxu0 0.0
    %1253 = vmatmul.mubr.f32.gmra.mxu0 %v1186
    %v1254 = vpop.f32.mrf.mxu0
    %v1255 = vadd.f32 0.0, %v1254
    %v1256 = vpop.f32.mrf.mxu0
    %1257 = vdwg.mxu0
    %v1259 = vsel %vm504, %v1178, 0
    %1261 = vmatprep.subr.mxu0 0.0
    %1262 = vmatpush1.msra.mxu0 0.0
    %1263 = vmatprep.subr.mxu0 0.0
    %1264 = vmatpush1.msra.mxu0 0.0
    %1265 = vmatprep.subr.mxu0 0.0
    %1266 = vmatpush1.msra.mxu0 0.0
    %1267 = vmatprep.subr.mxu0 0.0
    %1268 = vmatpush1.msra.mxu0 0.0
    %1269 = vmatprep.subr.mxu0 0.0
    %1270 = vmatpush1.msra.mxu0 0.0
    %1271 = vmatprep.subr.mxu0 0.0
    %1272 = vmatpush1.msra.mxu0 0.0
    %1273 = vmatprep.subr.mxu0 0.0
    %1274 = vmatpush1.msra.mxu0 0.0
    %1275 = vmatprep.subr.mxu0 0.0
    %1276 = vmatpush1.msra.mxu0 0.0
    %1277 = vmatprep.subr.mxu0 0.0
    %1278 = vmatpush1.msra.mxu0 0.0
    %1279 = vmatprep.subr.mxu0 0.0
    %1280 = vmatpush1.msra.mxu0 0.0
    %1281 = vmatprep.subr.mxu0 0.0
    %1282 = vmatpush1.msra.mxu0 0.0
    %1283 = vmatprep.subr.mxu0 0.0
    %1284 = vmatpush1.msra.mxu0 0.0
    %1285 = vmatprep.subr.mxu0 0.0
    %1286 = vmatpush1.msra.mxu0 0.0
    %1287 = vmatprep.subr.mxu0 0.0
    %1288 = vmatpush1.msra.mxu0 0.0
    %1289 = vmatprep.subr.mxu0 0.0
    %1290 = vmatpush1.msra.mxu0 0.0
    %1291 = vmatprep.subr.mxu0 0.0
    %1292 = vmatpush1.msra.mxu0 %v453
    %1293 = vmatprep.subr.mxu0 0.0
    %1294 = vmatpush2.msra.mxu0 0.0
    %1295 = vmatprep.subr.mxu0 0.0
    %1296 = vmatpush2.msra.mxu0 0.0
    %1297 = vmatprep.subr.mxu0 0.0
    %1298 = vmatpush2.msra.mxu0 0.0
    %1299 = vmatprep.subr.mxu0 0.0
    %1300 = vmatpush2.msra.mxu0 0.0
    %1301 = vmatprep.subr.mxu0 0.0
    %1302 = vmatpush2.msra.mxu0 0.0
    %1303 = vmatprep.subr.mxu0 0.0
    %1304 = vmatpush2.msra.mxu0 0.0
    %1305 = vmatprep.subr.mxu0 0.0
    %1306 = vmatpush2.msra.mxu0 0.0
    %1307 = vmatprep.subr.mxu0 0.0
    %1308 = vmatpush2.msra.mxu0 0.0
    %1309 = vmatprep.subr.mxu0 0.0
    %1310 = vmatpush2.msra.mxu0 0.0
    %1311 = vmatprep.subr.mxu0 0.0
    %1312 = vmatpush2.msra.mxu0 0.0
    %1313 = vmatprep.subr.mxu0 0.0
    %1314 = vmatpush2.msra.mxu0 0.0
    %1315 = vmatprep.subr.mxu0 0.0
    %1316 = vmatpush2.msra.mxu0 0.0
    %1317 = vmatprep.subr.mxu0 0.0
    %1318 = vmatpush2.msra.mxu0 0.0
    %1319 = vmatprep.subr.mxu0 0.0
    %1320 = vmatpush2.msra.mxu0 0.0
    %1321 = vmatprep.subr.mxu0 0.0
    %1322 = vmatpush2.msra.mxu0 0.0
    %1323 = vmatprep.subr.mxu0 0.0
    %1324 = vmatpush2.msra.mxu0 0.0
    %1325 = vmatprep.mubr.f32.mxu0 0.0
    %1326 = vmatmul.mubr.f32.gmra.mxu0 %v1259
    %v1327 = vpop.f32.mrf.mxu0
    %v1328 = vadd.f32 0.0, %v1327
    %v1329 = vpop.f32.mrf.mxu0
    %1330 = vdwg.mxu0
    %v1332 = vsel %vm504, %v1179, 0
    %1334 = vmatprep.subr.mxu0 0.0
    %1335 = vmatpush1.msra.mxu0 0.0
    %1336 = vmatprep.subr.mxu0 0.0
    %1337 = vmatpush1.msra.mxu0 0.0
    %1338 = vmatprep.subr.mxu0 0.0
    %1339 = vmatpush1.msra.mxu0 0.0
    %1340 = vmatprep.subr.mxu0 0.0
    %1341 = vmatpush1.msra.mxu0 0.0
    %1342 = vmatprep.subr.mxu0 0.0
    %1343 = vmatpush1.msra.mxu0 0.0
    %1344 = vmatprep.subr.mxu0 0.0
    %1345 = vmatpush1.msra.mxu0 0.0
    %1346 = vmatprep.subr.mxu0 0.0
    %1347 = vmatpush1.msra.mxu0 0.0
    %1348 = vmatprep.subr.mxu0 0.0
    %1349 = vmatpush1.msra.mxu0 0.0
    %1350 = vmatprep.subr.mxu0 0.0
    %1351 = vmatpush1.msra.mxu0 0.0
    %1352 = vmatprep.subr.mxu0 0.0
    %1353 = vmatpush1.msra.mxu0 0.0
    %1354 = vmatprep.subr.mxu0 0.0
    %1355 = vmatpush1.msra.mxu0 0.0
    %1356 = vmatprep.subr.mxu0 0.0
    %1357 = vmatpush1.msra.mxu0 0.0
    %1358 = vmatprep.subr.mxu0 0.0
    %1359 = vmatpush1.msra.mxu0 0.0
    %1360 = vmatprep.subr.mxu0 0.0
    %1361 = vmatpush1.msra.mxu0 0.0
    %1362 = vmatprep.subr.mxu0 0.0
    %1363 = vmatpush1.msra.mxu0 0.0
    %1364 = vmatprep.subr.mxu0 0.0
    %1365 = vmatpush1.msra.mxu0 %v487
    %1366 = vmatprep.subr.mxu0 0.0
    %1367 = vmatpush2.msra.mxu0 0.0
    %1368 = vmatprep.subr.mxu0 0.0
    %1369 = vmatpush2.msra.mxu0 0.0
    %1370 = vmatprep.subr.mxu0 0.0
    %1371 = vmatpush2.msra.mxu0 0.0
    %1372 = vmatprep.subr.mxu0 0.0
    %1373 = vmatpush2.msra.mxu0 0.0
    %1374 = vmatprep.subr.mxu0 0.0
    %1375 = vmatpush2.msra.mxu0 0.0
    %1376 = vmatprep.subr.mxu0 0.0
    %1377 = vmatpush2.msra.mxu0 0.0
    %1378 = vmatprep.subr.mxu0 0.0
    %1379 = vmatpush2.msra.mxu0 0.0
    %1380 = vmatprep.subr.mxu0 0.0
    %1381 = vmatpush2.msra.mxu0 0.0
    %1382 = vmatprep.subr.mxu0 0.0
    %1383 = vmatpush2.msra.mxu0 0.0
    %1384 = vmatprep.subr.mxu0 0.0
    %1385 = vmatpush2.msra.mxu0 0.0
    %1386 = vmatprep.subr.mxu0 0.0
    %1387 = vmatpush2.msra.mxu0 0.0
    %1388 = vmatprep.subr.mxu0 0.0
    %1389 = vmatpush2.msra.mxu0 0.0
    %1390 = vmatprep.subr.mxu0 0.0
    %1391 = vmatpush2.msra.mxu0 0.0
    %1392 = vmatprep.subr.mxu0 0.0
    %1393 = vmatpush2.msra.mxu0 0.0
    %1394 = vmatprep.subr.mxu0 0.0
    %1395 = vmatpush2.msra.mxu0 0.0
    %1396 = vmatprep.subr.mxu0 0.0
    %1397 = vmatpush2.msra.mxu0 0.0
    %1398 = vmatprep.mubr.f32.mxu0 0.0
    %1399 = vmatmul.mubr.f32.gmra.mxu0 %v1332
    %v1400 = vpop.f32.mrf.mxu0
    %v1401 = vadd.f32 0.0, %v1400
    %v1402 = vpop.f32.mrf.mxu0
    %1403 = vdwg.mxu0
    %v1405 = vsel %vm504, %v1180, 0
    %1407 = vmatprep.subr.mxu0 0.0
    %1408 = vmatpush1.msra.mxu0 0.0
    %1409 = vmatprep.subr.mxu0 0.0
    %1410 = vmatpush1.msra.mxu0 0.0
    %1411 = vmatprep.subr.mxu0 0.0
    %1412 = vmatpush1.msra.mxu0 0.0
    %1413 = vmatprep.subr.mxu0 0.0
    %1414 = vmatpush1.msra.mxu0 0.0
    %1415 = vmatprep.subr.mxu0 0.0
    %1416 = vmatpush1.msra.mxu0 0.0
    %1417 = vmatprep.subr.mxu0 0.0
    %1418 = vmatpush1.msra.mxu0 0.0
    %1419 = vmatprep.subr.mxu0 0.0
    %1420 = vmatpush1.msra.mxu0 0.0
    %1421 = vmatprep.subr.mxu0 0.0
    %1422 = vmatpush1.msra.mxu0 0.0
    %1423 = vmatprep.subr.mxu0 0.0
    %1424 = vmatpush1.msra.mxu0 0.0
    %1425 = vmatprep.subr.mxu0 0.0
    %1426 = vmatpush1.msra.mxu0 0.0
    %1427 = vmatprep.subr.mxu0 0.0
    %1428 = vmatpush1.msra.mxu0 0.0
    %1429 = vmatprep.subr.mxu0 0.0
    %1430 = vmatpush1.msra.mxu0 0.0
    %1431 = vmatprep.subr.mxu0 0.0
    %1432 = vmatpush1.msra.mxu0 0.0
    %1433 = vmatprep.subr.mxu0 0.0
    %1434 = vmatpush1.msra.mxu0 0.0
    %1435 = vmatprep.subr.mxu0 0.0
    %1436 = vmatpush1.msra.mxu0 0.0
    %1437 = vmatprep.subr.mxu0 0.0
    %1438 = vmatpush1.msra.mxu0 %v489
    %1439 = vmatprep.subr.mxu0 0.0
    %1440 = vmatpush2.msra.mxu0 0.0
    %1441 = vmatprep.subr.mxu0 0.0
    %1442 = vmatpush2.msra.mxu0 0.0
    %1443 = vmatprep.subr.mxu0 0.0
    %1444 = vmatpush2.msra.mxu0 0.0
    %1445 = vmatprep.subr.mxu0 0.0
    %1446 = vmatpush2.msra.mxu0 0.0
    %1447 = vmatprep.subr.mxu0 0.0
    %1448 = vmatpush2.msra.mxu0 0.0
    %1449 = vmatprep.subr.mxu0 0.0
    %1450 = vmatpush2.msra.mxu0 0.0
    %1451 = vmatprep.subr.mxu0 0.0
    %1452 = vmatpush2.msra.mxu0 0.0
    %1453 = vmatprep.subr.mxu0 0.0
    %1454 = vmatpush2.msra.mxu0 0.0
    %1455 = vmatprep.subr.mxu0 0.0
    %1456 = vmatpush2.msra.mxu0 0.0
    %1457 = vmatprep.subr.mxu0 0.0
    %1458 = vmatpush2.msra.mxu0 0.0
    %1459 = vmatprep.subr.mxu0 0.0
    %1460 = vmatpush2.msra.mxu0 0.0
    %1461 = vmatprep.subr.mxu0 0.0
    %1462 = vmatpush2.msra.mxu0 0.0
    %1463 = vmatprep.subr.mxu0 0.0
    %1464 = vmatpush2.msra.mxu0 0.0
    %1465 = vmatprep.subr.mxu0 0.0
    %1466 = vmatpush2.msra.mxu0 0.0
    %1467 = vmatprep.subr.mxu0 0.0
    %1468 = vmatpush2.msra.mxu0 0.0
    %1469 = vmatprep.subr.mxu0 0.0
    %1470 = vmatpush2.msra.mxu0 0.0
    %1471 = vmatprep.mubr.f32.mxu0 0.0
    %1472 = vmatmul.mubr.f32.gmra.mxu0 %v1405
    %v1473 = vpop.f32.mrf.mxu0
    %v1474 = vadd.f32 0.0, %v1473
    %v1475 = vpop.f32.mrf.mxu0
    %1476 = vdwg.mxu0
    %v1478 = vsel %vm504, %v1181, 0
    %1480 = vmatprep.subr.mxu0 0.0
    %1481 = vmatpush1.msra.mxu0 0.0
    %1482 = vmatprep.subr.mxu0 0.0
    %1483 = vmatpush1.msra.mxu0 0.0
    %1484 = vmatprep.subr.mxu0 0.0
    %1485 = vmatpush1.msra.mxu0 0.0
    %1486 = vmatprep.subr.mxu0 0.0
    %1487 = vmatpush1.msra.mxu0 0.0
    %1488 = vmatprep.subr.mxu0 0.0
    %1489 = vmatpush1.msra.mxu0 0.0
    %1490 = vmatprep.subr.mxu0 0.0
    %1491 = vmatpush1.msra.mxu0 0.0
    %1492 = vmatprep.subr.mxu0 0.0
    %1493 = vmatpush1.msra.mxu0 0.0
    %1494 = vmatprep.subr.mxu0 0.0
    %1495 = vmatpush1.msra.mxu0 0.0
    %1496 = vmatprep.subr.mxu0 0.0
    %1497 = vmatpush1.msra.mxu0 0.0
    %1498 = vmatprep.subr.mxu0 0.0
    %1499 = vmatpush1.msra.mxu0 0.0
    %1500 = vmatprep.subr.mxu0 0.0
    %1501 = vmatpush1.msra.mxu0 0.0
    %1502 = vmatprep.subr.mxu0 0.0
    %1503 = vmatpush1.msra.mxu0 0.0
    %1504 = vmatprep.subr.mxu0 0.0
    %1505 = vmatpush1.msra.mxu0 0.0
    %1506 = vmatprep.subr.mxu0 0.0
    %1507 = vmatpush1.msra.mxu0 0.0
    %1508 = vmatprep.subr.mxu0 0.0
    %1509 = vmatpush1.msra.mxu0 0.0
    %1510 = vmatprep.subr.mxu0 0.0
    %1511 = vmatpush1.msra.mxu0 %v493
    %1512 = vmatprep.subr.mxu0 0.0
    %1513 = vmatpush2.msra.mxu0 0.0
    %1514 = vmatprep.subr.mxu0 0.0
    %1515 = vmatpush2.msra.mxu0 0.0
    %1516 = vmatprep.subr.mxu0 0.0
    %1517 = vmatpush2.msra.mxu0 0.0
    %1518 = vmatprep.subr.mxu0 0.0
    %1519 = vmatpush2.msra.mxu0 0.0
    %1520 = vmatprep.subr.mxu0 0.0
    %1521 = vmatpush2.msra.mxu0 0.0
    %1522 = vmatprep.subr.mxu0 0.0
    %1523 = vmatpush2.msra.mxu0 0.0
    %1524 = vmatprep.subr.mxu0 0.0
    %1525 = vmatpush2.msra.mxu0 0.0
    %1526 = vmatprep.subr.mxu0 0.0
    %1527 = vmatpush2.msra.mxu0 0.0
    %1528 = vmatprep.subr.mxu0 0.0
    %1529 = vmatpush2.msra.mxu0 0.0
    %1530 = vmatprep.subr.mxu0 0.0
    %1531 = vmatpush2.msra.mxu0 0.0
    %1532 = vmatprep.subr.mxu0 0.0
    %1533 = vmatpush2.msra.mxu0 0.0
    %1534 = vmatprep.subr.mxu0 0.0
    %1535 = vmatpush2.msra.mxu0 0.0
    %1536 = vmatprep.subr.mxu0 0.0
    %1537 = vmatpush2.msra.mxu0 0.0
    %1538 = vmatprep.subr.mxu0 0.0
    %1539 = vmatpush2.msra.mxu0 0.0
    %1540 = vmatprep.subr.mxu0 0.0
    %1541 = vmatpush2.msra.mxu0 0.0
    %1542 = vmatprep.subr.mxu0 0.0
    %1543 = vmatpush2.msra.mxu0 0.0
    %1544 = vmatprep.mubr.f32.mxu0 0.0
    %1545 = vmatmul.mubr.f32.gmra.mxu0 %v1478
    %v1546 = vpop.f32.mrf.mxu0
    %v1547 = vadd.f32 0.0, %v1546
    %v1548 = vpop.f32.mrf.mxu0
    %1549 = vdwg.mxu0
    %v1551 = vsel %vm504, %v1182, 0
    %1553 = vmatprep.subr.mxu0 0.0
    %1554 = vmatpush1.msra.mxu0 0.0
    %1555 = vmatprep.subr.mxu0 0.0
    %1556 = vmatpush1.msra.mxu0 0.0
    %1557 = vmatprep.subr.mxu0 0.0
    %1558 = vmatpush1.msra.mxu0 0.0
    %1559 = vmatprep.subr.mxu0 0.0
    %1560 = vmatpush1.msra.mxu0 0.0
    %1561 = vmatprep.subr.mxu0 0.0
    %1562 = vmatpush1.msra.mxu0 0.0
    %1563 = vmatprep.subr.mxu0 0.0
    %1564 = vmatpush1.msra.mxu0 0.0
    %1565 = vmatprep.subr.mxu0 0.0
    %1566 = vmatpush1.msra.mxu0 0.0
    %1567 = vmatprep.subr.mxu0 0.0
    %1568 = vmatpush1.msra.mxu0 0.0
    %1569 = vmatprep.subr.mxu0 0.0
    %1570 = vmatpush1.msra.mxu0 0.0
    %1571 = vmatprep.subr.mxu0 0.0
    %1572 = vmatpush1.msra.mxu0 0.0
    %1573 = vmatprep.subr.mxu0 0.0
    %1574 = vmatpush1.msra.mxu0 0.0
    %1575 = vmatprep.subr.mxu0 0.0
    %1576 = vmatpush1.msra.mxu0 0.0
    %1577 = vmatprep.subr.mxu0 0.0
    %1578 = vmatpush1.msra.mxu0 0.0
    %1579 = vmatprep.subr.mxu0 0.0
    %1580 = vmatpush1.msra.mxu0 0.0
    %1581 = vmatprep.subr.mxu0 0.0
    %1582 = vmatpush1.msra.mxu0 0.0
    %1583 = vmatprep.subr.mxu0 0.0
    %1584 = vmatpush1.msra.mxu0 %v495
    %1585 = vmatprep.subr.mxu0 0.0
    %1586 = vmatpush2.msra.mxu0 0.0
    %1587 = vmatprep.subr.mxu0 0.0
    %1588 = vmatpush2.msra.mxu0 0.0
    %1589 = vmatprep.subr.mxu0 0.0
    %1590 = vmatpush2.msra.mxu0 0.0
    %1591 = vmatprep.subr.mxu0 0.0
    %1592 = vmatpush2.msra.mxu0 0.0
    %1593 = vmatprep.subr.mxu0 0.0
    %1594 = vmatpush2.msra.mxu0 0.0
    %1595 = vmatprep.subr.mxu0 0.0
    %1596 = vmatpush2.msra.mxu0 0.0
    %1597 = vmatprep.subr.mxu0 0.0
    %1598 = vmatpush2.msra.mxu0 0.0
    %1599 = vmatprep.subr.mxu0 0.0
    %1600 = vmatpush2.msra.mxu0 0.0
    %1601 = vmatprep.subr.mxu0 0.0
    %1602 = vmatpush2.msra.mxu0 0.0
    %1603 = vmatprep.subr.mxu0 0.0
    %1604 = vmatpush2.msra.mxu0 0.0
    %1605 = vmatprep.subr.mxu0 0.0
    %1606 = vmatpush2.msra.mxu0 0.0
    %1607 = vmatprep.subr.mxu0 0.0
    %1608 = vmatpush2.msra.mxu0 0.0
    %1609 = vmatprep.subr.mxu0 0.0
    %1610 = vmatpush2.msra.mxu0 0.0
    %1611 = vmatprep.subr.mxu0 0.0
    %1612 = vmatpush2.msra.mxu0 0.0
    %1613 = vmatprep.subr.mxu0 0.0
    %1614 = vmatpush2.msra.mxu0 0.0
    %1615 = vmatprep.subr.mxu0 0.0
    %1616 = vmatpush2.msra.mxu0 0.0
    %1617 = vmatprep.mubr.f32.mxu0 0.0
    %1618 = vmatmul.mubr.f32.gmra.mxu0 %v1551
    %v1619 = vpop.f32.mrf.mxu0
    %v1620 = vadd.f32 0.0, %v1619
    %v1621 = vpop.f32.mrf.mxu0
    %1622 = vdwg.mxu0
    %v1624 = vsel %vm504, %v1183, 0
    %1626 = vmatprep.subr.mxu0 0.0
    %1627 = vmatpush1.msra.mxu0 0.0
    %1628 = vmatprep.subr.mxu0 0.0
    %1629 = vmatpush1.msra.mxu0 0.0
    %1630 = vmatprep.subr.mxu0 0.0
    %1631 = vmatpush1.msra.mxu0 0.0
    %1632 = vmatprep.subr.mxu0 0.0
    %1633 = vmatpush1.msra.mxu0 0.0
    %1634 = vmatprep.subr.mxu0 0.0
    %1635 = vmatpush1.msra.mxu0 0.0
    %1636 = vmatprep.subr.mxu0 0.0
    %1637 = vmatpush1.msra.mxu0 0.0
    %1638 = vmatprep.subr.mxu0 0.0
    %1639 = vmatpush1.msra.mxu0 0.0
    %1640 = vmatprep.subr.mxu0 0.0
    %1641 = vmatpush1.msra.mxu0 0.0
    %1642 = vmatprep.subr.mxu0 0.0
    %1643 = vmatpush1.msra.mxu0 0.0
    %1644 = vmatprep.subr.mxu0 0.0
    %1645 = vmatpush1.msra.mxu0 0.0
    %1646 = vmatprep.subr.mxu0 0.0
    %1647 = vmatpush1.msra.mxu0 0.0
    %1648 = vmatprep.subr.mxu0 0.0
    %1649 = vmatpush1.msra.mxu0 0.0
    %1650 = vmatprep.subr.mxu0 0.0
    %1651 = vmatpush1.msra.mxu0 0.0
    %1652 = vmatprep.subr.mxu0 0.0
    %1653 = vmatpush1.msra.mxu0 0.0
    %1654 = vmatprep.subr.mxu0 0.0
    %1655 = vmatpush1.msra.mxu0 0.0
    %1656 = vmatprep.subr.mxu0 0.0
    %1657 = vmatpush1.msra.mxu0 %v499
    %1658 = vmatprep.subr.mxu0 0.0
    %1659 = vmatpush2.msra.mxu0 0.0
    %1660 = vmatprep.subr.mxu0 0.0
    %1661 = vmatpush2.msra.mxu0 0.0
    %1662 = vmatprep.subr.mxu0 0.0
    %1663 = vmatpush2.msra.mxu0 0.0
    %1664 = vmatprep.subr.mxu0 0.0
    %1665 = vmatpush2.msra.mxu0 0.0
    %1666 = vmatprep.subr.mxu0 0.0
    %1667 = vmatpush2.msra.mxu0 0.0
    %1668 = vmatprep.subr.mxu0 0.0
    %1669 = vmatpush2.msra.mxu0 0.0
    %1670 = vmatprep.subr.mxu0 0.0
    %1671 = vmatpush2.msra.mxu0 0.0
    %1672 = vmatprep.subr.mxu0 0.0
    %1673 = vmatpush2.msra.mxu0 0.0
    %1674 = vmatprep.subr.mxu0 0.0
    %1675 = vmatpush2.msra.mxu0 0.0
    %1676 = vmatprep.subr.mxu0 0.0
    %1677 = vmatpush2.msra.mxu0 0.0
    %1678 = vmatprep.subr.mxu0 0.0
    %1679 = vmatpush2.msra.mxu0 0.0
    %1680 = vmatprep.subr.mxu0 0.0
    %1681 = vmatpush2.msra.mxu0 0.0
    %1682 = vmatprep.subr.mxu0 0.0
    %1683 = vmatpush2.msra.mxu0 0.0
    %1684 = vmatprep.subr.mxu0 0.0
    %1685 = vmatpush2.msra.mxu0 0.0
    %1686 = vmatprep.subr.mxu0 0.0
    %1687 = vmatpush2.msra.mxu0 0.0
    %1688 = vmatprep.subr.mxu0 0.0
    %1689 = vmatpush2.msra.mxu0 0.0
    %1690 = vmatprep.mubr.f32.mxu0 0.0
    %1691 = vmatmul.mubr.f32.gmra.mxu0 %v1624
    %v1692 = vpop.f32.mrf.mxu0
    %v1693 = vadd.f32 0.0, %v1692
    %v1694 = vpop.f32.mrf.mxu0
    %1695 = vdwg.mxu0
    %v1697 = vsel %vm504, %v1184, 0
    %1699 = vmatprep.subr.mxu0 0.0
    %1700 = vmatpush1.msra.mxu0 0.0
    %1701 = vmatprep.subr.mxu0 0.0
    %1702 = vmatpush1.msra.mxu0 0.0
    %1703 = vmatprep.subr.mxu0 0.0
    %1704 = vmatpush1.msra.mxu0 0.0
    %1705 = vmatprep.subr.mxu0 0.0
    %1706 = vmatpush1.msra.mxu0 0.0
    %1707 = vmatprep.subr.mxu0 0.0
    %1708 = vmatpush1.msra.mxu0 0.0
    %1709 = vmatprep.subr.mxu0 0.0
    %1710 = vmatpush1.msra.mxu0 0.0
    %1711 = vmatprep.subr.mxu0 0.0
    %1712 = vmatpush1.msra.mxu0 0.0
    %1713 = vmatprep.subr.mxu0 0.0
    %1714 = vmatpush1.msra.mxu0 0.0
    %1715 = vmatprep.subr.mxu0 0.0
    %1716 = vmatpush1.msra.mxu0 0.0
    %1717 = vmatprep.subr.mxu0 0.0
    %1718 = vmatpush1.msra.mxu0 0.0
    %1719 = vmatprep.subr.mxu0 0.0
    %1720 = vmatpush1.msra.mxu0 0.0
    %1721 = vmatprep.subr.mxu0 0.0
    %1722 = vmatpush1.msra.mxu0 0.0
    %1723 = vmatprep.subr.mxu0 0.0
    %1724 = vmatpush1.msra.mxu0 0.0
    %1725 = vmatprep.subr.mxu0 0.0
    %1726 = vmatpush1.msra.mxu0 0.0
    %1727 = vmatprep.subr.mxu0 0.0
    %1728 = vmatpush1.msra.mxu0 0.0
    %1729 = vmatprep.subr.mxu0 0.0
    %1730 = vmatpush1.msra.mxu0 %v501
    %1731 = vmatprep.subr.mxu0 0.0
    %1732 = vmatpush2.msra.mxu0 0.0
    %1733 = vmatprep.subr.mxu0 0.0
    %1734 = vmatpush2.msra.mxu0 0.0
    %1735 = vmatprep.subr.mxu0 0.0
    %1736 = vmatpush2.msra.mxu0 0.0
    %1737 = vmatprep.subr.mxu0 0.0
    %1738 = vmatpush2.msra.mxu0 0.0
    %1739 = vmatprep.subr.mxu0 0.0
    %1740 = vmatpush2.msra.mxu0 0.0
    %1741 = vmatprep.subr.mxu0 0.0
    %1742 = vmatpush2.msra.mxu0 0.0
    %1743 = vmatprep.subr.mxu0 0.0
    %1744 = vmatpush2.msra.mxu0 0.0
    %1745 = vmatprep.subr.mxu0 0.0
    %1746 = vmatpush2.msra.mxu0 0.0
    %1747 = vmatprep.subr.mxu0 0.0
    %1748 = vmatpush2.msra.mxu0 0.0
    %1749 = vmatprep.subr.mxu0 0.0
    %1750 = vmatpush2.msra.mxu0 0.0
    %1751 = vmatprep.subr.mxu0 0.0
    %1752 = vmatpush2.msra.mxu0 0.0
    %1753 = vmatprep.subr.mxu0 0.0
    %1754 = vmatpush2.msra.mxu0 0.0
    %1755 = vmatprep.subr.mxu0 0.0
    %1756 = vmatpush2.msra.mxu0 0.0
    %1757 = vmatprep.subr.mxu0 0.0
    %1758 = vmatpush2.msra.mxu0 0.0
    %1759 = vmatprep.subr.mxu0 0.0
    %1760 = vmatpush2.msra.mxu0 0.0
    %1761 = vmatprep.subr.mxu0 0.0
    %1762 = vmatpush2.msra.mxu0 0.0
    %1763 = vmatprep.mubr.f32.mxu0 0.0
    %1764 = vmatmul.mubr.f32.gmra.mxu0 %v1697
    %v1765 = vpop.f32.mrf.mxu0
    %v1766 = vadd.f32 0.0, %v1765
    %v1767 = vpop.f32.mrf.mxu0
    %1768 = vdwg.mxu0
    %1771 = vrot.lane.b32.xlu0 %v1401, 8
    %v1772 = vpop.permute.xlu0 %1771
    %1773 = vrot.lane.b32.xlu0 %v1474, 8
    %v1774 = vpop.permute.xlu0 %1773
    %1779 = vrot.lane.b32.xlu0 %v1547, 16
    %v1780 = vpop.permute.xlu0 %1779
    %1781 = vrot.lane.b32.xlu0 %v1620, 16
    %v1782 = vpop.permute.xlu0 %1781
    %1787 = vrot.lane.b32.xlu0 %v1693, 24
    %v1788 = vpop.permute.xlu0 %1787
    %1789 = vrot.lane.b32.xlu0 %v1766, 24
    %v1790 = vpop.permute.xlu0 %1789
    %v1793 = vsel %vm504, %v1255, %v1772
    %v1794 = vsel %vm504, %v1328, %v1774
    %v1795 = vsel %vm58, %v1793, %v1780
    %v1796 = vsel %vm58, %v1794, %v1782
    %vm1797 = vcmask 195584
    %v1798 = vsel %vm1797, %v1795, %v1788
    %v1799 = vsel %vm1797, %v1796, %v1790
    %v1800 = vlaneseq
    %v1801 = vshrl.u32 %v1800, 7
    %v1802 = vsub.s32 3, %v1801
    %v1803 = vrot.slane %v210, %v1802
    %v1805 = vsel %vm216, %v1798, 0
    %v1808 = vsel %vm216, %v1799, 0
    %1810 = vmatprep.subr.mxu0 0.0
    %1811 = vmatpush1.msra.mxu0 0.0
    %1812 = vmatprep.subr.mxu0 0.0
    %1813 = vmatpush1.msra.mxu0 0.0
    %1814 = vmatprep.subr.mxu0 0.0
    %1815 = vmatpush1.msra.mxu0 0.0
    %1816 = vmatprep.subr.mxu0 0.0
    %1817 = vmatpush1.msra.mxu0 0.0
    %1818 = vmatprep.subr.mxu0 0.0
    %1819 = vmatpush1.msra.mxu0 0.0
    %1820 = vmatprep.subr.mxu0 0.0
    %1821 = vmatpush1.msra.mxu0 0.0
    %1822 = vmatprep.subr.mxu0 0.0
    %1823 = vmatpush1.msra.mxu0 0.0
    %1824 = vmatprep.subr.mxu0 0.0
    %1825 = vmatpush1.msra.mxu0 0.0
    %1826 = vmatprep.subr.mxu0 0.0
    %1827 = vmatpush1.msra.mxu0 0.0
    %1828 = vmatprep.subr.mxu0 0.0
    %1829 = vmatpush1.msra.mxu0 0.0
    %1830 = vmatprep.subr.mxu0 0.0
    %1831 = vmatpush1.msra.mxu0 0.0
    %1832 = vmatprep.subr.mxu0 0.0
    %1833 = vmatpush1.msra.mxu0 0.0
    %1834 = vmatprep.subr.mxu0 0.0
    %1835 = vmatpush1.msra.mxu0 %v197
    %1836 = vmatprep.subr.mxu0 0.0
    %1837 = vmatpush1.msra.mxu0 %v196
    %1838 = vmatprep.subr.mxu0 0.0
    %1839 = vmatpush1.msra.mxu0 %v195
    %1840 = vmatprep.subr.mxu0 0.0
    %1841 = vmatpush1.msra.mxu0 %v194
    %1842 = vmatprep.subr.mxu0 0.0
    %1843 = vmatpush2.msra.mxu0 0.0
    %1844 = vmatprep.subr.mxu0 0.0
    %1845 = vmatpush2.msra.mxu0 0.0
    %1846 = vmatprep.subr.mxu0 0.0
    %1847 = vmatpush2.msra.mxu0 0.0
    %1848 = vmatprep.subr.mxu0 0.0
    %1849 = vmatpush2.msra.mxu0 0.0
    %1850 = vmatprep.subr.mxu0 0.0
    %1851 = vmatpush2.msra.mxu0 0.0
    %1852 = vmatprep.subr.mxu0 0.0
    %1853 = vmatpush2.msra.mxu0 0.0
    %1854 = vmatprep.subr.mxu0 0.0
    %1855 = vmatpush2.msra.mxu0 0.0
    %1856 = vmatprep.subr.mxu0 0.0
    %1857 = vmatpush2.msra.mxu0 0.0
    %1858 = vmatprep.subr.mxu0 0.0
    %1859 = vmatpush2.msra.mxu0 0.0
    %1860 = vmatprep.subr.mxu0 0.0
    %1861 = vmatpush2.msra.mxu0 0.0
    %1862 = vmatprep.subr.mxu0 0.0
    %1863 = vmatpush2.msra.mxu0 0.0
    %1864 = vmatprep.subr.mxu0 0.0
    %1865 = vmatpush2.msra.mxu0 0.0
    %1866 = vmatprep.subr.mxu0 0.0
    %1867 = vmatpush2.msra.mxu0 0.0
    %1868 = vmatprep.subr.mxu0 0.0
    %1869 = vmatpush2.msra.mxu0 0.0
    %1870 = vmatprep.subr.mxu0 0.0
    %1871 = vmatpush2.msra.mxu0 0.0
    %1872 = vmatprep.subr.mxu0 0.0
    %1873 = vmatpush2.msra.mxu0 0.0
    %1874 = vmatprep.mubr.f32.mxu0 0.0
    %1875 = vmatmul.mubr.f32.gmra.mxu0 %v1805
    %v1876 = vpop.f32.mrf.mxu0
    %v1877 = vadd.f32 %v1803, %v1876
    %v1878 = vpop.f32.mrf.mxu0
    %1879 = vmatprep.mubr.f32.mxu0 0.0
    %1880 = vmatmul.mubr.f32.gmra.mxu0 %v1808
    %v1881 = vpop.f32.mrf.mxu0
    %v1882 = vadd.f32 %v1803, %v1881
    %v1883 = vpop.f32.mrf.mxu0
    %1884 = vdwg.mxu0
    %v1885 = vadd.f32 %v174, %v1877
    %v1886 = vadd.f32 %v179, %v1882
    %v1887 = vsel %vm216, %v1885, 0.0
    %1888 = vadd.xlane.f32.xlu0 %v1887
    %v1889 = vpop.xlane.xlu0 %1888
    %v1890 = vsel %vm216, %v1886, 0.0
    %1891 = vadd.xlane.f32.xlu0 %v1890
    %v1892 = vpop.xlane.xlu0 %1891
    %v1893 = vrcp.pop 32.0
    %v1894 = vmul.f32 %v1889, %v1893
    %v1895 = vmul.f32 %v1892, %v1893
    %v1896 = vsub.f32 %v1885, %v1894
    %v1897 = vsub.f32 %v1886, %v1895
    %v1898 = vmul.f32 %v1896, %v1896
    %v1899 = vmul.f32 %v1897, %v1897
    %v1900 = vsel %vm216, %v1898, 0.0
    %1901 = vadd.xlane.f32.xlu0 %v1900
    %v1902 = vpop.xlane.xlu0 %1901
    %v1903 = vsel %vm216, %v1899, 0.0
    %1904 = vadd.xlane.f32.xlu0 %v1903
    %v1905 = vpop.xlane.xlu0 %1904
    %v1906 = vmul.f32 %v1902, %v1893
    %v1907 = vmul.f32 %v1905, %v1893
    %v1908 = vadd.f32 %v1906, 1e-05
    %v1909 = vadd.f32 %v1907, 1e-05
    %v1910 = vrsqrt.pop %v1908
    %v1911 = vrsqrt.pop %v1909
    %v1912 = vmul.f32 %v1896, %v1910
    %v1913 = vmul.f32 %v1897, %v1911
    %v1914 = vlaneseq
    %v1915 = vshrl.u32 %v1914, 7
    %v1916 = vsub.s32 6, %v1915
    %v1917 = vrot.slane %v210, %v1916
    %v1918 = vmul.f32 %v1912, %v1917
    %v1919 = vmul.f32 %v1913, %v1917
    %v1920 = vlaneseq
    %v1921 = vshrl.u32 %v1920, 7
    %v1922 = vsub.s32 7, %v1921
    %v1923 = vrot.slane %v210, %v1922
    %v1924 = vadd.f32 %v1918, %v1923
    %v1925 = vadd.f32 %v1919, %v1923
    %v1926 = vlaneseq
    %v1927 = vshrl.u32 %v1926, 7
    %v1928 = vsub.s32 4, %v1927
    %v1929 = vrot.slane %v210, %v1928
    %v1931 = vsel %vm216, %v1924, 0
    %v1934 = vsel %vm216, %v1925, 0
    %1936 = vmatprep.subr.mxu0 0.0
    %1937 = vmatpush1.msra.mxu0 0.0
    %1938 = vmatprep.subr.mxu0 0.0
    %1939 = vmatpush1.msra.mxu0 0.0
    %1940 = vmatprep.subr.mxu0 0.0
    %1941 = vmatpush1.msra.mxu0 0.0
    %1942 = vmatprep.subr.mxu0 0.0
    %1943 = vmatpush1.msra.mxu0 0.0
    %1944 = vmatprep.subr.mxu0 0.0
    %1945 = vmatpush1.msra.mxu0 0.0
    %1946 = vmatprep.subr.mxu0 0.0
    %1947 = vmatpush1.msra.mxu0 0.0
    %1948 = vmatprep.subr.mxu0 0.0
    %1949 = vmatpush1.msra.mxu0 0.0
    %1950 = vmatprep.subr.mxu0 0.0
    %1951 = vmatpush1.msra.mxu0 0.0
    %1952 = vmatprep.subr.mxu0 0.0
    %1953 = vmatpush1.msra.mxu0 0.0
    %1954 = vmatprep.subr.mxu0 0.0
    %1955 = vmatpush1.msra.mxu0 0.0
    %1956 = vmatprep.subr.mxu0 0.0
    %1957 = vmatpush1.msra.mxu0 0.0
    %1958 = vmatprep.subr.mxu0 0.0
    %1959 = vmatpush1.msra.mxu0 0.0
    %1960 = vmatprep.subr.mxu0 0.0
    %1961 = vmatpush1.msra.mxu0 %v201
    %1962 = vmatprep.subr.mxu0 0.0
    %1963 = vmatpush1.msra.mxu0 %v200
    %1964 = vmatprep.subr.mxu0 0.0
    %1965 = vmatpush1.msra.mxu0 %v199
    %1966 = vmatprep.subr.mxu0 0.0
    %1967 = vmatpush1.msra.mxu0 %v198
    %1968 = vmatprep.subr.mxu0 0.0
    %1969 = vmatpush2.msra.mxu0 0.0
    %1970 = vmatprep.subr.mxu0 0.0
    %1971 = vmatpush2.msra.mxu0 0.0
    %1972 = vmatprep.subr.mxu0 0.0
    %1973 = vmatpush2.msra.mxu0 0.0
    %1974 = vmatprep.subr.mxu0 0.0
    %1975 = vmatpush2.msra.mxu0 0.0
    %1976 = vmatprep.subr.mxu0 0.0
    %1977 = vmatpush2.msra.mxu0 0.0
    %1978 = vmatprep.subr.mxu0 0.0
    %1979 = vmatpush2.msra.mxu0 0.0
    %1980 = vmatprep.subr.mxu0 0.0
    %1981 = vmatpush2.msra.mxu0 0.0
    %1982 = vmatprep.subr.mxu0 0.0
    %1983 = vmatpush2.msra.mxu0 0.0
    %1984 = vmatprep.subr.mxu0 0.0
    %1985 = vmatpush2.msra.mxu0 0.0
    %1986 = vmatprep.subr.mxu0 0.0
    %1987 = vmatpush2.msra.mxu0 0.0
    %1988 = vmatprep.subr.mxu0 0.0
    %1989 = vmatpush2.msra.mxu0 0.0
    %1990 = vmatprep.subr.mxu0 0.0
    %1991 = vmatpush2.msra.mxu0 0.0
    %1992 = vmatprep.subr.mxu0 0.0
    %1993 = vmatpush2.msra.mxu0 0.0
    %1994 = vmatprep.subr.mxu0 0.0
    %1995 = vmatpush2.msra.mxu0 0.0
    %1996 = vmatprep.subr.mxu0 0.0
    %1997 = vmatpush2.msra.mxu0 0.0
    %1998 = vmatprep.subr.mxu0 0.0
    %1999 = vmatpush2.msra.mxu0 0.0
    %2000 = vmatprep.mubr.f32.mxu0 0.0
    %2001 = vmatmul.mubr.f32.gmra.mxu0 %v1931
    %v2002 = vpop.f32.mrf.mxu0
    %v2003 = vadd.f32 %v1929, %v2002
    %v2004 = vpop.f32.mrf.mxu0
    %2005 = vmatprep.mubr.f32.mxu0 0.0
    %2006 = vmatmul.mubr.f32.gmra.mxu0 %v1934
    %v2007 = vpop.f32.mrf.mxu0
    %v2008 = vadd.f32 %v1929, %v2007
    %v2009 = vpop.f32.mrf.mxu0
    %2010 = vdwg.mxu0
    %v2011 = vmax.f32 %v2003, 0.0
    %v2012 = vmax.f32 %v2008, 0.0
    %v2013 = vlaneseq
    %v2014 = vshrl.u32 %v2013, 7
    %v2015 = vsub.s32 5, %v2014
    %v2016 = vrot.slane %v210, %v2015
    %vm2017 = vcmask 523264
    %v2019 = vsel %vm2017, %v2011, 0
    %v2022 = vsel %vm2017, %v2012, 0
    %2024 = vmatprep.subr.mxu0 0.0
    %2025 = vmatpush1.msra.mxu0 0.0
    %2026 = vmatprep.subr.mxu0 0.0
    %2027 = vmatpush1.msra.mxu0 0.0
    %2028 = vmatprep.subr.mxu0 0.0
    %2029 = vmatpush1.msra.mxu0 0.0
    %2030 = vmatprep.subr.mxu0 0.0
    %2031 = vmatpush1.msra.mxu0 0.0
    %2032 = vmatprep.subr.mxu0 0.0
    %2033 = vmatpush1.msra.mxu0 0.0
    %2034 = vmatprep.subr.mxu0 0.0
    %2035 = vmatpush1.msra.mxu0 0.0
    %2036 = vmatprep.subr.mxu0 0.0
    %2037 = vmatpush1.msra.mxu0 0.0
    %2038 = vmatprep.subr.mxu0 0.0
    %2039 = vmatpush1.msra.mxu0 0.0
    %2040 = vmatprep.subr.mxu0 0.0
    %2041 = vmatpush1.msra.mxu0 %v209
    %2042 = vmatprep.subr.mxu0 0.0
    %2043 = vmatpush1.msra.mxu0 %v208
    %2044 = vmatprep.subr.mxu0 0.0
    %2045 = vmatpush1.msra.mxu0 %v207
    %2046 = vmatprep.subr.mxu0 0.0
    %2047 = vmatpush1.msra.mxu0 %v206
    %2048 = vmatprep.subr.mxu0 0.0
    %2049 = vmatpush1.msra.mxu0 %v205
    %2050 = vmatprep.subr.mxu0 0.0
    %2051 = vmatpush1.msra.mxu0 %v204
    %2052 = vmatprep.subr.mxu0 0.0
    %2053 = vmatpush1.msra.mxu0 %v203
    %2054 = vmatprep.subr.mxu0 0.0
    %2055 = vmatpush1.msra.mxu0 %v202
    %2056 = vmatprep.subr.mxu0 0.0
    %2057 = vmatpush2.msra.mxu0 0.0
    %2058 = vmatprep.subr.mxu0 0.0
    %2059 = vmatpush2.msra.mxu0 0.0
    %2060 = vmatprep.subr.mxu0 0.0
    %2061 = vmatpush2.msra.mxu0 0.0
    %2062 = vmatprep.subr.mxu0 0.0
    %2063 = vmatpush2.msra.mxu0 0.0
    %2064 = vmatprep.subr.mxu0 0.0
    %2065 = vmatpush2.msra.mxu0 0.0
    %2066 = vmatprep.subr.mxu0 0.0
    %2067 = vmatpush2.msra.mxu0 0.0
    %2068 = vmatprep.subr.mxu0 0.0
    %2069 = vmatpush2.msra.mxu0 0.0
    %2070 = vmatprep.subr.mxu0 0.0
    %2071 = vmatpush2.msra.mxu0 0.0
    %2072 = vmatprep.subr.mxu0 0.0
    %2073 = vmatpush2.msra.mxu0 0.0
    %2074 = vmatprep.subr.mxu0 0.0
    %2075 = vmatpush2.msra.mxu0 0.0
    %2076 = vmatprep.subr.mxu0 0.0
    %2077 = vmatpush2.msra.mxu0 0.0
    %2078 = vmatprep.subr.mxu0 0.0
    %2079 = vmatpush2.msra.mxu0 0.0
    %2080 = vmatprep.subr.mxu0 0.0
    %2081 = vmatpush2.msra.mxu0 0.0
    %2082 = vmatprep.subr.mxu0 0.0
    %2083 = vmatpush2.msra.mxu0 0.0
    %2084 = vmatprep.subr.mxu0 0.0
    %2085 = vmatpush2.msra.mxu0 0.0
    %2086 = vmatprep.subr.mxu0 0.0
    %2087 = vmatpush2.msra.mxu0 0.0
    %2088 = vmatprep.mubr.f32.mxu0 0.0
    %2089 = vmatmul.mubr.f32.gmra.mxu0 %v2019
    %v2090 = vpop.f32.mrf.mxu0
    %v2091 = vadd.f32 %v2016, %v2090
    %v2092 = vpop.f32.mrf.mxu0
    %2093 = vmatprep.mubr.f32.mxu0 0.0
    %2094 = vmatmul.mubr.f32.gmra.mxu0 %v2022
    %v2095 = vpop.f32.mrf.mxu0
    %v2096 = vadd.f32 %v2016, %v2095
    %v2097 = vpop.f32.mrf.mxu0
    %2098 = vdwg.mxu0
    %v2099 = vadd.f32 %v1924, %v2091
    %v2100 = vadd.f32 %v1925, %v2096
    %v2101 = vsel %vm216, %v2099, 0.0
    %2102 = vadd.xlane.f32.xlu0 %v2101
    %v2103 = vpop.xlane.xlu0 %2102
    %v2104 = vsel %vm216, %v2100, 0.0
    %2105 = vadd.xlane.f32.xlu0 %v2104
    %v2106 = vpop.xlane.xlu0 %2105
    %v2107 = vmul.f32 %v2103, %v1893
    %v2108 = vmul.f32 %v2106, %v1893
    %v2109 = vsub.f32 %v2099, %v2107
    %v2110 = vsub.f32 %v2100, %v2108
    %v2111 = vmul.f32 %v2109, %v2109
    %v2112 = vmul.f32 %v2110, %v2110
    %v2113 = vsel %vm216, %v2111, 0.0
    %2114 = vadd.xlane.f32.xlu0 %v2113
    %v2115 = vpop.xlane.xlu0 %2114
    %v2116 = vsel %vm216, %v2112, 0.0
    %2117 = vadd.xlane.f32.xlu0 %v2116
    %v2118 = vpop.xlane.xlu0 %2117
    %v2119 = vmul.f32 %v2115, %v1893
    %v2120 = vmul.f32 %v2118, %v1893
    %v2121 = vadd.f32 %v2119, 1e-05
    %v2122 = vadd.f32 %v2120, 1e-05
    %v2123 = vrsqrt.pop %v2121
    %v2124 = vrsqrt.pop %v2122
    %v2125 = vmul.f32 %v2109, %v2123
    %v2126 = vmul.f32 %v2110, %v2124
    %v2127 = vlaneseq
    %v2128 = vshrl.u32 %v2127, 7
    %v2129 = vsub.s32 0, %v2128
    %v2130 = vrot.slane %v211, %v2129
    %v2131 = vmul.f32 %v2125, %v2130
    %v2132 = vmul.f32 %v2126, %v2130
    %v2133 = vlaneseq
    %v2134 = vshrl.u32 %v2133, 7
    %v2135 = vsub.s32 1, %v2134
    %v2136 = vrot.slane %v211, %v2135
    %v2137 = vadd.f32 %v2131, %v2136
    %v2138 = vadd.f32 %v2132, %v2136
    %s2139 = scalar_lea.vmem [#allocation5], 256
    %v2140 = vld [vmem:[%s2139] sm:$0xff]
    %v2141 = vld [vmem:[%s2139 + $0x20] sm:$0xff]
    %v2142 = vld [vmem:[%s2139 + $0x40] sm:$0xff]
    %v2143 = vld [vmem:[%s2139 + $0x60] sm:$0xff]
    %v2144 = vld [vmem:[%s2139 + $0x80] sm:$0xff]
    %v2145 = vld [vmem:[%s2139 + $0xa0] sm:$0xff]
    %v2146 = vld [vmem:[%s2139 + $0xc0] sm:$0xff]
    %v2147 = vld [vmem:[%s2139 + $0xe0] sm:$0xff]
    %v2148 = vld [vmem:[%s2139 + $0x8] sm:$0xff]
    %v2149 = vld [vmem:[%s2139 + $0x28] sm:$0xff]
    %v2150 = vld [vmem:[%s2139 + $0x48] sm:$0xff]
    %v2151 = vld [vmem:[%s2139 + $0x68] sm:$0xff]
    %v2152 = vld [vmem:[%s2139 + $0x88] sm:$0xff]
    %v2153 = vld [vmem:[%s2139 + $0xa8] sm:$0xff]
    %v2154 = vld [vmem:[%s2139 + $0xc8] sm:$0xff]
    %v2155 = vld [vmem:[%s2139 + $0xe8] sm:$0xff]
    %v2156 = vld [vmem:[%s2139 + $0x10] sm:$0xff]
    %v2157 = vld [vmem:[%s2139 + $0x30] sm:$0xff]
    %v2158 = vld [vmem:[%s2139 + $0x50] sm:$0xff]
    %v2159 = vld [vmem:[%s2139 + $0x70] sm:$0xff]
    %v2160 = vld [vmem:[%s2139 + $0x18] sm:$0xff]
    %v2161 = vld [vmem:[%s2139 + $0x38] sm:$0xff]
    %v2162 = vld [vmem:[%s2139 + $0x58] sm:$0xff]
    %v2163 = vld [vmem:[%s2139 + $0x78] sm:$0xff]
    %v2164 = vld [vmem:[%s2139 + $0x98] sm:$0xff]
    %v2165 = vld [vmem:[%s2139 + $0xb8] sm:$0xff]
    %v2166 = vld [vmem:[%s2139 + $0xd8] sm:$0xff]
    %v2167 = vld [vmem:[%s2139 + $0xf8] sm:$0xff]
    %v2168 = vld [vmem:[%s2139 + $0x90] sm:$0xff]
    %v2169 = vld [vmem:[%s2139 + $0xb0] sm:$0xff]
    %v2170 = vlaneseq
    %v2171 = vshrl.u32 %v2170, 7
    %v2172 = vsub.s32 0, %v2171
    %v2173 = vrot.slane %v2168, %v2172
    %v2175 = vsel %vm216, %v2137, 0
    %v2178 = vsel %vm216, %v2138, 0
    %2180 = vmatprep.subr.mxu0 0.0
    %2181 = vmatpush1.msra.mxu0 0.0
    %2182 = vmatprep.subr.mxu0 0.0
    %2183 = vmatpush1.msra.mxu0 0.0
    %2184 = vmatprep.subr.mxu0 0.0
    %2185 = vmatpush1.msra.mxu0 0.0
    %2186 = vmatprep.subr.mxu0 0.0
    %2187 = vmatpush1.msra.mxu0 0.0
    %2188 = vmatprep.subr.mxu0 0.0
    %2189 = vmatpush1.msra.mxu0 0.0
    %2190 = vmatprep.subr.mxu0 0.0
    %2191 = vmatpush1.msra.mxu0 0.0
    %2192 = vmatprep.subr.mxu0 0.0
    %2193 = vmatpush1.msra.mxu0 0.0
    %2194 = vmatprep.subr.mxu0 0.0
    %2195 = vmatpush1.msra.mxu0 0.0
    %2196 = vmatprep.subr.mxu0 0.0
    %2197 = vmatpush1.msra.mxu0 0.0
    %2198 = vmatprep.subr.mxu0 0.0
    %2199 = vmatpush1.msra.mxu0 0.0
    %2200 = vmatprep.subr.mxu0 0.0
    %2201 = vmatpush1.msra.mxu0 0.0
    %2202 = vmatprep.subr.mxu0 0.0
    %2203 = vmatpush1.msra.mxu0 0.0
    %2204 = vmatprep.subr.mxu0 0.0
    %2205 = vmatpush1.msra.mxu0 %v2143
    %2206 = vmatprep.subr.mxu0 0.0
    %2207 = vmatpush1.msra.mxu0 %v2142
    %2208 = vmatprep.subr.mxu0 0.0
    %2209 = vmatpush1.msra.mxu0 %v2141
    %2210 = vmatprep.subr.mxu0 0.0
    %2211 = vmatpush1.msra.mxu0 %v2140
    %2212 = vmatprep.subr.mxu0 0.0
    %2213 = vmatpush2.msra.mxu0 0.0
    %2214 = vmatprep.subr.mxu0 0.0
    %2215 = vmatpush2.msra.mxu0 0.0
    %2216 = vmatprep.subr.mxu0 0.0
    %2217 = vmatpush2.msra.mxu0 0.0
    %2218 = vmatprep.subr.mxu0 0.0
    %2219 = vmatpush2.msra.mxu0 0.0
    %2220 = vmatprep.subr.mxu0 0.0
    %2221 = vmatpush2.msra.mxu0 0.0
    %2222 = vmatprep.subr.mxu0 0.0
    %2223 = vmatpush2.msra.mxu0 0.0
    %2224 = vmatprep.subr.mxu0 0.0
    %2225 = vmatpush2.msra.mxu0 0.0
    %2226 = vmatprep.subr.mxu0 0.0
    %2227 = vmatpush2.msra.mxu0 0.0
    %2228 = vmatprep.subr.mxu0 0.0
    %2229 = vmatpush2.msra.mxu0 0.0
    %2230 = vmatprep.subr.mxu0 0.0
    %2231 = vmatpush2.msra.mxu0 0.0
    %2232 = vmatprep.subr.mxu0 0.0
    %2233 = vmatpush2.msra.mxu0 0.0
    %2234 = vmatprep.subr.mxu0 0.0
    %2235 = vmatpush2.msra.mxu0 0.0
    %2236 = vmatprep.subr.mxu0 0.0
    %2237 = vmatpush2.msra.mxu0 0.0
    %2238 = vmatprep.subr.mxu0 0.0
    %2239 = vmatpush2.msra.mxu0 0.0
    %2240 = vmatprep.subr.mxu0 0.0
    %2241 = vmatpush2.msra.mxu0 0.0
    %2242 = vmatprep.subr.mxu0 0.0
    %2243 = vmatpush2.msra.mxu0 0.0
    %2244 = vmatprep.mubr.f32.mxu0 0.0
    %2245 = vmatmul.mubr.f32.gmra.mxu0 %v2175
    %v2246 = vpop.f32.mrf.mxu0
    %v2247 = vadd.f32 %v2173, %v2246
    %v2248 = vpop.f32.mrf.mxu0
    %2249 = vmatprep.mubr.f32.mxu0 0.0
    %2250 = vmatmul.mubr.f32.gmra.mxu0 %v2178
    %v2251 = vpop.f32.mrf.mxu0
    %v2252 = vadd.f32 %v2173, %v2251
    %v2253 = vpop.f32.mrf.mxu0
    %2254 = vdwg.mxu0
    %v2255 = vlaneseq
    %v2256 = vshrl.u32 %v2255, 7
    %v2257 = vsub.s32 1, %v2256
    %v2258 = vrot.slane %v2168, %v2257
    %2259 = vmatprep.subr.mxu0 0.0
    %2260 = vmatpush1.msra.mxu0 0.0
    %2261 = vmatprep.subr.mxu0 0.0
    %2262 = vmatpush1.msra.mxu0 0.0
    %2263 = vmatprep.subr.mxu0 0.0
    %2264 = vmatpush1.msra.mxu0 0.0
    %2265 = vmatprep.subr.mxu0 0.0
    %2266 = vmatpush1.msra.mxu0 0.0
    %2267 = vmatprep.subr.mxu0 0.0
    %2268 = vmatpush1.msra.mxu0 0.0
    %2269 = vmatprep.subr.mxu0 0.0
    %2270 = vmatpush1.msra.mxu0 0.0
    %2271 = vmatprep.subr.mxu0 0.0
    %2272 = vmatpush1.msra.mxu0 0.0
    %2273 = vmatprep.subr.mxu0 0.0
    %2274 = vmatpush1.msra.mxu0 0.0
    %2275 = vmatprep.subr.mxu0 0.0
    %2276 = vmatpush1.msra.mxu0 0.0
    %2277 = vmatprep.subr.mxu0 0.0
    %2278 = vmatpush1.msra.mxu0 0.0
    %2279 = vmatprep.subr.mxu0 0.0
    %2280 = vmatpush1.msra.mxu0 0.0
    %2281 = vmatprep.subr.mxu0 0.0
    %2282 = vmatpush1.msra.mxu0 0.0
    %2283 = vmatprep.subr.mxu0 0.0
    %2284 = vmatpush1.msra.mxu0 %v2147
    %2285 = vmatprep.subr.mxu0 0.0
    %2286 = vmatpush1.msra.mxu0 %v2146
    %2287 = vmatprep.subr.mxu0 0.0
    %2288 = vmatpush1.msra.mxu0 %v2145
    %2289 = vmatprep.subr.mxu0 0.0
    %2290 = vmatpush1.msra.mxu0 %v2144
    %2291 = vmatprep.subr.mxu0 0.0
    %2292 = vmatpush2.msra.mxu0 0.0
    %2293 = vmatprep.subr.mxu0 0.0
    %2294 = vmatpush2.msra.mxu0 0.0
    %2295 = vmatprep.subr.mxu0 0.0
    %2296 = vmatpush2.msra.mxu0 0.0
    %2297 = vmatprep.subr.mxu0 0.0
    %2298 = vmatpush2.msra.mxu0 0.0
    %2299 = vmatprep.subr.mxu0 0.0
    %2300 = vmatpush2.msra.mxu0 0.0
    %2301 = vmatprep.subr.mxu0 0.0
    %2302 = vmatpush2.msra.mxu0 0.0
    %2303 = vmatprep.subr.mxu0 0.0
    %2304 = vmatpush2.msra.mxu0 0.0
    %2305 = vmatprep.subr.mxu0 0.0
    %2306 = vmatpush2.msra.mxu0 0.0
    %2307 = vmatprep.subr.mxu0 0.0
    %2308 = vmatpush2.msra.mxu0 0.0
    %2309 = vmatprep.subr.mxu0 0.0
    %2310 = vmatpush2.msra.mxu0 0.0
    %2311 = vmatprep.subr.mxu0 0.0
    %2312 = vmatpush2.msra.mxu0 0.0
    %2313 = vmatprep.subr.mxu0 0.0
    %2314 = vmatpush2.msra.mxu0 0.0
    %2315 = vmatprep.subr.mxu0 0.0
    %2316 = vmatpush2.msra.mxu0 0.0
    %2317 = vmatprep.subr.mxu0 0.0
    %2318 = vmatpush2.msra.mxu0 0.0
    %2319 = vmatprep.subr.mxu0 0.0
    %2320 = vmatpush2.msra.mxu0 0.0
    %2321 = vmatprep.subr.mxu0 0.0
    %2322 = vmatpush2.msra.mxu0 0.0
    %2323 = vmatprep.mubr.f32.mxu0 0.0
    %2324 = vmatmul.mubr.f32.gmra.mxu0 %v2175
    %v2325 = vpop.f32.mrf.mxu0
    %v2326 = vadd.f32 %v2258, %v2325
    %v2327 = vpop.f32.mrf.mxu0
    %2328 = vmatprep.mubr.f32.mxu0 0.0
    %2329 = vmatmul.mubr.f32.gmra.mxu0 %v2178
    %v2330 = vpop.f32.mrf.mxu0
    %v2331 = vadd.f32 %v2258, %v2330
    %v2332 = vpop.f32.mrf.mxu0
    %2333 = vdwg.mxu0
    %v2334 = vlaneseq
    %v2335 = vshrl.u32 %v2334, 7
    %v2336 = vsub.s32 2, %v2335
    %v2337 = vrot.slane %v2168, %v2336
    %2338 = vmatprep.subr.mxu0 0.0
    %2339 = vmatpush1.msra.mxu0 0.0
    %2340 = vmatprep.subr.mxu0 0.0
    %2341 = vmatpush1.msra.mxu0 0.0
    %2342 = vmatprep.subr.mxu0 0.0
    %2343 = vmatpush1.msra.mxu0 0.0
    %2344 = vmatprep.subr.mxu0 0.0
    %2345 = vmatpush1.msra.mxu0 0.0
    %2346 = vmatprep.subr.mxu0 0.0
    %2347 = vmatpush1.msra.mxu0 0.0
    %2348 = vmatprep.subr.mxu0 0.0
    %2349 = vmatpush1.msra.mxu0 0.0
    %2350 = vmatprep.subr.mxu0 0.0
    %2351 = vmatpush1.msra.mxu0 0.0
    %2352 = vmatprep.subr.mxu0 0.0
    %2353 = vmatpush1.msra.mxu0 0.0
    %2354 = vmatprep.subr.mxu0 0.0
    %2355 = vmatpush1.msra.mxu0 0.0
    %2356 = vmatprep.subr.mxu0 0.0
    %2357 = vmatpush1.msra.mxu0 0.0
    %2358 = vmatprep.subr.mxu0 0.0
    %2359 = vmatpush1.msra.mxu0 0.0
    %2360 = vmatprep.subr.mxu0 0.0
    %2361 = vmatpush1.msra.mxu0 0.0
    %2362 = vmatprep.subr.mxu0 0.0
    %2363 = vmatpush1.msra.mxu0 %v2151
    %2364 = vmatprep.subr.mxu0 0.0
    %2365 = vmatpush1.msra.mxu0 %v2150
    %2366 = vmatprep.subr.mxu0 0.0
    %2367 = vmatpush1.msra.mxu0 %v2149
    %2368 = vmatprep.subr.mxu0 0.0
    %2369 = vmatpush1.msra.mxu0 %v2148
    %2370 = vmatprep.subr.mxu0 0.0
    %2371 = vmatpush2.msra.mxu0 0.0
    %2372 = vmatprep.subr.mxu0 0.0
    %2373 = vmatpush2.msra.mxu0 0.0
    %2374 = vmatprep.subr.mxu0 0.0
    %2375 = vmatpush2.msra.mxu0 0.0
    %2376 = vmatprep.subr.mxu0 0.0
    %2377 = vmatpush2.msra.mxu0 0.0
    %2378 = vmatprep.subr.mxu0 0.0
    %2379 = vmatpush2.msra.mxu0 0.0
    %2380 = vmatprep.subr.mxu0 0.0
    %2381 = vmatpush2.msra.mxu0 0.0
    %2382 = vmatprep.subr.mxu0 0.0
    %2383 = vmatpush2.msra.mxu0 0.0
    %2384 = vmatprep.subr.mxu0 0.0
    %2385 = vmatpush2.msra.mxu0 0.0
    %2386 = vmatprep.subr.mxu0 0.0
    %2387 = vmatpush2.msra.mxu0 0.0
    %2388 = vmatprep.subr.mxu0 0.0
    %2389 = vmatpush2.msra.mxu0 0.0
    %2390 = vmatprep.subr.mxu0 0.0
    %2391 = vmatpush2.msra.mxu0 0.0
    %2392 = vmatprep.subr.mxu0 0.0
    %2393 = vmatpush2.msra.mxu0 0.0
    %2394 = vmatprep.subr.mxu0 0.0
    %2395 = vmatpush2.msra.mxu0 0.0
    %2396 = vmatprep.subr.mxu0 0.0
    %2397 = vmatpush2.msra.mxu0 0.0
    %2398 = vmatprep.subr.mxu0 0.0
    %2399 = vmatpush2.msra.mxu0 0.0
    %2400 = vmatprep.subr.mxu0 0.0
    %2401 = vmatpush2.msra.mxu0 0.0
    %2402 = vmatprep.mubr.f32.mxu0 0.0
    %2403 = vmatmul.mubr.f32.gmra.mxu0 %v2175
    %v2404 = vpop.f32.mrf.mxu0
    %v2405 = vadd.f32 %v2337, %v2404
    %v2406 = vpop.f32.mrf.mxu0
    %2407 = vmatprep.mubr.f32.mxu0 0.0
    %2408 = vmatmul.mubr.f32.gmra.mxu0 %v2178
    %v2409 = vpop.f32.mrf.mxu0
    %v2410 = vadd.f32 %v2337, %v2409
    %v2411 = vpop.f32.mrf.mxu0
    %2412 = vdwg.mxu0
    %2415 = vrot.lane.b32.xlu0 %v2247, 120
    %v2416 = vpop.permute.xlu0 %2415
    %2417 = vrot.lane.b32.xlu0 %v2252, 120
    %v2418 = vpop.permute.xlu0 %2417
    %2419 = vrot.lane.b32.xlu0 %v2247, 112
    %v2420 = vpop.permute.xlu0 %2419
    %2421 = vrot.lane.b32.xlu0 %v2252, 112
    %v2422 = vpop.permute.xlu0 %2421
    %2423 = vrot.lane.b32.xlu0 %v2247, 104
    %v2424 = vpop.permute.xlu0 %2423
    %2425 = vrot.lane.b32.xlu0 %v2252, 104
    %v2426 = vpop.permute.xlu0 %2425
    %2429 = vrot.lane.b32.xlu0 %v2326, 120
    %v2430 = vpop.permute.xlu0 %2429
    %2431 = vrot.lane.b32.xlu0 %v2331, 120
    %v2432 = vpop.permute.xlu0 %2431
    %2433 = vrot.lane.b32.xlu0 %v2326, 112
    %v2434 = vpop.permute.xlu0 %2433
    %2435 = vrot.lane.b32.xlu0 %v2331, 112
    %v2436 = vpop.permute.xlu0 %2435
    %2437 = vrot.lane.b32.xlu0 %v2326, 104
    %v2438 = vpop.permute.xlu0 %2437
    %2439 = vrot.lane.b32.xlu0 %v2331, 104
    %v2440 = vpop.permute.xlu0 %2439
    %2443 = vrot.lane.b32.xlu0 %v2405, 120
    %v2444 = vpop.permute.xlu0 %2443
    %2445 = vrot.lane.b32.xlu0 %v2410, 120
    %v2446 = vpop.permute.xlu0 %2445
    %2449 = vrot.lane.b32.xlu0 %v2405, 112
    %v2450 = vpop.permute.xlu0 %2449
    %2451 = vrot.lane.b32.xlu0 %v2410, 112
    %v2452 = vpop.permute.xlu0 %2451
    %2455 = vrot.lane.b32.xlu0 %v2405, 104
    %v2456 = vpop.permute.xlu0 %2455
    %2457 = vrot.lane.b32.xlu0 %v2410, 104
    %v2458 = vpop.permute.xlu0 %2457
    %v2461 = vsel %vm504, %v2247, 0
    %v2463 = vsel %vm504, %v2326, 0
    %2465 = vmatprep.subr.mxu0 0.0
    %2466 = vmatpush1.xpose.msra.mxu0 0.0
    %2467 = vmatprep.subr.mxu0 0.0
    %2468 = vmatpush1.xpose.msra.mxu0 0.0
    %2469 = vmatprep.subr.mxu0 0.0
    %2470 = vmatpush1.xpose.msra.mxu0 0.0
    %2471 = vmatprep.subr.mxu0 0.0
    %2472 = vmatpush1.xpose.msra.mxu0 0.0
    %2473 = vmatprep.subr.mxu0 0.0
    %2474 = vmatpush1.xpose.msra.mxu0 0.0
    %2475 = vmatprep.subr.mxu0 0.0
    %2476 = vmatpush1.xpose.msra.mxu0 0.0
    %2477 = vmatprep.subr.mxu0 0.0
    %2478 = vmatpush1.xpose.msra.mxu0 0.0
    %2479 = vmatprep.subr.mxu0 0.0
    %2480 = vmatpush1.xpose.msra.mxu0 0.0
    %2481 = vmatprep.subr.mxu0 0.0
    %2482 = vmatpush1.xpose.msra.mxu0 0.0
    %2483 = vmatprep.subr.mxu0 0.0
    %2484 = vmatpush1.xpose.msra.mxu0 0.0
    %2485 = vmatprep.subr.mxu0 0.0
    %2486 = vmatpush1.xpose.msra.mxu0 0.0
    %2487 = vmatprep.subr.mxu0 0.0
    %2488 = vmatpush1.xpose.msra.mxu0 0.0
    %2489 = vmatprep.subr.mxu0 0.0
    %2490 = vmatpush1.xpose.msra.mxu0 0.0
    %2491 = vmatprep.subr.mxu0 0.0
    %2492 = vmatpush1.xpose.msra.mxu0 0.0
    %2493 = vmatprep.subr.mxu0 0.0
    %2494 = vmatpush1.xpose.msra.mxu0 0.0
    %2495 = vmatprep.subr.mxu0 0.0
    %2496 = vmatpush1.xpose.msra.mxu0 %v2463
    %2497 = vmatprep.subr.mxu0 0.0
    %2498 = vmatpush2.xpose.msra.mxu0 0.0
    %2499 = vmatprep.subr.mxu0 0.0
    %2500 = vmatpush2.xpose.msra.mxu0 0.0
    %2501 = vmatprep.subr.mxu0 0.0
    %2502 = vmatpush2.xpose.msra.mxu0 0.0
    %2503 = vmatprep.subr.mxu0 0.0
    %2504 = vmatpush2.xpose.msra.mxu0 0.0
    %2505 = vmatprep.subr.mxu0 0.0
    %2506 = vmatpush2.xpose.msra.mxu0 0.0
    %2507 = vmatprep.subr.mxu0 0.0
    %2508 = vmatpush2.xpose.msra.mxu0 0.0
    %2509 = vmatprep.subr.mxu0 0.0
    %2510 = vmatpush2.xpose.msra.mxu0 0.0
    %2511 = vmatprep.subr.mxu0 0.0
    %2512 = vmatpush2.xpose.msra.mxu0 0.0
    %2513 = vmatprep.subr.mxu0 0.0
    %2514 = vmatpush2.xpose.msra.mxu0 0.0
    %2515 = vmatprep.subr.mxu0 0.0
    %2516 = vmatpush2.xpose.msra.mxu0 0.0
    %2517 = vmatprep.subr.mxu0 0.0
    %2518 = vmatpush2.xpose.msra.mxu0 0.0
    %2519 = vmatprep.subr.mxu0 0.0
    %2520 = vmatpush2.xpose.msra.mxu0 0.0
    %2521 = vmatprep.subr.mxu0 0.0
    %2522 = vmatpush2.xpose.msra.mxu0 0.0
    %2523 = vmatprep.subr.mxu0 0.0
    %2524 = vmatpush2.xpose.msra.mxu0 0.0
    %2525 = vmatprep.subr.mxu0 0.0
    %2526 = vmatpush2.xpose.msra.mxu0 0.0
    %2527 = vmatprep.subr.mxu0 0.0
    %2528 = vmatpush2.xpose.msra.mxu0 0.0
    %2529 = vmatprep.mubr.f32.mxu0 0.0
    %2530 = vmatmul.mubr.f32.gmra.mxu0 %v2461
    %v2531 = vpop.f32.mrf.mxu0
    %v2532 = vadd.f32 0.0, %v2531
    %v2533 = vpop.f32.mrf.mxu0
    %2534 = vdwg.mxu0
    %v2535 = vsel %vm504, %v2252, 0
    %v2537 = vsel %vm504, %v2331, 0
    %2539 = vmatprep.subr.mxu0 0.0
    %2540 = vmatpush1.xpose.msra.mxu0 0.0
    %2541 = vmatprep.subr.mxu0 0.0
    %2542 = vmatpush1.xpose.msra.mxu0 0.0
    %2543 = vmatprep.subr.mxu0 0.0
    %2544 = vmatpush1.xpose.msra.mxu0 0.0
    %2545 = vmatprep.subr.mxu0 0.0
    %2546 = vmatpush1.xpose.msra.mxu0 0.0
    %2547 = vmatprep.subr.mxu0 0.0
    %2548 = vmatpush1.xpose.msra.mxu0 0.0
    %2549 = vmatprep.subr.mxu0 0.0
    %2550 = vmatpush1.xpose.msra.mxu0 0.0
    %2551 = vmatprep.subr.mxu0 0.0
    %2552 = vmatpush1.xpose.msra.mxu0 0.0
    %2553 = vmatprep.subr.mxu0 0.0
    %2554 = vmatpush1.xpose.msra.mxu0 0.0
    %2555 = vmatprep.subr.mxu0 0.0
    %2556 = vmatpush1.xpose.msra.mxu0 0.0
    %2557 = vmatprep.subr.mxu0 0.0
    %2558 = vmatpush1.xpose.msra.mxu0 0.0
    %2559 = vmatprep.subr.mxu0 0.0
    %2560 = vmatpush1.xpose.msra.mxu0 0.0
    %2561 = vmatprep.subr.mxu0 0.0
    %2562 = vmatpush1.xpose.msra.mxu0 0.0
    %2563 = vmatprep.subr.mxu0 0.0
    %2564 = vmatpush1.xpose.msra.mxu0 0.0
    %2565 = vmatprep.subr.mxu0 0.0
    %2566 = vmatpush1.xpose.msra.mxu0 0.0
    %2567 = vmatprep.subr.mxu0 0.0
    %2568 = vmatpush1.xpose.msra.mxu0 0.0
    %2569 = vmatprep.subr.mxu0 0.0
    %2570 = vmatpush1.xpose.msra.mxu0 %v2537
    %2571 = vmatprep.subr.mxu0 0.0
    %2572 = vmatpush2.xpose.msra.mxu0 0.0
    %2573 = vmatprep.subr.mxu0 0.0
    %2574 = vmatpush2.xpose.msra.mxu0 0.0
    %2575 = vmatprep.subr.mxu0 0.0
    %2576 = vmatpush2.xpose.msra.mxu0 0.0
    %2577 = vmatprep.subr.mxu0 0.0
    %2578 = vmatpush2.xpose.msra.mxu0 0.0
    %2579 = vmatprep.subr.mxu0 0.0
    %2580 = vmatpush2.xpose.msra.mxu0 0.0
    %2581 = vmatprep.subr.mxu0 0.0
    %2582 = vmatpush2.xpose.msra.mxu0 0.0
    %2583 = vmatprep.subr.mxu0 0.0
    %2584 = vmatpush2.xpose.msra.mxu0 0.0
    %2585 = vmatprep.subr.mxu0 0.0
    %2586 = vmatpush2.xpose.msra.mxu0 0.0
    %2587 = vmatprep.subr.mxu0 0.0
    %2588 = vmatpush2.xpose.msra.mxu0 0.0
    %2589 = vmatprep.subr.mxu0 0.0
    %2590 = vmatpush2.xpose.msra.mxu0 0.0
    %2591 = vmatprep.subr.mxu0 0.0
    %2592 = vmatpush2.xpose.msra.mxu0 0.0
    %2593 = vmatprep.subr.mxu0 0.0
    %2594 = vmatpush2.xpose.msra.mxu0 0.0
    %2595 = vmatprep.subr.mxu0 0.0
    %2596 = vmatpush2.xpose.msra.mxu0 0.0
    %2597 = vmatprep.subr.mxu0 0.0
    %2598 = vmatpush2.xpose.msra.mxu0 0.0
    %2599 = vmatprep.subr.mxu0 0.0
    %2600 = vmatpush2.xpose.msra.mxu0 0.0
    %2601 = vmatprep.subr.mxu0 0.0
    %2602 = vmatpush2.xpose.msra.mxu0 0.0
    %2603 = vmatprep.mubr.f32.mxu0 0.0
    %2604 = vmatmul.mubr.f32.gmra.mxu0 %v2535
    %v2605 = vpop.f32.mrf.mxu0
    %v2606 = vadd.f32 0.0, %v2605
    %v2607 = vpop.f32.mrf.mxu0
    %2608 = vdwg.mxu0
    %v2609 = vsel %vm504, %v2416, 0
    %v2611 = vsel %vm504, %v2430, 0
    %2613 = vmatprep.subr.mxu0 0.0
    %2614 = vmatpush1.xpose.msra.mxu0 0.0
    %2615 = vmatprep.subr.mxu0 0.0
    %2616 = vmatpush1.xpose.msra.mxu0 0.0
    %2617 = vmatprep.subr.mxu0 0.0
    %2618 = vmatpush1.xpose.msra.mxu0 0.0
    %2619 = vmatprep.subr.mxu0 0.0
    %2620 = vmatpush1.xpose.msra.mxu0 0.0
    %2621 = vmatprep.subr.mxu0 0.0
    %2622 = vmatpush1.xpose.msra.mxu0 0.0
    %2623 = vmatprep.subr.mxu0 0.0
    %2624 = vmatpush1.xpose.msra.mxu0 0.0
    %2625 = vmatprep.subr.mxu0 0.0
    %2626 = vmatpush1.xpose.msra.mxu0 0.0
    %2627 = vmatprep.subr.mxu0 0.0
    %2628 = vmatpush1.xpose.msra.mxu0 0.0
    %2629 = vmatprep.subr.mxu0 0.0
    %2630 = vmatpush1.xpose.msra.mxu0 0.0
    %2631 = vmatprep.subr.mxu0 0.0
    %2632 = vmatpush1.xpose.msra.mxu0 0.0
    %2633 = vmatprep.subr.mxu0 0.0
    %2634 = vmatpush1.xpose.msra.mxu0 0.0
    %2635 = vmatprep.subr.mxu0 0.0
    %2636 = vmatpush1.xpose.msra.mxu0 0.0
    %2637 = vmatprep.subr.mxu0 0.0
    %2638 = vmatpush1.xpose.msra.mxu0 0.0
    %2639 = vmatprep.subr.mxu0 0.0
    %2640 = vmatpush1.xpose.msra.mxu0 0.0
    %2641 = vmatprep.subr.mxu0 0.0
    %2642 = vmatpush1.xpose.msra.mxu0 0.0
    %2643 = vmatprep.subr.mxu0 0.0
    %2644 = vmatpush1.xpose.msra.mxu0 %v2611
    %2645 = vmatprep.subr.mxu0 0.0
    %2646 = vmatpush2.xpose.msra.mxu0 0.0
    %2647 = vmatprep.subr.mxu0 0.0
    %2648 = vmatpush2.xpose.msra.mxu0 0.0
    %2649 = vmatprep.subr.mxu0 0.0
    %2650 = vmatpush2.xpose.msra.mxu0 0.0
    %2651 = vmatprep.subr.mxu0 0.0
    %2652 = vmatpush2.xpose.msra.mxu0 0.0
    %2653 = vmatprep.subr.mxu0 0.0
    %2654 = vmatpush2.xpose.msra.mxu0 0.0
    %2655 = vmatprep.subr.mxu0 0.0
    %2656 = vmatpush2.xpose.msra.mxu0 0.0
    %2657 = vmatprep.subr.mxu0 0.0
    %2658 = vmatpush2.xpose.msra.mxu0 0.0
    %2659 = vmatprep.subr.mxu0 0.0
    %2660 = vmatpush2.xpose.msra.mxu0 0.0
    %2661 = vmatprep.subr.mxu0 0.0
    %2662 = vmatpush2.xpose.msra.mxu0 0.0
    %2663 = vmatprep.subr.mxu0 0.0
    %2664 = vmatpush2.xpose.msra.mxu0 0.0
    %2665 = vmatprep.subr.mxu0 0.0
    %2666 = vmatpush2.xpose.msra.mxu0 0.0
    %2667 = vmatprep.subr.mxu0 0.0
    %2668 = vmatpush2.xpose.msra.mxu0 0.0
    %2669 = vmatprep.subr.mxu0 0.0
    %2670 = vmatpush2.xpose.msra.mxu0 0.0
    %2671 = vmatprep.subr.mxu0 0.0
    %2672 = vmatpush2.xpose.msra.mxu0 0.0
    %2673 = vmatprep.subr.mxu0 0.0
    %2674 = vmatpush2.xpose.msra.mxu0 0.0
    %2675 = vmatprep.subr.mxu0 0.0
    %2676 = vmatpush2.xpose.msra.mxu0 0.0
    %2677 = vmatprep.mubr.f32.mxu0 0.0
    %2678 = vmatmul.mubr.f32.gmra.mxu0 %v2609
    %v2679 = vpop.f32.mrf.mxu0
    %v2680 = vadd.f32 0.0, %v2679
    %v2681 = vpop.f32.mrf.mxu0
    %2682 = vdwg.mxu0
    %v2683 = vsel %vm504, %v2418, 0
    %v2685 = vsel %vm504, %v2432, 0
    %2687 = vmatprep.subr.mxu0 0.0
    %2688 = vmatpush1.xpose.msra.mxu0 0.0
    %2689 = vmatprep.subr.mxu0 0.0
    %2690 = vmatpush1.xpose.msra.mxu0 0.0
    %2691 = vmatprep.subr.mxu0 0.0
    %2692 = vmatpush1.xpose.msra.mxu0 0.0
    %2693 = vmatprep.subr.mxu0 0.0
    %2694 = vmatpush1.xpose.msra.mxu0 0.0
    %2695 = vmatprep.subr.mxu0 0.0
    %2696 = vmatpush1.xpose.msra.mxu0 0.0
    %2697 = vmatprep.subr.mxu0 0.0
    %2698 = vmatpush1.xpose.msra.mxu0 0.0
    %2699 = vmatprep.subr.mxu0 0.0
    %2700 = vmatpush1.xpose.msra.mxu0 0.0
    %2701 = vmatprep.subr.mxu0 0.0
    %2702 = vmatpush1.xpose.msra.mxu0 0.0
    %2703 = vmatprep.subr.mxu0 0.0
    %2704 = vmatpush1.xpose.msra.mxu0 0.0
    %2705 = vmatprep.subr.mxu0 0.0
    %2706 = vmatpush1.xpose.msra.mxu0 0.0
    %2707 = vmatprep.subr.mxu0 0.0
    %2708 = vmatpush1.xpose.msra.mxu0 0.0
    %2709 = vmatprep.subr.mxu0 0.0
    %2710 = vmatpush1.xpose.msra.mxu0 0.0
    %2711 = vmatprep.subr.mxu0 0.0
    %2712 = vmatpush1.xpose.msra.mxu0 0.0
    %2713 = vmatprep.subr.mxu0 0.0
    %2714 = vmatpush1.xpose.msra.mxu0 0.0
    %2715 = vmatprep.subr.mxu0 0.0
    %2716 = vmatpush1.xpose.msra.mxu0 0.0
    %2717 = vmatprep.subr.mxu0 0.0
    %2718 = vmatpush1.xpose.msra.mxu0 %v2685
    %2719 = vmatprep.subr.mxu0 0.0
    %2720 = vmatpush2.xpose.msra.mxu0 0.0
    %2721 = vmatprep.subr.mxu0 0.0
    %2722 = vmatpush2.xpose.msra.mxu0 0.0
    %2723 = vmatprep.subr.mxu0 0.0
    %2724 = vmatpush2.xpose.msra.mxu0 0.0
    %2725 = vmatprep.subr.mxu0 0.0
    %2726 = vmatpush2.xpose.msra.mxu0 0.0
    %2727 = vmatprep.subr.mxu0 0.0
    %2728 = vmatpush2.xpose.msra.mxu0 0.0
    %2729 = vmatprep.subr.mxu0 0.0
    %2730 = vmatpush2.xpose.msra.mxu0 0.0
    %2731 = vmatprep.subr.mxu0 0.0
    %2732 = vmatpush2.xpose.msra.mxu0 0.0
    %2733 = vmatprep.subr.mxu0 0.0
    %2734 = vmatpush2.xpose.msra.mxu0 0.0
    %2735 = vmatprep.subr.mxu0 0.0
    %2736 = vmatpush2.xpose.msra.mxu0 0.0
    %2737 = vmatprep.subr.mxu0 0.0
    %2738 = vmatpush2.xpose.msra.mxu0 0.0
    %2739 = vmatprep.subr.mxu0 0.0
    %2740 = vmatpush2.xpose.msra.mxu0 0.0
    %2741 = vmatprep.subr.mxu0 0.0
    %2742 = vmatpush2.xpose.msra.mxu0 0.0
    %2743 = vmatprep.subr.mxu0 0.0
    %2744 = vmatpush2.xpose.msra.mxu0 0.0
    %2745 = vmatprep.subr.mxu0 0.0
    %2746 = vmatpush2.xpose.msra.mxu0 0.0
    %2747 = vmatprep.subr.mxu0 0.0
    %2748 = vmatpush2.xpose.msra.mxu0 0.0
    %2749 = vmatprep.subr.mxu0 0.0
    %2750 = vmatpush2.xpose.msra.mxu0 0.0
    %2751 = vmatprep.mubr.f32.mxu0 0.0
    %2752 = vmatmul.mubr.f32.gmra.mxu0 %v2683
    %v2753 = vpop.f32.mrf.mxu0
    %v2754 = vadd.f32 0.0, %v2753
    %v2755 = vpop.f32.mrf.mxu0
    %2756 = vdwg.mxu0
    %v2757 = vsel %vm504, %v2420, 0
    %v2759 = vsel %vm504, %v2434, 0
    %2761 = vmatprep.subr.mxu0 0.0
    %2762 = vmatpush1.xpose.msra.mxu0 0.0
    %2763 = vmatprep.subr.mxu0 0.0
    %2764 = vmatpush1.xpose.msra.mxu0 0.0
    %2765 = vmatprep.subr.mxu0 0.0
    %2766 = vmatpush1.xpose.msra.mxu0 0.0
    %2767 = vmatprep.subr.mxu0 0.0
    %2768 = vmatpush1.xpose.msra.mxu0 0.0
    %2769 = vmatprep.subr.mxu0 0.0
    %2770 = vmatpush1.xpose.msra.mxu0 0.0
    %2771 = vmatprep.subr.mxu0 0.0
    %2772 = vmatpush1.xpose.msra.mxu0 0.0
    %2773 = vmatprep.subr.mxu0 0.0
    %2774 = vmatpush1.xpose.msra.mxu0 0.0
    %2775 = vmatprep.subr.mxu0 0.0
    %2776 = vmatpush1.xpose.msra.mxu0 0.0
    %2777 = vmatprep.subr.mxu0 0.0
    %2778 = vmatpush1.xpose.msra.mxu0 0.0
    %2779 = vmatprep.subr.mxu0 0.0
    %2780 = vmatpush1.xpose.msra.mxu0 0.0
    %2781 = vmatprep.subr.mxu0 0.0
    %2782 = vmatpush1.xpose.msra.mxu0 0.0
    %2783 = vmatprep.subr.mxu0 0.0
    %2784 = vmatpush1.xpose.msra.mxu0 0.0
    %2785 = vmatprep.subr.mxu0 0.0
    %2786 = vmatpush1.xpose.msra.mxu0 0.0
    %2787 = vmatprep.subr.mxu0 0.0
    %2788 = vmatpush1.xpose.msra.mxu0 0.0
    %2789 = vmatprep.subr.mxu0 0.0
    %2790 = vmatpush1.xpose.msra.mxu0 0.0
    %2791 = vmatprep.subr.mxu0 0.0
    %2792 = vmatpush1.xpose.msra.mxu0 %v2759
    %2793 = vmatprep.subr.mxu0 0.0
    %2794 = vmatpush2.xpose.msra.mxu0 0.0
    %2795 = vmatprep.subr.mxu0 0.0
    %2796 = vmatpush2.xpose.msra.mxu0 0.0
    %2797 = vmatprep.subr.mxu0 0.0
    %2798 = vmatpush2.xpose.msra.mxu0 0.0
    %2799 = vmatprep.subr.mxu0 0.0
    %2800 = vmatpush2.xpose.msra.mxu0 0.0
    %2801 = vmatprep.subr.mxu0 0.0
    %2802 = vmatpush2.xpose.msra.mxu0 0.0
    %2803 = vmatprep.subr.mxu0 0.0
    %2804 = vmatpush2.xpose.msra.mxu0 0.0
    %2805 = vmatprep.subr.mxu0 0.0
    %2806 = vmatpush2.xpose.msra.mxu0 0.0
    %2807 = vmatprep.subr.mxu0 0.0
    %2808 = vmatpush2.xpose.msra.mxu0 0.0
    %2809 = vmatprep.subr.mxu0 0.0
    %2810 = vmatpush2.xpose.msra.mxu0 0.0
    %2811 = vmatprep.subr.mxu0 0.0
    %2812 = vmatpush2.xpose.msra.mxu0 0.0
    %2813 = vmatprep.subr.mxu0 0.0
    %2814 = vmatpush2.xpose.msra.mxu0 0.0
    %2815 = vmatprep.subr.mxu0 0.0
    %2816 = vmatpush2.xpose.msra.mxu0 0.0
    %2817 = vmatprep.subr.mxu0 0.0
    %2818 = vmatpush2.xpose.msra.mxu0 0.0
    %2819 = vmatprep.subr.mxu0 0.0
    %2820 = vmatpush2.xpose.msra.mxu0 0.0
    %2821 = vmatprep.subr.mxu0 0.0
    %2822 = vmatpush2.xpose.msra.mxu0 0.0
    %2823 = vmatprep.subr.mxu0 0.0
    %2824 = vmatpush2.xpose.msra.mxu0 0.0
    %2825 = vmatprep.mubr.f32.mxu0 0.0
    %2826 = vmatmul.mubr.f32.gmra.mxu0 %v2757
    %v2827 = vpop.f32.mrf.mxu0
    %v2828 = vadd.f32 0.0, %v2827
    %v2829 = vpop.f32.mrf.mxu0
    %2830 = vdwg.mxu0
    %v2831 = vsel %vm504, %v2422, 0
    %v2833 = vsel %vm504, %v2436, 0
    %2835 = vmatprep.subr.mxu0 0.0
    %2836 = vmatpush1.xpose.msra.mxu0 0.0
    %2837 = vmatprep.subr.mxu0 0.0
    %2838 = vmatpush1.xpose.msra.mxu0 0.0
    %2839 = vmatprep.subr.mxu0 0.0
    %2840 = vmatpush1.xpose.msra.mxu0 0.0
    %2841 = vmatprep.subr.mxu0 0.0
    %2842 = vmatpush1.xpose.msra.mxu0 0.0
    %2843 = vmatprep.subr.mxu0 0.0
    %2844 = vmatpush1.xpose.msra.mxu0 0.0
    %2845 = vmatprep.subr.mxu0 0.0
    %2846 = vmatpush1.xpose.msra.mxu0 0.0
    %2847 = vmatprep.subr.mxu0 0.0
    %2848 = vmatpush1.xpose.msra.mxu0 0.0
    %2849 = vmatprep.subr.mxu0 0.0
    %2850 = vmatpush1.xpose.msra.mxu0 0.0
    %2851 = vmatprep.subr.mxu0 0.0
    %2852 = vmatpush1.xpose.msra.mxu0 0.0
    %2853 = vmatprep.subr.mxu0 0.0
    %2854 = vmatpush1.xpose.msra.mxu0 0.0
    %2855 = vmatprep.subr.mxu0 0.0
    %2856 = vmatpush1.xpose.msra.mxu0 0.0
    %2857 = vmatprep.subr.mxu0 0.0
    %2858 = vmatpush1.xpose.msra.mxu0 0.0
    %2859 = vmatprep.subr.mxu0 0.0
    %2860 = vmatpush1.xpose.msra.mxu0 0.0
    %2861 = vmatprep.subr.mxu0 0.0
    %2862 = vmatpush1.xpose.msra.mxu0 0.0
    %2863 = vmatprep.subr.mxu0 0.0
    %2864 = vmatpush1.xpose.msra.mxu0 0.0
    %2865 = vmatprep.subr.mxu0 0.0
    %2866 = vmatpush1.xpose.msra.mxu0 %v2833
    %2867 = vmatprep.subr.mxu0 0.0
    %2868 = vmatpush2.xpose.msra.mxu0 0.0
    %2869 = vmatprep.subr.mxu0 0.0
    %2870 = vmatpush2.xpose.msra.mxu0 0.0
    %2871 = vmatprep.subr.mxu0 0.0
    %2872 = vmatpush2.xpose.msra.mxu0 0.0
    %2873 = vmatprep.subr.mxu0 0.0
    %2874 = vmatpush2.xpose.msra.mxu0 0.0
    %2875 = vmatprep.subr.mxu0 0.0
    %2876 = vmatpush2.xpose.msra.mxu0 0.0
    %2877 = vmatprep.subr.mxu0 0.0
    %2878 = vmatpush2.xpose.msra.mxu0 0.0
    %2879 = vmatprep.subr.mxu0 0.0
    %2880 = vmatpush2.xpose.msra.mxu0 0.0
    %2881 = vmatprep.subr.mxu0 0.0
    %2882 = vmatpush2.xpose.msra.mxu0 0.0
    %2883 = vmatprep.subr.mxu0 0.0
    %2884 = vmatpush2.xpose.msra.mxu0 0.0
    %2885 = vmatprep.subr.mxu0 0.0
    %2886 = vmatpush2.xpose.msra.mxu0 0.0
    %2887 = vmatprep.subr.mxu0 0.0
    %2888 = vmatpush2.xpose.msra.mxu0 0.0
    %2889 = vmatprep.subr.mxu0 0.0
    %2890 = vmatpush2.xpose.msra.mxu0 0.0
    %2891 = vmatprep.subr.mxu0 0.0
    %2892 = vmatpush2.xpose.msra.mxu0 0.0
    %2893 = vmatprep.subr.mxu0 0.0
    %2894 = vmatpush2.xpose.msra.mxu0 0.0
    %2895 = vmatprep.subr.mxu0 0.0
    %2896 = vmatpush2.xpose.msra.mxu0 0.0
    %2897 = vmatprep.subr.mxu0 0.0
    %2898 = vmatpush2.xpose.msra.mxu0 0.0
    %2899 = vmatprep.mubr.f32.mxu0 0.0
    %2900 = vmatmul.mubr.f32.gmra.mxu0 %v2831
    %v2901 = vpop.f32.mrf.mxu0
    %v2902 = vadd.f32 0.0, %v2901
    %v2903 = vpop.f32.mrf.mxu0
    %2904 = vdwg.mxu0
    %v2905 = vsel %vm504, %v2424, 0
    %v2907 = vsel %vm504, %v2438, 0
    %2909 = vmatprep.subr.mxu0 0.0
    %2910 = vmatpush1.xpose.msra.mxu0 0.0
    %2911 = vmatprep.subr.mxu0 0.0
    %2912 = vmatpush1.xpose.msra.mxu0 0.0
    %2913 = vmatprep.subr.mxu0 0.0
    %2914 = vmatpush1.xpose.msra.mxu0 0.0
    %2915 = vmatprep.subr.mxu0 0.0
    %2916 = vmatpush1.xpose.msra.mxu0 0.0
    %2917 = vmatprep.subr.mxu0 0.0
    %2918 = vmatpush1.xpose.msra.mxu0 0.0
    %2919 = vmatprep.subr.mxu0 0.0
    %2920 = vmatpush1.xpose.msra.mxu0 0.0
    %2921 = vmatprep.subr.mxu0 0.0
    %2922 = vmatpush1.xpose.msra.mxu0 0.0
    %2923 = vmatprep.subr.mxu0 0.0
    %2924 = vmatpush1.xpose.msra.mxu0 0.0
    %2925 = vmatprep.subr.mxu0 0.0
    %2926 = vmatpush1.xpose.msra.mxu0 0.0
    %2927 = vmatprep.subr.mxu0 0.0
    %2928 = vmatpush1.xpose.msra.mxu0 0.0
    %2929 = vmatprep.subr.mxu0 0.0
    %2930 = vmatpush1.xpose.msra.mxu0 0.0
    %2931 = vmatprep.subr.mxu0 0.0
    %2932 = vmatpush1.xpose.msra.mxu0 0.0
    %2933 = vmatprep.subr.mxu0 0.0
    %2934 = vmatpush1.xpose.msra.mxu0 0.0
    %2935 = vmatprep.subr.mxu0 0.0
    %2936 = vmatpush1.xpose.msra.mxu0 0.0
    %2937 = vmatprep.subr.mxu0 0.0
    %2938 = vmatpush1.xpose.msra.mxu0 0.0
    %2939 = vmatprep.subr.mxu0 0.0
    %2940 = vmatpush1.xpose.msra.mxu0 %v2907
    %2941 = vmatprep.subr.mxu0 0.0
    %2942 = vmatpush2.xpose.msra.mxu0 0.0
    %2943 = vmatprep.subr.mxu0 0.0
    %2944 = vmatpush2.xpose.msra.mxu0 0.0
    %2945 = vmatprep.subr.mxu0 0.0
    %2946 = vmatpush2.xpose.msra.mxu0 0.0
    %2947 = vmatprep.subr.mxu0 0.0
    %2948 = vmatpush2.xpose.msra.mxu0 0.0
    %2949 = vmatprep.subr.mxu0 0.0
    %2950 = vmatpush2.xpose.msra.mxu0 0.0
    %2951 = vmatprep.subr.mxu0 0.0
    %2952 = vmatpush2.xpose.msra.mxu0 0.0
    %2953 = vmatprep.subr.mxu0 0.0
    %2954 = vmatpush2.xpose.msra.mxu0 0.0
    %2955 = vmatprep.subr.mxu0 0.0
    %2956 = vmatpush2.xpose.msra.mxu0 0.0
    %2957 = vmatprep.subr.mxu0 0.0
    %2958 = vmatpush2.xpose.msra.mxu0 0.0
    %2959 = vmatprep.subr.mxu0 0.0
    %2960 = vmatpush2.xpose.msra.mxu0 0.0
    %2961 = vmatprep.subr.mxu0 0.0
    %2962 = vmatpush2.xpose.msra.mxu0 0.0
    %2963 = vmatprep.subr.mxu0 0.0
    %2964 = vmatpush2.xpose.msra.mxu0 0.0
    %2965 = vmatprep.subr.mxu0 0.0
    %2966 = vmatpush2.xpose.msra.mxu0 0.0
    %2967 = vmatprep.subr.mxu0 0.0
    %2968 = vmatpush2.xpose.msra.mxu0 0.0
    %2969 = vmatprep.subr.mxu0 0.0
    %2970 = vmatpush2.xpose.msra.mxu0 0.0
    %2971 = vmatprep.subr.mxu0 0.0
    %2972 = vmatpush2.xpose.msra.mxu0 0.0
    %2973 = vmatprep.mubr.f32.mxu0 0.0
    %2974 = vmatmul.mubr.f32.gmra.mxu0 %v2905
    %v2975 = vpop.f32.mrf.mxu0
    %v2976 = vadd.f32 0.0, %v2975
    %v2977 = vpop.f32.mrf.mxu0
    %2978 = vdwg.mxu0
    %v2979 = vsel %vm504, %v2426, 0
    %v2981 = vsel %vm504, %v2440, 0
    %2983 = vmatprep.subr.mxu0 0.0
    %2984 = vmatpush1.xpose.msra.mxu0 0.0
    %2985 = vmatprep.subr.mxu0 0.0
    %2986 = vmatpush1.xpose.msra.mxu0 0.0
    %2987 = vmatprep.subr.mxu0 0.0
    %2988 = vmatpush1.xpose.msra.mxu0 0.0
    %2989 = vmatprep.subr.mxu0 0.0
    %2990 = vmatpush1.xpose.msra.mxu0 0.0
    %2991 = vmatprep.subr.mxu0 0.0
    %2992 = vmatpush1.xpose.msra.mxu0 0.0
    %2993 = vmatprep.subr.mxu0 0.0
    %2994 = vmatpush1.xpose.msra.mxu0 0.0
    %2995 = vmatprep.subr.mxu0 0.0
    %2996 = vmatpush1.xpose.msra.mxu0 0.0
    %2997 = vmatprep.subr.mxu0 0.0
    %2998 = vmatpush1.xpose.msra.mxu0 0.0
    %2999 = vmatprep.subr.mxu0 0.0
    %3000 = vmatpush1.xpose.msra.mxu0 0.0
    %3001 = vmatprep.subr.mxu0 0.0
    %3002 = vmatpush1.xpose.msra.mxu0 0.0
    %3003 = vmatprep.subr.mxu0 0.0
    %3004 = vmatpush1.xpose.msra.mxu0 0.0
    %3005 = vmatprep.subr.mxu0 0.0
    %3006 = vmatpush1.xpose.msra.mxu0 0.0
    %3007 = vmatprep.subr.mxu0 0.0
    %3008 = vmatpush1.xpose.msra.mxu0 0.0
    %3009 = vmatprep.subr.mxu0 0.0
    %3010 = vmatpush1.xpose.msra.mxu0 0.0
    %3011 = vmatprep.subr.mxu0 0.0
    %3012 = vmatpush1.xpose.msra.mxu0 0.0
    %3013 = vmatprep.subr.mxu0 0.0
    %3014 = vmatpush1.xpose.msra.mxu0 %v2981
    %3015 = vmatprep.subr.mxu0 0.0
    %3016 = vmatpush2.xpose.msra.mxu0 0.0
    %3017 = vmatprep.subr.mxu0 0.0
    %3018 = vmatpush2.xpose.msra.mxu0 0.0
    %3019 = vmatprep.subr.mxu0 0.0
    %3020 = vmatpush2.xpose.msra.mxu0 0.0
    %3021 = vmatprep.subr.mxu0 0.0
    %3022 = vmatpush2.xpose.msra.mxu0 0.0
    %3023 = vmatprep.subr.mxu0 0.0
    %3024 = vmatpush2.xpose.msra.mxu0 0.0
    %3025 = vmatprep.subr.mxu0 0.0
    %3026 = vmatpush2.xpose.msra.mxu0 0.0
    %3027 = vmatprep.subr.mxu0 0.0
    %3028 = vmatpush2.xpose.msra.mxu0 0.0
    %3029 = vmatprep.subr.mxu0 0.0
    %3030 = vmatpush2.xpose.msra.mxu0 0.0
    %3031 = vmatprep.subr.mxu0 0.0
    %3032 = vmatpush2.xpose.msra.mxu0 0.0
    %3033 = vmatprep.subr.mxu0 0.0
    %3034 = vmatpush2.xpose.msra.mxu0 0.0
    %3035 = vmatprep.subr.mxu0 0.0
    %3036 = vmatpush2.xpose.msra.mxu0 0.0
    %3037 = vmatprep.subr.mxu0 0.0
    %3038 = vmatpush2.xpose.msra.mxu0 0.0
    %3039 = vmatprep.subr.mxu0 0.0
    %3040 = vmatpush2.xpose.msra.mxu0 0.0
    %3041 = vmatprep.subr.mxu0 0.0
    %3042 = vmatpush2.xpose.msra.mxu0 0.0
    %3043 = vmatprep.subr.mxu0 0.0
    %3044 = vmatpush2.xpose.msra.mxu0 0.0
    %3045 = vmatprep.subr.mxu0 0.0
    %3046 = vmatpush2.xpose.msra.mxu0 0.0
    %3047 = vmatprep.mubr.f32.mxu0 0.0
    %3048 = vmatmul.mubr.f32.gmra.mxu0 %v2979
    %v3049 = vpop.f32.mrf.mxu0
    %v3050 = vadd.f32 0.0, %v3049
    %v3051 = vpop.f32.mrf.mxu0
    %3052 = vdwg.mxu0
    %v3053 = vsel %vm504, %v2532, -inf
    %3054 = vmax.xlane.f32.xlu0 %v3053
    %v3055 = vpop.xlane.xlu0 %3054
    %v3056 = vsel %vm504, %v2606, -inf
    %3057 = vmax.xlane.f32.xlu0 %v3056
    %v3058 = vpop.xlane.xlu0 %3057
    %v3059 = vsel %vm504, %v2680, -inf
    %3060 = vmax.xlane.f32.xlu0 %v3059
    %v3061 = vpop.xlane.xlu0 %3060
    %v3062 = vsel %vm504, %v2754, -inf
    %3063 = vmax.xlane.f32.xlu0 %v3062
    %v3064 = vpop.xlane.xlu0 %3063
    %v3065 = vsel %vm504, %v2828, -inf
    %3066 = vmax.xlane.f32.xlu0 %v3065
    %v3067 = vpop.xlane.xlu0 %3066
    %v3068 = vsel %vm504, %v2902, -inf
    %3069 = vmax.xlane.f32.xlu0 %v3068
    %v3070 = vpop.xlane.xlu0 %3069
    %v3071 = vsel %vm504, %v2976, -inf
    %3072 = vmax.xlane.f32.xlu0 %v3071
    %v3073 = vpop.xlane.xlu0 %3072
    %v3074 = vsel %vm504, %v3050, -inf
    %3075 = vmax.xlane.f32.xlu0 %v3074
    %v3076 = vpop.xlane.xlu0 %3075
    %v3077 = vsub.f32 %v2532, %v3055
    %v3078 = vsub.f32 %v2606, %v3058
    %v3079 = vsub.f32 %v2680, %v3061
    %v3080 = vsub.f32 %v2754, %v3064
    %v3081 = vsub.f32 %v2828, %v3067
    %v3082 = vsub.f32 %v2902, %v3070
    %v3083 = vsub.f32 %v2976, %v3073
    %v3084 = vsub.f32 %v3050, %v3076
    %v3085 = vmul.f32 %v3077, 1.442695
    %v3086 = vpow.pop %v3085
    %v3087 = vmul.f32 %v3078, 1.442695
    %v3088 = vpow.pop %v3087
    %v3089 = vmul.f32 %v3079, 1.442695
    %v3090 = vpow.pop %v3089
    %v3091 = vmul.f32 %v3080, 1.442695
    %v3092 = vpow.pop %v3091
    %v3093 = vmul.f32 %v3081, 1.442695
    %v3094 = vpow.pop %v3093
    %v3095 = vmul.f32 %v3082, 1.442695
    %v3096 = vpow.pop %v3095
    %v3097 = vmul.f32 %v3083, 1.442695
    %v3098 = vpow.pop %v3097
    %v3099 = vmul.f32 %v3084, 1.442695
    %v3100 = vpow.pop %v3099
    %v3101 = vsel %vm504, %v3086, 0.0
    %3102 = vadd.xlane.f32.xlu0 %v3101
    %v3103 = vpop.xlane.xlu0 %3102
    %v3104 = vsel %vm504, %v3088, 0.0
    %3105 = vadd.xlane.f32.xlu0 %v3104
    %v3106 = vpop.xlane.xlu0 %3105
    %v3107 = vsel %vm504, %v3090, 0.0
    %3108 = vadd.xlane.f32.xlu0 %v3107
    %v3109 = vpop.xlane.xlu0 %3108
    %v3110 = vsel %vm504, %v3092, 0.0
    %3111 = vadd.xlane.f32.xlu0 %v3110
    %v3112 = vpop.xlane.xlu0 %3111
    %v3113 = vsel %vm504, %v3094, 0.0
    %3114 = vadd.xlane.f32.xlu0 %v3113
    %v3115 = vpop.xlane.xlu0 %3114
    %v3116 = vsel %vm504, %v3096, 0.0
    %3117 = vadd.xlane.f32.xlu0 %v3116
    %v3118 = vpop.xlane.xlu0 %3117
    %v3119 = vsel %vm504, %v3098, 0.0
    %3120 = vadd.xlane.f32.xlu0 %v3119
    %v3121 = vpop.xlane.xlu0 %3120
    %v3122 = vsel %vm504, %v3100, 0.0
    %3123 = vadd.xlane.f32.xlu0 %v3122
    %v3124 = vpop.xlane.xlu0 %3123
    %v3125 = vrcp.pop %v3103
    %v3126 = vrcp.pop %v3106
    %v3127 = vrcp.pop %v3109
    %v3128 = vrcp.pop %v3112
    %v3129 = vrcp.pop %v3115
    %v3130 = vrcp.pop %v3118
    %v3131 = vrcp.pop %v3121
    %v3132 = vrcp.pop %v3124
    %v3133 = vmul.f32 %v3086, %v3125
    %v3134 = vmul.f32 %v3088, %v3126
    %v3135 = vmul.f32 %v3090, %v3127
    %v3136 = vmul.f32 %v3092, %v3128
    %v3137 = vmul.f32 %v3094, %v3129
    %v3138 = vmul.f32 %v3096, %v3130
    %v3139 = vmul.f32 %v3098, %v3131
    %v3140 = vmul.f32 %v3100, %v3132
    %v3142 = vsel %vm504, %v3133, 0
    %3144 = vmatprep.subr.mxu0 0.0
    %3145 = vmatpush1.msra.mxu0 0.0
    %3146 = vmatprep.subr.mxu0 0.0
    %3147 = vmatpush1.msra.mxu0 0.0
    %3148 = vmatprep.subr.mxu0 0.0
    %3149 = vmatpush1.msra.mxu0 0.0
    %3150 = vmatprep.subr.mxu0 0.0
    %3151 = vmatpush1.msra.mxu0 0.0
    %3152 = vmatprep.subr.mxu0 0.0
    %3153 = vmatpush1.msra.mxu0 0.0
    %3154 = vmatprep.subr.mxu0 0.0
    %3155 = vmatpush1.msra.mxu0 0.0
    %3156 = vmatprep.subr.mxu0 0.0
    %3157 = vmatpush1.msra.mxu0 0.0
    %3158 = vmatprep.subr.mxu0 0.0
    %3159 = vmatpush1.msra.mxu0 0.0
    %3160 = vmatprep.subr.mxu0 0.0
    %3161 = vmatpush1.msra.mxu0 0.0
    %3162 = vmatprep.subr.mxu0 0.0
    %3163 = vmatpush1.msra.mxu0 0.0
    %3164 = vmatprep.subr.mxu0 0.0
    %3165 = vmatpush1.msra.mxu0 0.0
    %3166 = vmatprep.subr.mxu0 0.0
    %3167 = vmatpush1.msra.mxu0 0.0
    %3168 = vmatprep.subr.mxu0 0.0
    %3169 = vmatpush1.msra.mxu0 0.0
    %3170 = vmatprep.subr.mxu0 0.0
    %3171 = vmatpush1.msra.mxu0 0.0
    %3172 = vmatprep.subr.mxu0 0.0
    %3173 = vmatpush1.msra.mxu0 0.0
    %3174 = vmatprep.subr.mxu0 0.0
    %3175 = vmatpush1.msra.mxu0 %v2405
    %3176 = vmatprep.subr.mxu0 0.0
    %3177 = vmatpush2.msra.mxu0 0.0
    %3178 = vmatprep.subr.mxu0 0.0
    %3179 = vmatpush2.msra.mxu0 0.0
    %3180 = vmatprep.subr.mxu0 0.0
    %3181 = vmatpush2.msra.mxu0 0.0
    %3182 = vmatprep.subr.mxu0 0.0
    %3183 = vmatpush2.msra.mxu0 0.0
    %3184 = vmatprep.subr.mxu0 0.0
    %3185 = vmatpush2.msra.mxu0 0.0
    %3186 = vmatprep.subr.mxu0 0.0
    %3187 = vmatpush2.msra.mxu0 0.0
    %3188 = vmatprep.subr.mxu0 0.0
    %3189 = vmatpush2.msra.mxu0 0.0
    %3190 = vmatprep.subr.mxu0 0.0
    %3191 = vmatpush2.msra.mxu0 0.0
    %3192 = vmatprep.subr.mxu0 0.0
    %3193 = vmatpush2.msra.mxu0 0.0
    %3194 = vmatprep.subr.mxu0 0.0
    %3195 = vmatpush2.msra.mxu0 0.0
    %3196 = vmatprep.subr.mxu0 0.0
    %3197 = vmatpush2.msra.mxu0 0.0
    %3198 = vmatprep.subr.mxu0 0.0
    %3199 = vmatpush2.msra.mxu0 0.0
    %3200 = vmatprep.subr.mxu0 0.0
    %3201 = vmatpush2.msra.mxu0 0.0
    %3202 = vmatprep.subr.mxu0 0.0
    %3203 = vmatpush2.msra.mxu0 0.0
    %3204 = vmatprep.subr.mxu0 0.0
    %3205 = vmatpush2.msra.mxu0 0.0
    %3206 = vmatprep.subr.mxu0 0.0
    %3207 = vmatpush2.msra.mxu0 0.0
    %3208 = vmatprep.mubr.f32.mxu0 0.0
    %3209 = vmatmul.mubr.f32.gmra.mxu0 %v3142
    %v3210 = vpop.f32.mrf.mxu0
    %v3211 = vadd.f32 0.0, %v3210
    %v3212 = vpop.f32.mrf.mxu0
    %3213 = vdwg.mxu0
    %v3215 = vsel %vm504, %v3134, 0
    %3217 = vmatprep.subr.mxu0 0.0
    %3218 = vmatpush1.msra.mxu0 0.0
    %3219 = vmatprep.subr.mxu0 0.0
    %3220 = vmatpush1.msra.mxu0 0.0
    %3221 = vmatprep.subr.mxu0 0.0
    %3222 = vmatpush1.msra.mxu0 0.0
    %3223 = vmatprep.subr.mxu0 0.0
    %3224 = vmatpush1.msra.mxu0 0.0
    %3225 = vmatprep.subr.mxu0 0.0
    %3226 = vmatpush1.msra.mxu0 0.0
    %3227 = vmatprep.subr.mxu0 0.0
    %3228 = vmatpush1.msra.mxu0 0.0
    %3229 = vmatprep.subr.mxu0 0.0
    %3230 = vmatpush1.msra.mxu0 0.0
    %3231 = vmatprep.subr.mxu0 0.0
    %3232 = vmatpush1.msra.mxu0 0.0
    %3233 = vmatprep.subr.mxu0 0.0
    %3234 = vmatpush1.msra.mxu0 0.0
    %3235 = vmatprep.subr.mxu0 0.0
    %3236 = vmatpush1.msra.mxu0 0.0
    %3237 = vmatprep.subr.mxu0 0.0
    %3238 = vmatpush1.msra.mxu0 0.0
    %3239 = vmatprep.subr.mxu0 0.0
    %3240 = vmatpush1.msra.mxu0 0.0
    %3241 = vmatprep.subr.mxu0 0.0
    %3242 = vmatpush1.msra.mxu0 0.0
    %3243 = vmatprep.subr.mxu0 0.0
    %3244 = vmatpush1.msra.mxu0 0.0
    %3245 = vmatprep.subr.mxu0 0.0
    %3246 = vmatpush1.msra.mxu0 0.0
    %3247 = vmatprep.subr.mxu0 0.0
    %3248 = vmatpush1.msra.mxu0 %v2410
    %3249 = vmatprep.subr.mxu0 0.0
    %3250 = vmatpush2.msra.mxu0 0.0
    %3251 = vmatprep.subr.mxu0 0.0
    %3252 = vmatpush2.msra.mxu0 0.0
    %3253 = vmatprep.subr.mxu0 0.0
    %3254 = vmatpush2.msra.mxu0 0.0
    %3255 = vmatprep.subr.mxu0 0.0
    %3256 = vmatpush2.msra.mxu0 0.0
    %3257 = vmatprep.subr.mxu0 0.0
    %3258 = vmatpush2.msra.mxu0 0.0
    %3259 = vmatprep.subr.mxu0 0.0
    %3260 = vmatpush2.msra.mxu0 0.0
    %3261 = vmatprep.subr.mxu0 0.0
    %3262 = vmatpush2.msra.mxu0 0.0
    %3263 = vmatprep.subr.mxu0 0.0
    %3264 = vmatpush2.msra.mxu0 0.0
    %3265 = vmatprep.subr.mxu0 0.0
    %3266 = vmatpush2.msra.mxu0 0.0
    %3267 = vmatprep.subr.mxu0 0.0
    %3268 = vmatpush2.msra.mxu0 0.0
    %3269 = vmatprep.subr.mxu0 0.0
    %3270 = vmatpush2.msra.mxu0 0.0
    %3271 = vmatprep.subr.mxu0 0.0
    %3272 = vmatpush2.msra.mxu0 0.0
    %3273 = vmatprep.subr.mxu0 0.0
    %3274 = vmatpush2.msra.mxu0 0.0
    %3275 = vmatprep.subr.mxu0 0.0
    %3276 = vmatpush2.msra.mxu0 0.0
    %3277 = vmatprep.subr.mxu0 0.0
    %3278 = vmatpush2.msra.mxu0 0.0
    %3279 = vmatprep.subr.mxu0 0.0
    %3280 = vmatpush2.msra.mxu0 0.0
    %3281 = vmatprep.mubr.f32.mxu0 0.0
    %3282 = vmatmul.mubr.f32.gmra.mxu0 %v3215
    %v3283 = vpop.f32.mrf.mxu0
    %v3284 = vadd.f32 0.0, %v3283
    %v3285 = vpop.f32.mrf.mxu0
    %3286 = vdwg.mxu0
    %v3288 = vsel %vm504, %v3135, 0
    %3290 = vmatprep.subr.mxu0 0.0
    %3291 = vmatpush1.msra.mxu0 0.0
    %3292 = vmatprep.subr.mxu0 0.0
    %3293 = vmatpush1.msra.mxu0 0.0
    %3294 = vmatprep.subr.mxu0 0.0
    %3295 = vmatpush1.msra.mxu0 0.0
    %3296 = vmatprep.subr.mxu0 0.0
    %3297 = vmatpush1.msra.mxu0 0.0
    %3298 = vmatprep.subr.mxu0 0.0
    %3299 = vmatpush1.msra.mxu0 0.0
    %3300 = vmatprep.subr.mxu0 0.0
    %3301 = vmatpush1.msra.mxu0 0.0
    %3302 = vmatprep.subr.mxu0 0.0
    %3303 = vmatpush1.msra.mxu0 0.0
    %3304 = vmatprep.subr.mxu0 0.0
    %3305 = vmatpush1.msra.mxu0 0.0
    %3306 = vmatprep.subr.mxu0 0.0
    %3307 = vmatpush1.msra.mxu0 0.0
    %3308 = vmatprep.subr.mxu0 0.0
    %3309 = vmatpush1.msra.mxu0 0.0
    %3310 = vmatprep.subr.mxu0 0.0
    %3311 = vmatpush1.msra.mxu0 0.0
    %3312 = vmatprep.subr.mxu0 0.0
    %3313 = vmatpush1.msra.mxu0 0.0
    %3314 = vmatprep.subr.mxu0 0.0
    %3315 = vmatpush1.msra.mxu0 0.0
    %3316 = vmatprep.subr.mxu0 0.0
    %3317 = vmatpush1.msra.mxu0 0.0
    %3318 = vmatprep.subr.mxu0 0.0
    %3319 = vmatpush1.msra.mxu0 0.0
    %3320 = vmatprep.subr.mxu0 0.0
    %3321 = vmatpush1.msra.mxu0 %v2444
    %3322 = vmatprep.subr.mxu0 0.0
    %3323 = vmatpush2.msra.mxu0 0.0
    %3324 = vmatprep.subr.mxu0 0.0
    %3325 = vmatpush2.msra.mxu0 0.0
    %3326 = vmatprep.subr.mxu0 0.0
    %3327 = vmatpush2.msra.mxu0 0.0
    %3328 = vmatprep.subr.mxu0 0.0
    %3329 = vmatpush2.msra.mxu0 0.0
    %3330 = vmatprep.subr.mxu0 0.0
    %3331 = vmatpush2.msra.mxu0 0.0
    %3332 = vmatprep.subr.mxu0 0.0
    %3333 = vmatpush2.msra.mxu0 0.0
    %3334 = vmatprep.subr.mxu0 0.0
    %3335 = vmatpush2.msra.mxu0 0.0
    %3336 = vmatprep.subr.mxu0 0.0
    %3337 = vmatpush2.msra.mxu0 0.0
    %3338 = vmatprep.subr.mxu0 0.0
    %3339 = vmatpush2.msra.mxu0 0.0
    %3340 = vmatprep.subr.mxu0 0.0
    %3341 = vmatpush2.msra.mxu0 0.0
    %3342 = vmatprep.subr.mxu0 0.0
    %3343 = vmatpush2.msra.mxu0 0.0
    %3344 = vmatprep.subr.mxu0 0.0
    %3345 = vmatpush2.msra.mxu0 0.0
    %3346 = vmatprep.subr.mxu0 0.0
    %3347 = vmatpush2.msra.mxu0 0.0
    %3348 = vmatprep.subr.mxu0 0.0
    %3349 = vmatpush2.msra.mxu0 0.0
    %3350 = vmatprep.subr.mxu0 0.0
    %3351 = vmatpush2.msra.mxu0 0.0
    %3352 = vmatprep.subr.mxu0 0.0
    %3353 = vmatpush2.msra.mxu0 0.0
    %3354 = vmatprep.mubr.f32.mxu0 0.0
    %3355 = vmatmul.mubr.f32.gmra.mxu0 %v3288
    %v3356 = vpop.f32.mrf.mxu0
    %v3357 = vadd.f32 0.0, %v3356
    %v3358 = vpop.f32.mrf.mxu0
    %3359 = vdwg.mxu0
    %v3361 = vsel %vm504, %v3136, 0
    %3363 = vmatprep.subr.mxu0 0.0
    %3364 = vmatpush1.msra.mxu0 0.0
    %3365 = vmatprep.subr.mxu0 0.0
    %3366 = vmatpush1.msra.mxu0 0.0
    %3367 = vmatprep.subr.mxu0 0.0
    %3368 = vmatpush1.msra.mxu0 0.0
    %3369 = vmatprep.subr.mxu0 0.0
    %3370 = vmatpush1.msra.mxu0 0.0
    %3371 = vmatprep.subr.mxu0 0.0
    %3372 = vmatpush1.msra.mxu0 0.0
    %3373 = vmatprep.subr.mxu0 0.0
    %3374 = vmatpush1.msra.mxu0 0.0
    %3375 = vmatprep.subr.mxu0 0.0
    %3376 = vmatpush1.msra.mxu0 0.0
    %3377 = vmatprep.subr.mxu0 0.0
    %3378 = vmatpush1.msra.mxu0 0.0
    %3379 = vmatprep.subr.mxu0 0.0
    %3380 = vmatpush1.msra.mxu0 0.0
    %3381 = vmatprep.subr.mxu0 0.0
    %3382 = vmatpush1.msra.mxu0 0.0
    %3383 = vmatprep.subr.mxu0 0.0
    %3384 = vmatpush1.msra.mxu0 0.0
    %3385 = vmatprep.subr.mxu0 0.0
    %3386 = vmatpush1.msra.mxu0 0.0
    %3387 = vmatprep.subr.mxu0 0.0
    %3388 = vmatpush1.msra.mxu0 0.0
    %3389 = vmatprep.subr.mxu0 0.0
    %3390 = vmatpush1.msra.mxu0 0.0
    %3391 = vmatprep.subr.mxu0 0.0
    %3392 = vmatpush1.msra.mxu0 0.0
    %3393 = vmatprep.subr.mxu0 0.0
    %3394 = vmatpush1.msra.mxu0 %v2446
    %3395 = vmatprep.subr.mxu0 0.0
    %3396 = vmatpush2.msra.mxu0 0.0
    %3397 = vmatprep.subr.mxu0 0.0
    %3398 = vmatpush2.msra.mxu0 0.0
    %3399 = vmatprep.subr.mxu0 0.0
    %3400 = vmatpush2.msra.mxu0 0.0
    %3401 = vmatprep.subr.mxu0 0.0
    %3402 = vmatpush2.msra.mxu0 0.0
    %3403 = vmatprep.subr.mxu0 0.0
    %3404 = vmatpush2.msra.mxu0 0.0
    %3405 = vmatprep.subr.mxu0 0.0
    %3406 = vmatpush2.msra.mxu0 0.0
    %3407 = vmatprep.subr.mxu0 0.0
    %3408 = vmatpush2.msra.mxu0 0.0
    %3409 = vmatprep.subr.mxu0 0.0
    %3410 = vmatpush2.msra.mxu0 0.0
    %3411 = vmatprep.subr.mxu0 0.0
    %3412 = vmatpush2.msra.mxu0 0.0
    %3413 = vmatprep.subr.mxu0 0.0
    %3414 = vmatpush2.msra.mxu0 0.0
    %3415 = vmatprep.subr.mxu0 0.0
    %3416 = vmatpush2.msra.mxu0 0.0
    %3417 = vmatprep.subr.mxu0 0.0
    %3418 = vmatpush2.msra.mxu0 0.0
    %3419 = vmatprep.subr.mxu0 0.0
    %3420 = vmatpush2.msra.mxu0 0.0
    %3421 = vmatprep.subr.mxu0 0.0
    %3422 = vmatpush2.msra.mxu0 0.0
    %3423 = vmatprep.subr.mxu0 0.0
    %3424 = vmatpush2.msra.mxu0 0.0
    %3425 = vmatprep.subr.mxu0 0.0
    %3426 = vmatpush2.msra.mxu0 0.0
    %3427 = vmatprep.mubr.f32.mxu0 0.0
    %3428 = vmatmul.mubr.f32.gmra.mxu0 %v3361
    %v3429 = vpop.f32.mrf.mxu0
    %v3430 = vadd.f32 0.0, %v3429
    %v3431 = vpop.f32.mrf.mxu0
    %3432 = vdwg.mxu0
    %v3434 = vsel %vm504, %v3137, 0
    %3436 = vmatprep.subr.mxu0 0.0
    %3437 = vmatpush1.msra.mxu0 0.0
    %3438 = vmatprep.subr.mxu0 0.0
    %3439 = vmatpush1.msra.mxu0 0.0
    %3440 = vmatprep.subr.mxu0 0.0
    %3441 = vmatpush1.msra.mxu0 0.0
    %3442 = vmatprep.subr.mxu0 0.0
    %3443 = vmatpush1.msra.mxu0 0.0
    %3444 = vmatprep.subr.mxu0 0.0
    %3445 = vmatpush1.msra.mxu0 0.0
    %3446 = vmatprep.subr.mxu0 0.0
    %3447 = vmatpush1.msra.mxu0 0.0
    %3448 = vmatprep.subr.mxu0 0.0
    %3449 = vmatpush1.msra.mxu0 0.0
    %3450 = vmatprep.subr.mxu0 0.0
    %3451 = vmatpush1.msra.mxu0 0.0
    %3452 = vmatprep.subr.mxu0 0.0
    %3453 = vmatpush1.msra.mxu0 0.0
    %3454 = vmatprep.subr.mxu0 0.0
    %3455 = vmatpush1.msra.mxu0 0.0
    %3456 = vmatprep.subr.mxu0 0.0
    %3457 = vmatpush1.msra.mxu0 0.0
    %3458 = vmatprep.subr.mxu0 0.0
    %3459 = vmatpush1.msra.mxu0 0.0
    %3460 = vmatprep.subr.mxu0 0.0
    %3461 = vmatpush1.msra.mxu0 0.0
    %3462 = vmatprep.subr.mxu0 0.0
    %3463 = vmatpush1.msra.mxu0 0.0
    %3464 = vmatprep.subr.mxu0 0.0
    %3465 = vmatpush1.msra.mxu0 0.0
    %3466 = vmatprep.subr.mxu0 0.0
    %3467 = vmatpush1.msra.mxu0 %v2450
    %3468 = vmatprep.subr.mxu0 0.0
    %3469 = vmatpush2.msra.mxu0 0.0
    %3470 = vmatprep.subr.mxu0 0.0
    %3471 = vmatpush2.msra.mxu0 0.0
    %3472 = vmatprep.subr.mxu0 0.0
    %3473 = vmatpush2.msra.mxu0 0.0
    %3474 = vmatprep.subr.mxu0 0.0
    %3475 = vmatpush2.msra.mxu0 0.0
    %3476 = vmatprep.subr.mxu0 0.0
    %3477 = vmatpush2.msra.mxu0 0.0
    %3478 = vmatprep.subr.mxu0 0.0
    %3479 = vmatpush2.msra.mxu0 0.0
    %3480 = vmatprep.subr.mxu0 0.0
    %3481 = vmatpush2.msra.mxu0 0.0
    %3482 = vmatprep.subr.mxu0 0.0
    %3483 = vmatpush2.msra.mxu0 0.0
    %3484 = vmatprep.subr.mxu0 0.0
    %3485 = vmatpush2.msra.mxu0 0.0
    %3486 = vmatprep.subr.mxu0 0.0
    %3487 = vmatpush2.msra.mxu0 0.0
    %3488 = vmatprep.subr.mxu0 0.0
    %3489 = vmatpush2.msra.mxu0 0.0
    %3490 = vmatprep.subr.mxu0 0.0
    %3491 = vmatpush2.msra.mxu0 0.0
    %3492 = vmatprep.subr.mxu0 0.0
    %3493 = vmatpush2.msra.mxu0 0.0
    %3494 = vmatprep.subr.mxu0 0.0
    %3495 = vmatpush2.msra.mxu0 0.0
    %3496 = vmatprep.subr.mxu0 0.0
    %3497 = vmatpush2.msra.mxu0 0.0
    %3498 = vmatprep.subr.mxu0 0.0
    %3499 = vmatpush2.msra.mxu0 0.0
    %3500 = vmatprep.mubr.f32.mxu0 0.0
    %3501 = vmatmul.mubr.f32.gmra.mxu0 %v3434
    %v3502 = vpop.f32.mrf.mxu0
    %v3503 = vadd.f32 0.0, %v3502
    %v3504 = vpop.f32.mrf.mxu0
    %3505 = vdwg.mxu0
    %v3507 = vsel %vm504, %v3138, 0
    %3509 = vmatprep.subr.mxu0 0.0
    %3510 = vmatpush1.msra.mxu0 0.0
    %3511 = vmatprep.subr.mxu0 0.0
    %3512 = vmatpush1.msra.mxu0 0.0
    %3513 = vmatprep.subr.mxu0 0.0
    %3514 = vmatpush1.msra.mxu0 0.0
    %3515 = vmatprep.subr.mxu0 0.0
    %3516 = vmatpush1.msra.mxu0 0.0
    %3517 = vmatprep.subr.mxu0 0.0
    %3518 = vmatpush1.msra.mxu0 0.0
    %3519 = vmatprep.subr.mxu0 0.0
    %3520 = vmatpush1.msra.mxu0 0.0
    %3521 = vmatprep.subr.mxu0 0.0
    %3522 = vmatpush1.msra.mxu0 0.0
    %3523 = vmatprep.subr.mxu0 0.0
    %3524 = vmatpush1.msra.mxu0 0.0
    %3525 = vmatprep.subr.mxu0 0.0
    %3526 = vmatpush1.msra.mxu0 0.0
    %3527 = vmatprep.subr.mxu0 0.0
    %3528 = vmatpush1.msra.mxu0 0.0
    %3529 = vmatprep.subr.mxu0 0.0
    %3530 = vmatpush1.msra.mxu0 0.0
    %3531 = vmatprep.subr.mxu0 0.0
    %3532 = vmatpush1.msra.mxu0 0.0
    %3533 = vmatprep.subr.mxu0 0.0
    %3534 = vmatpush1.msra.mxu0 0.0
    %3535 = vmatprep.subr.mxu0 0.0
    %3536 = vmatpush1.msra.mxu0 0.0
    %3537 = vmatprep.subr.mxu0 0.0
    %3538 = vmatpush1.msra.mxu0 0.0
    %3539 = vmatprep.subr.mxu0 0.0
    %3540 = vmatpush1.msra.mxu0 %v2452
    %3541 = vmatprep.subr.mxu0 0.0
    %3542 = vmatpush2.msra.mxu0 0.0
    %3543 = vmatprep.subr.mxu0 0.0
    %3544 = vmatpush2.msra.mxu0 0.0
    %3545 = vmatprep.subr.mxu0 0.0
    %3546 = vmatpush2.msra.mxu0 0.0
    %3547 = vmatprep.subr.mxu0 0.0
    %3548 = vmatpush2.msra.mxu0 0.0
    %3549 = vmatprep.subr.mxu0 0.0
    %3550 = vmatpush2.msra.mxu0 0.0
    %3551 = vmatprep.subr.mxu0 0.0
    %3552 = vmatpush2.msra.mxu0 0.0
    %3553 = vmatprep.subr.mxu0 0.0
    %3554 = vmatpush2.msra.mxu0 0.0
    %3555 = vmatprep.subr.mxu0 0.0
    %3556 = vmatpush2.msra.mxu0 0.0
    %3557 = vmatprep.subr.mxu0 0.0
    %3558 = vmatpush2.msra.mxu0 0.0
    %3559 = vmatprep.subr.mxu0 0.0
    %3560 = vmatpush2.msra.mxu0 0.0
    %3561 = vmatprep.subr.mxu0 0.0
    %3562 = vmatpush2.msra.mxu0 0.0
    %3563 = vmatprep.subr.mxu0 0.0
    %3564 = vmatpush2.msra.mxu0 0.0
    %3565 = vmatprep.subr.mxu0 0.0
    %3566 = vmatpush2.msra.mxu0 0.0
    %3567 = vmatprep.subr.mxu0 0.0
    %3568 = vmatpush2.msra.mxu0 0.0
    %3569 = vmatprep.subr.mxu0 0.0
    %3570 = vmatpush2.msra.mxu0 0.0
    %3571 = vmatprep.subr.mxu0 0.0
    %3572 = vmatpush2.msra.mxu0 0.0
    %3573 = vmatprep.mubr.f32.mxu0 0.0
    %3574 = vmatmul.mubr.f32.gmra.mxu0 %v3507
    %v3575 = vpop.f32.mrf.mxu0
    %v3576 = vadd.f32 0.0, %v3575
    %v3577 = vpop.f32.mrf.mxu0
    %3578 = vdwg.mxu0
    %v3580 = vsel %vm504, %v3139, 0
    %3582 = vmatprep.subr.mxu0 0.0
    %3583 = vmatpush1.msra.mxu0 0.0
    %3584 = vmatprep.subr.mxu0 0.0
    %3585 = vmatpush1.msra.mxu0 0.0
    %3586 = vmatprep.subr.mxu0 0.0
    %3587 = vmatpush1.msra.mxu0 0.0
    %3588 = vmatprep.subr.mxu0 0.0
    %3589 = vmatpush1.msra.mxu0 0.0
    %3590 = vmatprep.subr.mxu0 0.0
    %3591 = vmatpush1.msra.mxu0 0.0
    %3592 = vmatprep.subr.mxu0 0.0
    %3593 = vmatpush1.msra.mxu0 0.0
    %3594 = vmatprep.subr.mxu0 0.0
    %3595 = vmatpush1.msra.mxu0 0.0
    %3596 = vmatprep.subr.mxu0 0.0
    %3597 = vmatpush1.msra.mxu0 0.0
    %3598 = vmatprep.subr.mxu0 0.0
    %3599 = vmatpush1.msra.mxu0 0.0
    %3600 = vmatprep.subr.mxu0 0.0
    %3601 = vmatpush1.msra.mxu0 0.0
    %3602 = vmatprep.subr.mxu0 0.0
    %3603 = vmatpush1.msra.mxu0 0.0
    %3604 = vmatprep.subr.mxu0 0.0
    %3605 = vmatpush1.msra.mxu0 0.0
    %3606 = vmatprep.subr.mxu0 0.0
    %3607 = vmatpush1.msra.mxu0 0.0
    %3608 = vmatprep.subr.mxu0 0.0
    %3609 = vmatpush1.msra.mxu0 0.0
    %3610 = vmatprep.subr.mxu0 0.0
    %3611 = vmatpush1.msra.mxu0 0.0
    %3612 = vmatprep.subr.mxu0 0.0
    %3613 = vmatpush1.msra.mxu0 %v2456
    %3614 = vmatprep.subr.mxu0 0.0
    %3615 = vmatpush2.msra.mxu0 0.0
    %3616 = vmatprep.subr.mxu0 0.0
    %3617 = vmatpush2.msra.mxu0 0.0
    %3618 = vmatprep.subr.mxu0 0.0
    %3619 = vmatpush2.msra.mxu0 0.0
    %3620 = vmatprep.subr.mxu0 0.0
    %3621 = vmatpush2.msra.mxu0 0.0
    %3622 = vmatprep.subr.mxu0 0.0
    %3623 = vmatpush2.msra.mxu0 0.0
    %3624 = vmatprep.subr.mxu0 0.0
    %3625 = vmatpush2.msra.mxu0 0.0
    %3626 = vmatprep.subr.mxu0 0.0
    %3627 = vmatpush2.msra.mxu0 0.0
    %3628 = vmatprep.subr.mxu0 0.0
    %3629 = vmatpush2.msra.mxu0 0.0
    %3630 = vmatprep.subr.mxu0 0.0
    %3631 = vmatpush2.msra.mxu0 0.0
    %3632 = vmatprep.subr.mxu0 0.0
    %3633 = vmatpush2.msra.mxu0 0.0
    %3634 = vmatprep.subr.mxu0 0.0
    %3635 = vmatpush2.msra.mxu0 0.0
    %3636 = vmatprep.subr.mxu0 0.0
    %3637 = vmatpush2.msra.mxu0 0.0
    %3638 = vmatprep.subr.mxu0 0.0
    %3639 = vmatpush2.msra.mxu0 0.0
    %3640 = vmatprep.subr.mxu0 0.0
    %3641 = vmatpush2.msra.mxu0 0.0
    %3642 = vmatprep.subr.mxu0 0.0
    %3643 = vmatpush2.msra.mxu0 0.0
    %3644 = vmatprep.subr.mxu0 0.0
    %3645 = vmatpush2.msra.mxu0 0.0
    %3646 = vmatprep.mubr.f32.mxu0 0.0
    %3647 = vmatmul.mubr.f32.gmra.mxu0 %v3580
    %v3648 = vpop.f32.mrf.mxu0
    %v3649 = vadd.f32 0.0, %v3648
    %v3650 = vpop.f32.mrf.mxu0
    %3651 = vdwg.mxu0
    %v3653 = vsel %vm504, %v3140, 0
    %3655 = vmatprep.subr.mxu0 0.0
    %3656 = vmatpush1.msra.mxu0 0.0
    %3657 = vmatprep.subr.mxu0 0.0
    %3658 = vmatpush1.msra.mxu0 0.0
    %3659 = vmatprep.subr.mxu0 0.0
    %3660 = vmatpush1.msra.mxu0 0.0
    %3661 = vmatprep.subr.mxu0 0.0
    %3662 = vmatpush1.msra.mxu0 0.0
    %3663 = vmatprep.subr.mxu0 0.0
    %3664 = vmatpush1.msra.mxu0 0.0
    %3665 = vmatprep.subr.mxu0 0.0
    %3666 = vmatpush1.msra.mxu0 0.0
    %3667 = vmatprep.subr.mxu0 0.0
    %3668 = vmatpush1.msra.mxu0 0.0
    %3669 = vmatprep.subr.mxu0 0.0
    %3670 = vmatpush1.msra.mxu0 0.0
    %3671 = vmatprep.subr.mxu0 0.0
    %3672 = vmatpush1.msra.mxu0 0.0
    %3673 = vmatprep.subr.mxu0 0.0
    %3674 = vmatpush1.msra.mxu0 0.0
    %3675 = vmatprep.subr.mxu0 0.0
    %3676 = vmatpush1.msra.mxu0 0.0
    %3677 = vmatprep.subr.mxu0 0.0
    %3678 = vmatpush1.msra.mxu0 0.0
    %3679 = vmatprep.subr.mxu0 0.0
    %3680 = vmatpush1.msra.mxu0 0.0
    %3681 = vmatprep.subr.mxu0 0.0
    %3682 = vmatpush1.msra.mxu0 0.0
    %3683 = vmatprep.subr.mxu0 0.0
    %3684 = vmatpush1.msra.mxu0 0.0
    %3685 = vmatprep.subr.mxu0 0.0
    %3686 = vmatpush1.msra.mxu0 %v2458
    %3687 = vmatprep.subr.mxu0 0.0
    %3688 = vmatpush2.msra.mxu0 0.0
    %3689 = vmatprep.subr.mxu0 0.0
    %3690 = vmatpush2.msra.mxu0 0.0
    %3691 = vmatprep.subr.mxu0 0.0
    %3692 = vmatpush2.msra.mxu0 0.0
    %3693 = vmatprep.subr.mxu0 0.0
    %3694 = vmatpush2.msra.mxu0 0.0
    %3695 = vmatprep.subr.mxu0 0.0
    %3696 = vmatpush2.msra.mxu0 0.0
    %3697 = vmatprep.subr.mxu0 0.0
    %3698 = vmatpush2.msra.mxu0 0.0
    %3699 = vmatprep.subr.mxu0 0.0
    %3700 = vmatpush2.msra.mxu0 0.0
    %3701 = vmatprep.subr.mxu0 0.0
    %3702 = vmatpush2.msra.mxu0 0.0
    %3703 = vmatprep.subr.mxu0 0.0
    %3704 = vmatpush2.msra.mxu0 0.0
    %3705 = vmatprep.subr.mxu0 0.0
    %3706 = vmatpush2.msra.mxu0 0.0
    %3707 = vmatprep.subr.mxu0 0.0
    %3708 = vmatpush2.msra.mxu0 0.0
    %3709 = vmatprep.subr.mxu0 0.0
    %3710 = vmatpush2.msra.mxu0 0.0
    %3711 = vmatprep.subr.mxu0 0.0
    %3712 = vmatpush2.msra.mxu0 0.0
    %3713 = vmatprep.subr.mxu0 0.0
    %3714 = vmatpush2.msra.mxu0 0.0
    %3715 = vmatprep.subr.mxu0 0.0
    %3716 = vmatpush2.msra.mxu0 0.0
    %3717 = vmatprep.subr.mxu0 0.0
    %3718 = vmatpush2.msra.mxu0 0.0
    %3719 = vmatprep.mubr.f32.mxu0 0.0
    %3720 = vmatmul.mubr.f32.gmra.mxu0 %v3653
    %v3721 = vpop.f32.mrf.mxu0
    %v3722 = vadd.f32 0.0, %v3721
    %v3723 = vpop.f32.mrf.mxu0
    %3724 = vdwg.mxu0
    %3727 = vrot.lane.b32.xlu0 %v3357, 8
    %v3728 = vpop.permute.xlu0 %3727
    %3729 = vrot.lane.b32.xlu0 %v3430, 8
    %v3730 = vpop.permute.xlu0 %3729
    %3735 = vrot.lane.b32.xlu0 %v3503, 16
    %v3736 = vpop.permute.xlu0 %3735
    %3737 = vrot.lane.b32.xlu0 %v3576, 16
    %v3738 = vpop.permute.xlu0 %3737
    %3743 = vrot.lane.b32.xlu0 %v3649, 24
    %v3744 = vpop.permute.xlu0 %3743
    %3745 = vrot.lane.b32.xlu0 %v3722, 24
    %v3746 = vpop.permute.xlu0 %3745
    %v3749 = vsel %vm504, %v3211, %v3728
    %v3750 = vsel %vm504, %v3284, %v3730
    %v3751 = vsel %vm58, %v3749, %v3736
    %v3752 = vsel %vm58, %v3750, %v3738
    %v3753 = vsel %vm1797, %v3751, %v3744
    %v3754 = vsel %vm1797, %v3752, %v3746
    %v3755 = vlaneseq
    %v3756 = vshrl.u32 %v3755, 7
    %v3757 = vsub.s32 3, %v3756
    %v3758 = vrot.slane %v2168, %v3757
    %v3760 = vsel %vm216, %v3753, 0
    %v3763 = vsel %vm216, %v3754, 0
    %3765 = vmatprep.subr.mxu0 0.0
    %3766 = vmatpush1.msra.mxu0 0.0
    %3767 = vmatprep.subr.mxu0 0.0
    %3768 = vmatpush1.msra.mxu0 0.0
    %3769 = vmatprep.subr.mxu0 0.0
    %3770 = vmatpush1.msra.mxu0 0.0
    %3771 = vmatprep.subr.mxu0 0.0
    %3772 = vmatpush1.msra.mxu0 0.0
    %3773 = vmatprep.subr.mxu0 0.0
    %3774 = vmatpush1.msra.mxu0 0.0
    %3775 = vmatprep.subr.mxu0 0.0
    %3776 = vmatpush1.msra.mxu0 0.0
    %3777 = vmatprep.subr.mxu0 0.0
    %3778 = vmatpush1.msra.mxu0 0.0
    %3779 = vmatprep.subr.mxu0 0.0
    %3780 = vmatpush1.msra.mxu0 0.0
    %3781 = vmatprep.subr.mxu0 0.0
    %3782 = vmatpush1.msra.mxu0 0.0
    %3783 = vmatprep.subr.mxu0 0.0
    %3784 = vmatpush1.msra.mxu0 0.0
    %3785 = vmatprep.subr.mxu0 0.0
    %3786 = vmatpush1.msra.mxu0 0.0
    %3787 = vmatprep.subr.mxu0 0.0
    %3788 = vmatpush1.msra.mxu0 0.0
    %3789 = vmatprep.subr.mxu0 0.0
    %3790 = vmatpush1.msra.mxu0 %v2155
    %3791 = vmatprep.subr.mxu0 0.0
    %3792 = vmatpush1.msra.mxu0 %v2154
    %3793 = vmatprep.subr.mxu0 0.0
    %3794 = vmatpush1.msra.mxu0 %v2153
    %3795 = vmatprep.subr.mxu0 0.0
    %3796 = vmatpush1.msra.mxu0 %v2152
    %3797 = vmatprep.subr.mxu0 0.0
    %3798 = vmatpush2.msra.mxu0 0.0
    %3799 = vmatprep.subr.mxu0 0.0
    %3800 = vmatpush2.msra.mxu0 0.0
    %3801 = vmatprep.subr.mxu0 0.0
    %3802 = vmatpush2.msra.mxu0 0.0
    %3803 = vmatprep.subr.mxu0 0.0
    %3804 = vmatpush2.msra.mxu0 0.0
    %3805 = vmatprep.subr.mxu0 0.0
    %3806 = vmatpush2.msra.mxu0 0.0
    %3807 = vmatprep.subr.mxu0 0.0
    %3808 = vmatpush2.msra.mxu0 0.0
    %3809 = vmatprep.subr.mxu0 0.0
    %3810 = vmatpush2.msra.mxu0 0.0
    %3811 = vmatprep.subr.mxu0 0.0
    %3812 = vmatpush2.msra.mxu0 0.0
    %3813 = vmatprep.subr.mxu0 0.0
    %3814 = vmatpush2.msra.mxu0 0.0
    %3815 = vmatprep.subr.mxu0 0.0
    %3816 = vmatpush2.msra.mxu0 0.0
    %3817 = vmatprep.subr.mxu0 0.0
    %3818 = vmatpush2.msra.mxu0 0.0
    %3819 = vmatprep.subr.mxu0 0.0
    %3820 = vmatpush2.msra.mxu0 0.0
    %3821 = vmatprep.subr.mxu0 0.0
    %3822 = vmatpush2.msra.mxu0 0.0
    %3823 = vmatprep.subr.mxu0 0.0
    %3824 = vmatpush2.msra.mxu0 0.0
    %3825 = vmatprep.subr.mxu0 0.0
    %3826 = vmatpush2.msra.mxu0 0.0
    %3827 = vmatprep.subr.mxu0 0.0
    %3828 = vmatpush2.msra.mxu0 0.0
    %3829 = vmatprep.mubr.f32.mxu0 0.0
    %3830 = vmatmul.mubr.f32.gmra.mxu0 %v3760
    %v3831 = vpop.f32.mrf.mxu0
    %v3832 = vadd.f32 %v3758, %v3831
    %v3833 = vpop.f32.mrf.mxu0
    %3834 = vmatprep.mubr.f32.mxu0 0.0
    %3835 = vmatmul.mubr.f32.gmra.mxu0 %v3763
    %v3836 = vpop.f32.mrf.mxu0
    %v3837 = vadd.f32 %v3758, %v3836
    %v3838 = vpop.f32.mrf.mxu0
    %3839 = vdwg.mxu0
    %v3840 = vadd.f32 %v2137, %v3832
    %v3841 = vadd.f32 %v2138, %v3837
    %v3842 = vsel %vm216, %v3840, 0.0
    %3843 = vadd.xlane.f32.xlu0 %v3842
    %v3844 = vpop.xlane.xlu0 %3843
    %v3845 = vsel %vm216, %v3841, 0.0
    %3846 = vadd.xlane.f32.xlu0 %v3845
    %v3847 = vpop.xlane.xlu0 %3846
    %v3848 = vmul.f32 %v3844, %v1893
    %v3849 = vmul.f32 %v3847, %v1893
    %v3850 = vsub.f32 %v3840, %v3848
    %v3851 = vsub.f32 %v3841, %v3849
    %v3852 = vmul.f32 %v3850, %v3850
    %v3853 = vmul.f32 %v3851, %v3851
    %v3854 = vsel %vm216, %v3852, 0.0
    %3855 = vadd.xlane.f32.xlu0 %v3854
    %v3856 = vpop.xlane.xlu0 %3855
    %v3857 = vsel %vm216, %v3853, 0.0
    %3858 = vadd.xlane.f32.xlu0 %v3857
    %v3859 = vpop.xlane.xlu0 %3858
    %v3860 = vmul.f32 %v3856, %v1893
    %v3861 = vmul.f32 %v3859, %v1893
    %v3862 = vadd.f32 %v3860, 1e-05
    %v3863 = vadd.f32 %v3861, 1e-05
    %v3864 = vrsqrt.pop %v3862
    %v3865 = vrsqrt.pop %v3863
    %v3866 = vmul.f32 %v3850, %v3864
    %v3867 = vmul.f32 %v3851, %v3865
    %v3868 = vlaneseq
    %v3869 = vshrl.u32 %v3868, 7
    %v3870 = vsub.s32 6, %v3869
    %v3871 = vrot.slane %v2168, %v3870
    %v3872 = vmul.f32 %v3866, %v3871
    %v3873 = vmul.f32 %v3867, %v3871
    %v3874 = vlaneseq
    %v3875 = vshrl.u32 %v3874, 7
    %v3876 = vsub.s32 7, %v3875
    %v3877 = vrot.slane %v2168, %v3876
    %v3878 = vadd.f32 %v3872, %v3877
    %v3879 = vadd.f32 %v3873, %v3877
    %v3880 = vlaneseq
    %v3881 = vshrl.u32 %v3880, 7
    %v3882 = vsub.s32 4, %v3881
    %v3883 = vrot.slane %v2168, %v3882
    %v3885 = vsel %vm216, %v3878, 0
    %v3888 = vsel %vm216, %v3879, 0
    %3890 = vmatprep.subr.mxu0 0.0
    %3891 = vmatpush1.msra.mxu0 0.0
    %3892 = vmatprep.subr.mxu0 0.0
    %3893 = vmatpush1.msra.mxu0 0.0
    %3894 = vmatprep.subr.mxu0 0.0
    %3895 = vmatpush1.msra.mxu0 0.0
    %3896 = vmatprep.subr.mxu0 0.0
    %3897 = vmatpush1.msra.mxu0 0.0
    %3898 = vmatprep.subr.mxu0 0.0
    %3899 = vmatpush1.msra.mxu0 0.0
    %3900 = vmatprep.subr.mxu0 0.0
    %3901 = vmatpush1.msra.mxu0 0.0
    %3902 = vmatprep.subr.mxu0 0.0
    %3903 = vmatpush1.msra.mxu0 0.0
    %3904 = vmatprep.subr.mxu0 0.0
    %3905 = vmatpush1.msra.mxu0 0.0
    %3906 = vmatprep.subr.mxu0 0.0
    %3907 = vmatpush1.msra.mxu0 0.0
    %3908 = vmatprep.subr.mxu0 0.0
    %3909 = vmatpush1.msra.mxu0 0.0
    %3910 = vmatprep.subr.mxu0 0.0
    %3911 = vmatpush1.msra.mxu0 0.0
    %3912 = vmatprep.subr.mxu0 0.0
    %3913 = vmatpush1.msra.mxu0 0.0
    %3914 = vmatprep.subr.mxu0 0.0
    %3915 = vmatpush1.msra.mxu0 %v2159
    %3916 = vmatprep.subr.mxu0 0.0
    %3917 = vmatpush1.msra.mxu0 %v2158
    %3918 = vmatprep.subr.mxu0 0.0
    %3919 = vmatpush1.msra.mxu0 %v2157
    %3920 = vmatprep.subr.mxu0 0.0
    %3921 = vmatpush1.msra.mxu0 %v2156
    %3922 = vmatprep.subr.mxu0 0.0
    %3923 = vmatpush2.msra.mxu0 0.0
    %3924 = vmatprep.subr.mxu0 0.0
    %3925 = vmatpush2.msra.mxu0 0.0
    %3926 = vmatprep.subr.mxu0 0.0
    %3927 = vmatpush2.msra.mxu0 0.0
    %3928 = vmatprep.subr.mxu0 0.0
    %3929 = vmatpush2.msra.mxu0 0.0
    %3930 = vmatprep.subr.mxu0 0.0
    %3931 = vmatpush2.msra.mxu0 0.0
    %3932 = vmatprep.subr.mxu0 0.0
    %3933 = vmatpush2.msra.mxu0 0.0
    %3934 = vmatprep.subr.mxu0 0.0
    %3935 = vmatpush2.msra.mxu0 0.0
    %3936 = vmatprep.subr.mxu0 0.0
    %3937 = vmatpush2.msra.mxu0 0.0
    %3938 = vmatprep.subr.mxu0 0.0
    %3939 = vmatpush2.msra.mxu0 0.0
    %3940 = vmatprep.subr.mxu0 0.0
    %3941 = vmatpush2.msra.mxu0 0.0
    %3942 = vmatprep.subr.mxu0 0.0
    %3943 = vmatpush2.msra.mxu0 0.0
    %3944 = vmatprep.subr.mxu0 0.0
    %3945 = vmatpush2.msra.mxu0 0.0
    %3946 = vmatprep.subr.mxu0 0.0
    %3947 = vmatpush2.msra.mxu0 0.0
    %3948 = vmatprep.subr.mxu0 0.0
    %3949 = vmatpush2.msra.mxu0 0.0
    %3950 = vmatprep.subr.mxu0 0.0
    %3951 = vmatpush2.msra.mxu0 0.0
    %3952 = vmatprep.subr.mxu0 0.0
    %3953 = vmatpush2.msra.mxu0 0.0
    %3954 = vmatprep.mubr.f32.mxu0 0.0
    %3955 = vmatmul.mubr.f32.gmra.mxu0 %v3885
    %v3956 = vpop.f32.mrf.mxu0
    %v3957 = vadd.f32 %v3883, %v3956
    %v3958 = vpop.f32.mrf.mxu0
    %3959 = vmatprep.mubr.f32.mxu0 0.0
    %3960 = vmatmul.mubr.f32.gmra.mxu0 %v3888
    %v3961 = vpop.f32.mrf.mxu0
    %v3962 = vadd.f32 %v3883, %v3961
    %v3963 = vpop.f32.mrf.mxu0
    %3964 = vdwg.mxu0
    %v3965 = vmax.f32 %v3957, 0.0
    %v3966 = vmax.f32 %v3962, 0.0
    %v3967 = vlaneseq
    %v3968 = vshrl.u32 %v3967, 7
    %v3969 = vsub.s32 5, %v3968
    %v3970 = vrot.slane %v2168, %v3969
    %v3972 = vsel %vm2017, %v3965, 0
    %v3975 = vsel %vm2017, %v3966, 0
    %3977 = vmatprep.subr.mxu0 0.0
    %3978 = vmatpush1.msra.mxu0 0.0
    %3979 = vmatprep.subr.mxu0 0.0
    %3980 = vmatpush1.msra.mxu0 0.0
    %3981 = vmatprep.subr.mxu0 0.0
    %3982 = vmatpush1.msra.mxu0 0.0
    %3983 = vmatprep.subr.mxu0 0.0
    %3984 = vmatpush1.msra.mxu0 0.0
    %3985 = vmatprep.subr.mxu0 0.0
    %3986 = vmatpush1.msra.mxu0 0.0
    %3987 = vmatprep.subr.mxu0 0.0
    %3988 = vmatpush1.msra.mxu0 0.0
    %3989 = vmatprep.subr.mxu0 0.0
    %3990 = vmatpush1.msra.mxu0 0.0
    %3991 = vmatprep.subr.mxu0 0.0
    %3992 = vmatpush1.msra.mxu0 0.0
    %3993 = vmatprep.subr.mxu0 0.0
    %3994 = vmatpush1.msra.mxu0 %v2167
    %3995 = vmatprep.subr.mxu0 0.0
    %3996 = vmatpush1.msra.mxu0 %v2166
    %3997 = vmatprep.subr.mxu0 0.0
    %3998 = vmatpush1.msra.mxu0 %v2165
    %3999 = vmatprep.subr.mxu0 0.0
    %4000 = vmatpush1.msra.mxu0 %v2164
    %4001 = vmatprep.subr.mxu0 0.0
    %4002 = vmatpush1.msra.mxu0 %v2163
    %4003 = vmatprep.subr.mxu0 0.0
    %4004 = vmatpush1.msra.mxu0 %v2162
    %4005 = vmatprep.subr.mxu0 0.0
    %4006 = vmatpush1.msra.mxu0 %v2161
    %4007 = vmatprep.subr.mxu0 0.0
    %4008 = vmatpush1.msra.mxu0 %v2160
    %4009 = vmatprep.subr.mxu0 0.0
    %4010 = vmatpush2.msra.mxu0 0.0
    %4011 = vmatprep.subr.mxu0 0.0
    %4012 = vmatpush2.msra.mxu0 0.0
    %4013 = vmatprep.subr.mxu0 0.0
    %4014 = vmatpush2.msra.mxu0 0.0
    %4015 = vmatprep.subr.mxu0 0.0
    %4016 = vmatpush2.msra.mxu0 0.0
    %4017 = vmatprep.subr.mxu0 0.0
    %4018 = vmatpush2.msra.mxu0 0.0
    %4019 = vmatprep.subr.mxu0 0.0
    %4020 = vmatpush2.msra.mxu0 0.0
    %4021 = vmatprep.subr.mxu0 0.0
    %4022 = vmatpush2.msra.mxu0 0.0
    %4023 = vmatprep.subr.mxu0 0.0
    %4024 = vmatpush2.msra.mxu0 0.0
    %4025 = vmatprep.subr.mxu0 0.0
    %4026 = vmatpush2.msra.mxu0 0.0
    %4027 = vmatprep.subr.mxu0 0.0
    %4028 = vmatpush2.msra.mxu0 0.0
    %4029 = vmatprep.subr.mxu0 0.0
    %4030 = vmatpush2.msra.mxu0 0.0
    %4031 = vmatprep.subr.mxu0 0.0
    %4032 = vmatpush2.msra.mxu0 0.0
    %4033 = vmatprep.subr.mxu0 0.0
    %4034 = vmatpush2.msra.mxu0 0.0
    %4035 = vmatprep.subr.mxu0 0.0
    %4036 = vmatpush2.msra.mxu0 0.0
    %4037 = vmatprep.subr.mxu0 0.0
    %4038 = vmatpush2.msra.mxu0 0.0
    %4039 = vmatprep.subr.mxu0 0.0
    %4040 = vmatpush2.msra.mxu0 0.0
    %4041 = vmatprep.mubr.f32.mxu0 0.0
    %4042 = vmatmul.mubr.f32.gmra.mxu0 %v3972
    %v4043 = vpop.f32.mrf.mxu0
    %v4044 = vadd.f32 %v3970, %v4043
    %v4045 = vpop.f32.mrf.mxu0
    %4046 = vmatprep.mubr.f32.mxu0 0.0
    %4047 = vmatmul.mubr.f32.gmra.mxu0 %v3975
    %v4048 = vpop.f32.mrf.mxu0
    %v4049 = vadd.f32 %v3970, %v4048
    %v4050 = vpop.f32.mrf.mxu0
    %4051 = vdwg.mxu0
    %v4052 = vadd.f32 %v3878, %v4044
    %v4053 = vadd.f32 %v3879, %v4049
    %v4054 = vsel %vm216, %v4052, 0.0
    %4055 = vadd.xlane.f32.xlu0 %v4054
    %v4056 = vpop.xlane.xlu0 %4055
    %v4057 = vsel %vm216, %v4053, 0.0
    %4058 = vadd.xlane.f32.xlu0 %v4057
    %v4059 = vpop.xlane.xlu0 %4058
    %v4060 = vmul.f32 %v4056, %v1893
    %v4061 = vmul.f32 %v4059, %v1893
    %v4062 = vsub.f32 %v4052, %v4060
    %v4063 = vsub.f32 %v4053, %v4061
    %v4064 = vmul.f32 %v4062, %v4062
    %v4065 = vmul.f32 %v4063, %v4063
    %v4066 = vsel %vm216, %v4064, 0.0
    %4067 = vadd.xlane.f32.xlu0 %v4066
    %v4068 = vpop.xlane.xlu0 %4067
    %v4069 = vsel %vm216, %v4065, 0.0
    %4070 = vadd.xlane.f32.xlu0 %v4069
    %v4071 = vpop.xlane.xlu0 %4070
    %v4072 = vmul.f32 %v4068, %v1893
    %v4073 = vmul.f32 %v4071, %v1893
    %v4074 = vadd.f32 %v4072, 1e-05
    %v4075 = vadd.f32 %v4073, 1e-05
    %v4076 = vrsqrt.pop %v4074
    %v4077 = vrsqrt.pop %v4075
    %v4078 = vmul.f32 %v4062, %v4076
    %v4079 = vmul.f32 %v4063, %v4077
    %v4080 = vlaneseq
    %v4081 = vshrl.u32 %v4080, 7
    %v4082 = vsub.s32 0, %v4081
    %v4083 = vrot.slane %v2169, %v4082
    %v4084 = vmul.f32 %v4078, %v4083
    %v4085 = vmul.f32 %v4079, %v4083
    %v4086 = vlaneseq
    %v4087 = vshrl.u32 %v4086, 7
    %v4088 = vsub.s32 1, %v4087
    %v4089 = vrot.slane %v2169, %v4088
    %v4090 = vadd.f32 %v4084, %v4089
    %v4091 = vadd.f32 %v4085, %v4089
    %v4092 = vld [vmem:[#allocation7 + $0x8] sm:$0xff]
    %v4093 = vld [vmem:[#allocation7 + $0x20] sm:$0xff]
    %v4094 = vld [vmem:[#allocation7 + $0x38] sm:$0xff]
    %v4095 = vld [vmem:[#allocation7 + $0x50] sm:$0xff]
    %v4096 = vld [vmem:[#allocation7 + $0x10] ss:$0 sm:$0xff]
    %v4099 = vrot.slane %v4091, 7
    %vm4100 = vcmask 1041409
    %v4101 = vsel %vm4100, %v4099, %v4090
    %v4102 = vsel %vm216, %v4101, 0
    %4104 = vmatprep.subr.mxu0 0.0
    %4105 = vmatpush1.msra.mxu0 0.0
    %4106 = vmatprep.subr.mxu0 0.0
    %4107 = vmatpush1.msra.mxu0 0.0
    %4108 = vmatprep.subr.mxu0 0.0
    %4109 = vmatpush1.msra.mxu0 0.0
    %4110 = vmatprep.subr.mxu0 0.0
    %4111 = vmatpush1.msra.mxu0 0.0
    %4112 = vmatprep.subr.mxu0 0.0
    %4113 = vmatpush1.msra.mxu0 0.0
    %4114 = vmatprep.subr.mxu0 0.0
    %4115 = vmatpush1.msra.mxu0 0.0
    %4116 = vmatprep.subr.mxu0 0.0
    %4117 = vmatpush1.msra.mxu0 0.0
    %4118 = vmatprep.subr.mxu0 0.0
    %4119 = vmatpush1.msra.mxu0 0.0
    %4120 = vmatprep.subr.mxu0 0.0
    %4121 = vmatpush1.msra.mxu0 0.0
    %4122 = vmatprep.subr.mxu0 0.0
    %4123 = vmatpush1.msra.mxu0 0.0
    %4124 = vmatprep.subr.mxu0 0.0
    %4125 = vmatpush1.msra.mxu0 0.0
    %4126 = vmatprep.subr.mxu0 0.0
    %4127 = vmatpush1.msra.mxu0 0.0
    %4128 = vmatprep.subr.mxu0 0.0
    %4129 = vmatpush1.msra.mxu0 %v4095
    %4130 = vmatprep.subr.mxu0 0.0
    %4131 = vmatpush1.msra.mxu0 %v4094
    %4132 = vmatprep.subr.mxu0 0.0
    %4133 = vmatpush1.msra.mxu0 %v4093
    %4134 = vmatprep.subr.mxu0 0.0
    %4135 = vmatpush1.msra.mxu0 %v4092
    %4136 = vmatprep.subr.mxu0 0.0
    %4137 = vmatpush2.msra.mxu0 0.0
    %4138 = vmatprep.subr.mxu0 0.0
    %4139 = vmatpush2.msra.mxu0 0.0
    %4140 = vmatprep.subr.mxu0 0.0
    %4141 = vmatpush2.msra.mxu0 0.0
    %4142 = vmatprep.subr.mxu0 0.0
    %4143 = vmatpush2.msra.mxu0 0.0
    %4144 = vmatprep.subr.mxu0 0.0
    %4145 = vmatpush2.msra.mxu0 0.0
    %4146 = vmatprep.subr.mxu0 0.0
    %4147 = vmatpush2.msra.mxu0 0.0
    %4148 = vmatprep.subr.mxu0 0.0
    %4149 = vmatpush2.msra.mxu0 0.0
    %4150 = vmatprep.subr.mxu0 0.0
    %4151 = vmatpush2.msra.mxu0 0.0
    %4152 = vmatprep.subr.mxu0 0.0
    %4153 = vmatpush2.msra.mxu0 0.0
    %4154 = vmatprep.subr.mxu0 0.0
    %4155 = vmatpush2.msra.mxu0 0.0
    %4156 = vmatprep.subr.mxu0 0.0
    %4157 = vmatpush2.msra.mxu0 0.0
    %4158 = vmatprep.subr.mxu0 0.0
    %4159 = vmatpush2.msra.mxu0 0.0
    %4160 = vmatprep.subr.mxu0 0.0
    %4161 = vmatpush2.msra.mxu0 0.0
    %4162 = vmatprep.subr.mxu0 0.0
    %4163 = vmatpush2.msra.mxu0 0.0
    %4164 = vmatprep.subr.mxu0 0.0
    %4165 = vmatpush2.msra.mxu0 0.0
    %4166 = vmatprep.subr.mxu0 0.0
    %4167 = vmatpush2.msra.mxu0 0.0
    %4168 = vmatprep.mubr.f32.mxu0 0.0
    %4169 = vmatmul.mubr.f32.gmra.mxu0 %v4102
    %v4170 = vpop.f32.mrf.mxu0
    %v4171 = vadd.f32 %v4096, %v4170
    %v4172 = vpop.f32.mrf.mxu0
    %4173 = vdwg.mxu0
    %vm4174 = vcmask 9216
    %4175 = vst.msk [vmem:[#allocation8] sm:$0x3] %vm4174, %v4171
    // Predicated region
    $region26: #{forward.1} parent=1 // pred_check
      _
    $region27: #{forward.1} parent=1 // pred_check_branch
      %4177 = sbr.rel (0) target = $region29
    $region28: #{forward.1} parent=1 // pred_region
      %s4179 = ssub.s32 32, 32
      %4180 = vsyncadd [#allocation4], %s4179
      %s4182 = sshll.u32 [#allocation8], 4
      %s4183 = int_to_ptr.vmem [resolvable:$true] %s4182
      %4185 = dma.vmem_to_hbm [thread:$0]  %s4183, 32, %s3, [#allocation4]
    $region29: #{forward.1} parent=1 // pred_fallthru
      _
    // Predicated region
    $region30: #{forward.1} parent=1 // pred_check
      _
    $region31: #{forward.1} parent=1 // pred_check_branch
      %4187 = sbr.rel (0) target = $region33
    $region32: #{forward.1} parent=1 // pred_region
      %4188 = dma.done [#allocation4], 32
    $region33: #{forward.1} parent=1 // pred_fallthru
      _
    %4189 = vsyncpa [#allocation3], 1
    %4190 = vsyncpa [#allocation6], 1
    %4191 = vsyncpa [#allocation4], 1

</llo_original>
